<compile_context>
chip_gen: v5e
topology: v5e:2x2
jax: 0.10.0
libtpu: 0.0.40
codegen_flags: <defaults>
</compile_context>

<pallas_src>
import jax
import jax.numpy as jnp
from jax.experimental import pallas as pl
from jax.experimental.pallas import tpu as pltpu

LANE = 128  # lane-dense padding for the head output


def _sigmoid(x):
    return 1.0 / (1.0 + jnp.exp(-x))


def audio_lstm_kernel(x_ref, h0_ref, c0_ref,
                      wih0_ref, whh0_ref, b0_ref,
                      wih1_ref, whh1_ref, b1_ref,
                      wfc1_ref, bfc1_ref, wfc2_ref, bfc2_ref,
                      out_ref, hn_ref, cn_ref,
                      gates_sc, y0_sc):
    """One batch element per program (n_layers fixed to 2, as in the module).

    x_ref     : (1, T, F)       input sequence
    h0/c0_ref : (1, L, H)       initial hidden/cell (batch-major)
    wih*_ref  : (F|H, 4H)       input->gate weights, pre-transposed
    whh*_ref  : (H, 4H)         hidden->gate weights, pre-transposed
    b*_ref    : (1, 4H)         folded bias (b_ih + b_hh)
    wfc1_ref  : (H, H//2),  bfc1_ref : (1, H//2)
    wfc2_ref  : (H//2, LANE) zero-padded, bfc2_ref : (1, LANE) zero-padded
    out_ref   : (1, 1, LANE)    fc2(fc1(h_T)), lane-dense padded
    hn_ref    : (1, L, H)       final hidden states (batch-major)
    cn_ref    : (1, L, H)       final cell states (batch-major)
    gates_sc  : (T, 4H) VMEM    whole-sequence input projection (reused/layer)
    y0_sc     : (T, H)  VMEM    layer-0 output sequence
    """
    T = x_ref.shape[1]
    H = whh0_ref.shape[0]

    def lstm_cell(gates_pre, h, c, whh_ref):
        # gates_pre: (1, 4H) = x_t @ W_ih^T + (b_ih + b_hh), precomputed.
        gates = gates_pre + jnp.dot(h, whh_ref[...],
                                    preferred_element_type=jnp.float32)
        i = _sigmoid(gates[:, 0 * H:1 * H])
        f = _sigmoid(gates[:, 1 * H:2 * H])
        g = jnp.tanh(gates[:, 2 * H:3 * H])
        o = _sigmoid(gates[:, 3 * H:4 * H])
        c_new = f * c + i * g
        h_new = o * jnp.tanh(c_new)
        return h_new, c_new

    h_init = h0_ref[0]      # (L, H)
    c_init = c0_ref[0]

    # ---- layer 0: whole-sequence input projection in ONE MXU matmul ----
    gates_sc[...] = (jnp.dot(x_ref[0], wih0_ref[...],
                             preferred_element_type=jnp.float32)
                     + b0_ref[...])

    def step0(t, carry):
        h, c = carry
        h, c = lstm_cell(gates_sc[pl.ds(t, 1), :], h, c, whh0_ref)
        y0_sc[pl.ds(t, 1), :] = h
        return (h, c)

    h0_f, c0_f = jax.lax.fori_loop(
        0, T, step0, (h_init[0:1, :], c_init[0:1, :]), unroll=True)

    # ---- layer 1 (inter-layer dropout is identity in eval mode) ----
    gates_sc[...] = (jnp.dot(y0_sc[...], wih1_ref[...],
                             preferred_element_type=jnp.float32)
                     + b1_ref[...])

    def step1(t, carry):
        h, c = carry
        return lstm_cell(gates_sc[pl.ds(t, 1), :], h, c, whh1_ref)

    h1_f, c1_f = jax.lax.fori_loop(
        0, T, step1, (h_init[1:2, :], c_init[1:2, :]), unroll=True)

    # ---- l_hidden = (h_n, c_n), batch-major; wrapper transposes to (L, B, H)
    hn_ref[0] = jnp.concatenate([h0_f, h1_f], axis=0)
    cn_ref[0] = jnp.concatenate([c0_f, c1_f], axis=0)

    # ---- head: dropout(eval) -> fc1 -> fc2 on the LAST timestep only.
    # (fc1 on earlier timesteps does not affect the returned values, since the
    #  module only uses fc1(l_out)[:, -1, :] for fc2.)
    feat = (jnp.dot(h1_f, wfc1_ref[...], preferred_element_type=jnp.float32)
            + bfc1_ref[...])
    logits = (jnp.dot(feat, wfc2_ref[...], preferred_element_type=jnp.float32)
              + bfc2_ref[...])
    out_ref[0] = logits


def pack_params(params, out_feature):
    """One-time repack of PyTorch-layout parameters into kernel layouts
    (transposes, folded biases, lane-dense fc2 padding) — hoisted out of the
    per-call path."""
    H = params['w_hh0'].shape[1]
    return dict(
        wih0=params['w_ih0'].T,                               # (F, 4H)
        whh0=params['w_hh0'].T,                               # (H, 4H)
        b0=(params['b_ih0'] + params['b_hh0'])[None, :],      # (1, 4H)
        wih1=params['w_ih1'].T,                               # (H, 4H)
        whh1=params['w_hh1'].T,                               # (H, 4H)
        b1=(params['b_ih1'] + params['b_hh1'])[None, :],      # (1, 4H)
        wfc1=params['w_fc1'].T,                               # (H, H//2)
        bfc1=params['b_fc1'][None, :],                        # (1, H//2)
        wfc2=jnp.zeros((H // 2, LANE), jnp.float32)
            .at[:, :out_feature].set(params['w_fc2'].T),      # (H//2, 128)
        bfc2=jnp.zeros((1, LANE), jnp.float32)
            .at[0, :out_feature].set(params['b_fc2']),        # (1, 128)
    )


def audio_lstm_forward(x, hidden, packed, out_feature):
    """x: (B, T, F) f32; hidden = (h0, c0), each (L, B, H) (PyTorch layout).
    Returns (out, (h_n, c_n)) matching AudioLSTM.forward in eval mode."""
    h0, c0 = hidden
    B, T, F = x.shape
    L, _, H = h0.shape
    G = 4 * H

    # batch-major hidden so the batch-blocked grid keeps last-two dims full
    h0_bm = jnp.transpose(h0, (1, 0, 2))
    c0_bm = jnp.transpose(c0, (1, 0, 2))

    def full(shape):
        return pl.BlockSpec(shape, lambda b, _n=len(shape): (0,) * _n)

    def per_b(shape):
        return pl.BlockSpec(shape, lambda b: (b, 0, 0))

    out_pad, hn_bm, cn_bm = pl.pallas_call(
        audio_lstm_kernel,
        out_shape=(jax.ShapeDtypeStruct((B, 1, LANE), jnp.float32),
                   jax.ShapeDtypeStruct((B, L, H), jnp.float32),
                   jax.ShapeDtypeStruct((B, L, H), jnp.float32)),
        grid_spec=pltpu.PrefetchScalarGridSpec(
            num_scalar_prefetch=0,
            grid=(B,),
            in_specs=[
                per_b((1, T, F)),                              # x
                per_b((1, L, H)),                              # h0
                per_b((1, L, H)),                              # c0
                full((F, G)), full((H, G)), full((1, G)),      # LSTM layer 0
                full((H, G)), full((H, G)), full((1, G)),      # LSTM layer 1
                full((H, H // 2)), full((1, H // 2)),          # fc1
                full((H // 2, LANE)), full((1, LANE)),         # fc2 (padded)
            ],
            out_specs=[
                per_b((1, 1, LANE)),                           # logits (padded)
                per_b((1, L, H)),                              # h_n
                per_b((1, L, H)),                              # c_n
            ],
            scratch_shapes=[pltpu.VMEM((T, G), jnp.float32),
                            pltpu.VMEM((T, H), jnp.float32)],
        ),
        compiler_params=pltpu.CompilerParams(
            dimension_semantics=("parallel",)),
    )(x, h0_bm, c0_bm,
      packed['wih0'], packed['whh0'], packed['b0'],
      packed['wih1'], packed['whh1'], packed['b1'],
      packed['wfc1'], packed['bfc1'], packed['wfc2'], packed['bfc2'])

    out = out_pad[:, 0, :out_feature]
    h_n = jnp.transpose(hn_bm, (1, 0, 2))
    c_n = jnp.transpose(cn_bm, (1, 0, 2))
    return out, (h_n, c_n)


# ---------------- pure-JAX reference (PyTorch LSTM semantics) ----------------

def _lstm_cell_ref(x_t, h, c, w_ih, w_hh, b_ih, b_hh):
    gates = x_t @ w_ih.T + b_ih + h @ w_hh.T + b_hh
    i, f, g, o = jnp.split(gates, 4, axis=-1)          # PyTorch gate order
    c = jax.nn.sigmoid(f) * c + jax.nn.sigmoid(i) * jnp.tanh(g)
    h = jax.nn.sigmoid(o) * jnp.tanh(c)
    return h, c


def _reference_forward(x, hidden, params, out_feature):
    h0, c0 = hidden
    B, T, F = x.shape

    def run_layer(inp, h, c, w_ih, w_hh, b_ih, b_hh):
        ys = []
        for t in range(T):
            h, c = _lstm_cell_ref(inp[:, t, :], h, c, w_ih, w_hh, b_ih, b_hh)
            ys.append(h)
        return jnp.stack(ys, axis=1), h, c

    y0, hn0, cn0 = run_layer(x, h0[0], c0[0], params['w_ih0'],
                             params['w_hh0'], params['b_ih0'], params['b_hh0'])
    l_out, hn1, cn1 = run_layer(y0, h0[1], c0[1], params['w_ih1'],
                                params['w_hh1'], params['b_ih1'], params['b_hh1'])
    out = l_out @ params['w_fc1'].T + params['b_fc1']        # fc1 over all t
    out = out[:, -1, :] @ params['w_fc2'].T + params['b_fc2']
    return out, (jnp.stack([hn0, hn1], 0), jnp.stack([cn0, cn1], 0))


if __name__ == "__main__":
    # Small shapes consistent with the module: batch=2, seq=8, n_feature=5,
    # n_hidden=32, n_layers=2, out_feature=5.
    B, T, F, H, L, OUT = 2, 8, 5, 32, 2, 5

    key = jax.random.PRNGKey(0)
    ks = jax.random.split(key, 13)

    def unif(k, shape, fan):
        bound = 1.0 / jnp.sqrt(fan)
        return jax.random.uniform(k, shape, jnp.float32, -bound, bound)

    params = {
        'w_ih0': unif(ks[0], (4 * H, F), H),
        'w_hh0': unif(ks[1], (4 * H, H), H),
        'b_ih0': unif(ks[2], (4 * H,), H),
        'b_hh0': unif(ks[3], (4 * H,), H),
        'w_ih1': unif(ks[4], (4 * H, H), H),
        'w_hh1': unif(ks[5], (4 * H, H), H),
        'b_ih1': unif(ks[6], (4 * H,), H),
        'b_hh1': unif(ks[7], (4 * H,), H),
        'w_fc1': unif(ks[8], (H // 2, H), H),
        'b_fc1': unif(ks[9], (H // 2,), H),
        'w_fc2': unif(ks[10], (OUT, H // 2), H // 2),
        'b_fc2': unif(ks[11], (OUT,), H // 2),
    }
    x = jax.random.normal(ks[12], (B, T, F), jnp.float32)
    h0 = jnp.zeros((L, B, H), jnp.float32)    # AudioLSTM.init_hidden
    c0 = jnp.zeros((L, B, H), jnp.float32)

    packed = pack_params(params, OUT)
    out, (h_n, c_n) = audio_lstm_forward(x, (h0, c0), packed, OUT)
    out = jax.block_until_ready(out)

    ref_out, (ref_hn, ref_cn) = _reference_forward(x, (h0, c0), params, OUT)
    assert out.shape == (B, OUT), out.shape
    assert h_n.shape == (L, B, H) and c_n.shape == (L, B, H)
    assert jnp.allclose(out, ref_out, rtol=1e-2, atol=1e-2), "out mismatch"
    assert jnp.allclose(h_n, ref_hn, rtol=1e-2, atol=1e-2), "h_n mismatch"
    assert jnp.allclose(c_n, ref_cn, rtol=1e-2, atol=1e-2), "c_n mismatch"

    print("KERNEL_OK")
</pallas_src>

<mosaic_0001>
module attributes {stable_mosaic.version = 11 : i64} {
  func.func @audio_lstm_kernel(%arg0: i32, %arg1: memref<1x8x5xf32, #tpu.memory_space<vmem>>, %arg2: memref<1x2x32xf32, #tpu.memory_space<vmem>>, %arg3: memref<1x2x32xf32, #tpu.memory_space<vmem>>, %arg4: memref<5x128xf32, #tpu.memory_space<vmem>>, %arg5: memref<32x128xf32, #tpu.memory_space<vmem>>, %arg6: memref<1x128xf32, #tpu.memory_space<vmem>>, %arg7: memref<32x128xf32, #tpu.memory_space<vmem>>, %arg8: memref<32x128xf32, #tpu.memory_space<vmem>>, %arg9: memref<1x128xf32, #tpu.memory_space<vmem>>, %arg10: memref<32x16xf32, #tpu.memory_space<vmem>>, %arg11: memref<1x16xf32, #tpu.memory_space<vmem>>, %arg12: memref<16x128xf32, #tpu.memory_space<vmem>>, %arg13: memref<1x128xf32, #tpu.memory_space<vmem>>, %arg14: memref<1x1x128xf32, #tpu.memory_space<vmem>>, %arg15: memref<1x2x32xf32, #tpu.memory_space<vmem>>, %arg16: memref<1x2x32xf32, #tpu.memory_space<vmem>>, %arg17: memref<8x128xf32, #tpu.memory_space<vmem>>, %arg18: memref<8x32xf32, #tpu.memory_space<vmem>>) attributes {dimension_semantics = [#tpu.dimension_semantics<parallel>], iteration_bounds = array<i64: 2>, scalar_prefetch = 0 : i64, scratch_operands = 2 : i64, tpu.core_type = #tpu.core_type<tc>, window_params = [{transform_indices = @transform_0, window_bounds = array<i64: 1, 8, 5>}, {transform_indices = @transform_1, window_bounds = array<i64: 1, 2, 32>}, {transform_indices = @transform_2, window_bounds = array<i64: 1, 2, 32>}, {pipeline_mode = #tpu.pipeline_mode<synchronous>, transform_indices = @transform_3, window_bounds = array<i64: 5, 128>}, {pipeline_mode = #tpu.pipeline_mode<synchronous>, transform_indices = @transform_4, window_bounds = array<i64: 32, 128>}, {pipeline_mode = #tpu.pipeline_mode<synchronous>, transform_indices = @transform_5, window_bounds = array<i64: 1, 128>}, {pipeline_mode = #tpu.pipeline_mode<synchronous>, transform_indices = @transform_6, window_bounds = array<i64: 32, 128>}, {pipeline_mode = #tpu.pipeline_mode<synchronous>, transform_indices = @transform_7, window_bounds = array<i64: 32, 128>}, {pipeline_mode = #tpu.pipeline_mode<synchronous>, transform_indices = @transform_8, window_bounds = array<i64: 1, 128>}, {pipeline_mode = #tpu.pipeline_mode<synchronous>, transform_indices = @transform_9, window_bounds = array<i64: 32, 16>}, {pipeline_mode = #tpu.pipeline_mode<synchronous>, transform_indices = @transform_10, window_bounds = array<i64: 1, 16>}, {pipeline_mode = #tpu.pipeline_mode<synchronous>, transform_indices = @transform_11, window_bounds = array<i64: 16, 128>}, {pipeline_mode = #tpu.pipeline_mode<synchronous>, transform_indices = @transform_12, window_bounds = array<i64: 1, 128>}, {transform_indices = @transform_13, window_bounds = array<i64: 1, 1, 128>}, {transform_indices = @transform_14, window_bounds = array<i64: 1, 2, 32>}, {transform_indices = @transform_15, window_bounds = array<i64: 1, 2, 32>}]} {
    %c0 = arith.constant 0 : index
    %c0_0 = arith.constant 0 : index
    %c0_1 = arith.constant 0 : index
    %0 = vector.load %arg2[%c0, %c0_0, %c0_1] : memref<1x2x32xf32, #tpu.memory_space<vmem>>, vector<1x2x32xf32>
    %1 = vector.shape_cast %0 : vector<1x2x32xf32> to vector<2x32xf32>
    %c0_2 = arith.constant 0 : index
    %c0_3 = arith.constant 0 : index
    %c0_4 = arith.constant 0 : index
    %2 = vector.load %arg3[%c0_2, %c0_3, %c0_4] : memref<1x2x32xf32, #tpu.memory_space<vmem>>, vector<1x2x32xf32>
    %3 = vector.shape_cast %2 : vector<1x2x32xf32> to vector<2x32xf32>
    %c0_5 = arith.constant 0 : index
    %c0_6 = arith.constant 0 : index
    %c0_7 = arith.constant 0 : index
    %4 = vector.load %arg1[%c0_5, %c0_6, %c0_7] : memref<1x8x5xf32, #tpu.memory_space<vmem>>, vector<1x8x5xf32>
    %5 = vector.shape_cast %4 : vector<1x8x5xf32> to vector<8x5xf32>
    %c0_8 = arith.constant 0 : index
    %c0_9 = arith.constant 0 : index
    %6 = vector.load %arg4[%c0_8, %c0_9] : memref<5x128xf32, #tpu.memory_space<vmem>>, vector<5x128xf32>
    %cst = arith.constant dense<0.000000e+00> : vector<8x128xf32>
    %7 = tpu.matmul %5, %6, %cst {dimension_numbers = #tpu.dot_dimension_numbers<[1], [0], [0], [1], [0, 0, 1, 1], [], []>} : vector<8x5xf32>, vector<5x128xf32>, vector<8x128xf32> -> vector<8x128xf32>
    %c0_10 = arith.constant 0 : index
    %c0_11 = arith.constant 0 : index
    %8 = vector.load %arg6[%c0_10, %c0_11] : memref<1x128xf32, #tpu.memory_space<vmem>>, vector<1x128xf32>
    %9 = vector.broadcast %8 : vector<1x128xf32> to vector<8x128xf32>
    %10 = arith.addf %7, %9 : vector<8x128xf32>
    %c0_12 = arith.constant 0 : index
    %c0_13 = arith.constant 0 : index
    %11 = vector.load %arg17[%c0_12, %c0_13] : memref<8x128xf32, #tpu.memory_space<vmem>>, vector<8x128xf32>
    tpu.vector_store %arg17[%c0_12, %c0_13], %10 {strides = array<i32>} : memref<8x128xf32, #tpu.memory_space<vmem>>, vector<8x128xf32>,
    %12 = vector.extract_strided_slice %1 {offsets = [0, 0], sizes = [1, 32], strides = [1, 1]} : vector<2x32xf32> to vector<1x32xf32>
    %13 = vector.extract_strided_slice %3 {offsets = [0, 0], sizes = [1, 32], strides = [1, 1]} : vector<2x32xf32> to vector<1x32xf32>
    %c0_i32 = arith.constant 0 : i32
    %14 = arith.index_cast %c0_i32 : i32 to index
    %c0_14 = arith.constant 0 : index
    %15 = vector.load %arg17[%14, %c0_14] : memref<8x128xf32, #tpu.memory_space<vmem>>, vector<1x128xf32>
    %c0_15 = arith.constant 0 : index
    %c0_16 = arith.constant 0 : index
    %16 = vector.load %arg5[%c0_15, %c0_16] : memref<32x128xf32, #tpu.memory_space<vmem>>, vector<32x128xf32>
    %cst_17 = arith.constant dense<0.000000e+00> : vector<1x128xf32>
    %17 = tpu.matmul %12, %16, %cst_17 {dimension_numbers = #tpu.dot_dimension_numbers<[1], [0], [0], [1], [0, 0, 1, 1], [], []>} : vector<1x32xf32>, vector<32x128xf32>, vector<1x128xf32> -> vector<1x128xf32>
    %18 = arith.addf %15, %17 : vector<1x128xf32>
    %19 = vector.extract_strided_slice %18 {offsets = [0, 0], sizes = [1, 32], strides = [1, 1]} : vector<1x128xf32> to vector<1x32xf32>
    %cst_18 = arith.constant 0.000000e+00 : f32
    %20 = vector.broadcast %cst_18 : f32 to vector<1x32xf32>
    %21 = arith.subf %20, %19 : vector<1x32xf32>
    %22 = math.exp %21 : vector<1x32xf32>
    %cst_19 = arith.constant 1.000000e+00 : f32
    %23 = vector.broadcast %cst_19 : f32 to vector<1x32xf32>
    %24 = arith.addf %23, %22 : vector<1x32xf32>
    %cst_20 = arith.constant 1.000000e+00 : f32
    %25 = vector.broadcast %cst_20 : f32 to vector<1x32xf32>
    %26 = arith.divf %25, %24 : vector<1x32xf32>
    %27 = vector.extract_strided_slice %18 {offsets = [0, 32], sizes = [1, 32], strides = [1, 1]} : vector<1x128xf32> to vector<1x32xf32>
    %cst_21 = arith.constant 0.000000e+00 : f32
    %28 = vector.broadcast %cst_21 : f32 to vector<1x32xf32>
    %29 = arith.subf %28, %27 : vector<1x32xf32>
    %30 = math.exp %29 : vector<1x32xf32>
    %cst_22 = arith.constant 1.000000e+00 : f32
    %31 = vector.broadcast %cst_22 : f32 to vector<1x32xf32>
    %32 = arith.addf %31, %30 : vector<1x32xf32>
    %cst_23 = arith.constant 1.000000e+00 : f32
    %33 = vector.broadcast %cst_23 : f32 to vector<1x32xf32>
    %34 = arith.divf %33, %32 : vector<1x32xf32>
    %35 = vector.extract_strided_slice %18 {offsets = [0, 64], sizes = [1, 32], strides = [1, 1]} : vector<1x128xf32> to vector<1x32xf32>
    %36 = math.tanh %35 : vector<1x32xf32>
    %37 = vector.extract_strided_slice %18 {offsets = [0, 96], sizes = [1, 32], strides = [1, 1]} : vector<1x128xf32> to vector<1x32xf32>
    %cst_24 = arith.constant 0.000000e+00 : f32
    %38 = vector.broadcast %cst_24 : f32 to vector<1x32xf32>
    %39 = arith.subf %38, %37 : vector<1x32xf32>
    %40 = math.exp %39 : vector<1x32xf32>
    %cst_25 = arith.constant 1.000000e+00 : f32
    %41 = vector.broadcast %cst_25 : f32 to vector<1x32xf32>
    %42 = arith.addf %41, %40 : vector<1x32xf32>
    %cst_26 = arith.constant 1.000000e+00 : f32
    %43 = vector.broadcast %cst_26 : f32 to vector<1x32xf32>
    %44 = arith.divf %43, %42 : vector<1x32xf32>
    %45 = arith.mulf %34, %13 : vector<1x32xf32>
    %46 = arith.mulf %26, %36 : vector<1x32xf32>
    %47 = arith.addf %45, %46 : vector<1x32xf32>
    %48 = math.tanh %47 : vector<1x32xf32>
    %49 = arith.mulf %44, %48 : vector<1x32xf32>
    %50 = arith.index_cast %c0_i32 : i32 to index
    %c0_27 = arith.constant 0 : index
    %51 = vector.load %arg18[%50, %c0_27] : memref<8x32xf32, #tpu.memory_space<vmem>>, vector<1x32xf32>
    tpu.vector_store %arg18[%50, %c0_27], %49 {strides = array<i32>} : memref<8x32xf32, #tpu.memory_space<vmem>>, vector<1x32xf32>,
    %c1_i32 = arith.constant 1 : i32
    %52 = arith.index_cast %c1_i32 : i32 to index
    %c0_28 = arith.constant 0 : index
    %53 = vector.load %arg17[%52, %c0_28] : memref<8x128xf32, #tpu.memory_space<vmem>>, vector<1x128xf32>
    %c0_29 = arith.constant 0 : index
    %c0_30 = arith.constant 0 : index
    %54 = vector.load %arg5[%c0_29, %c0_30] : memref<32x128xf32, #tpu.memory_space<vmem>>, vector<32x128xf32>
    %cst_31 = arith.constant dense<0.000000e+00> : vector<1x128xf32>
    %55 = tpu.matmul %49, %54, %cst_31 {dimension_numbers = #tpu.dot_dimension_numbers<[1], [0], [0], [1], [0, 0, 1, 1], [], []>} : vector<1x32xf32>, vector<32x128xf32>, vector<1x128xf32> -> vector<1x128xf32>
    %56 = arith.addf %53, %55 : vector<1x128xf32>
    %57 = vector.extract_strided_slice %56 {offsets = [0, 0], sizes = [1, 32], strides = [1, 1]} : vector<1x128xf32> to vector<1x32xf32>
    %cst_32 = arith.constant 0.000000e+00 : f32
    %58 = vector.broadcast %cst_32 : f32 to vector<1x32xf32>
    %59 = arith.subf %58, %57 : vector<1x32xf32>
    %60 = math.exp %59 : vector<1x32xf32>
    %cst_33 = arith.constant 1.000000e+00 : f32
    %61 = vector.broadcast %cst_33 : f32 to vector<1x32xf32>
    %62 = arith.addf %61, %60 : vector<1x32xf32>
    %cst_34 = arith.constant 1.000000e+00 : f32
    %63 = vector.broadcast %cst_34 : f32 to vector<1x32xf32>
    %64 = arith.divf %63, %62 : vector<1x32xf32>
    %65 = vector.extract_strided_slice %56 {offsets = [0, 32], sizes = [1, 32], strides = [1, 1]} : vector<1x128xf32> to vector<1x32xf32>
    %cst_35 = arith.constant 0.000000e+00 : f32
    %66 = vector.broadcast %cst_35 : f32 to vector<1x32xf32>
    %67 = arith.subf %66, %65 : vector<1x32xf32>
    %68 = math.exp %67 : vector<1x32xf32>
    %cst_36 = arith.constant 1.000000e+00 : f32
    %69 = vector.broadcast %cst_36 : f32 to vector<1x32xf32>
    %70 = arith.addf %69, %68 : vector<1x32xf32>
    %cst_37 = arith.constant 1.000000e+00 : f32
    %71 = vector.broadcast %cst_37 : f32 to vector<1x32xf32>
    %72 = arith.divf %71, %70 : vector<1x32xf32>
    %73 = vector.extract_strided_slice %56 {offsets = [0, 64], sizes = [1, 32], strides = [1, 1]} : vector<1x128xf32> to vector<1x32xf32>
    %74 = math.tanh %73 : vector<1x32xf32>
    %75 = vector.extract_strided_slice %56 {offsets = [0, 96], sizes = [1, 32], strides = [1, 1]} : vector<1x128xf32> to vector<1x32xf32>
    %cst_38 = arith.constant 0.000000e+00 : f32
    %76 = vector.broadcast %cst_38 : f32 to vector<1x32xf32>
    %77 = arith.subf %76, %75 : vector<1x32xf32>
    %78 = math.exp %77 : vector<1x32xf32>
    %cst_39 = arith.constant 1.000000e+00 : f32
    %79 = vector.broadcast %cst_39 : f32 to vector<1x32xf32>
    %80 = arith.addf %79, %78 : vector<1x32xf32>
    %cst_40 = arith.constant 1.000000e+00 : f32
    %81 = vector.broadcast %cst_40 : f32 to vector<1x32xf32>
    %82 = arith.divf %81, %80 : vector<1x32xf32>
    %83 = arith.mulf %72, %47 : vector<1x32xf32>
    %84 = arith.mulf %64, %74 : vector<1x32xf32>
    %85 = arith.addf %83, %84 : vector<1x32xf32>
    %86 = math.tanh %85 : vector<1x32xf32>
    %87 = arith.mulf %82, %86 : vector<1x32xf32>
    %88 = arith.index_cast %c1_i32 : i32 to index
    %c0_41 = arith.constant 0 : index
    %89 = vector.load %arg18[%88, %c0_41] : memref<8x32xf32, #tpu.memory_space<vmem>>, vector<1x32xf32>
    tpu.vector_store %arg18[%88, %c0_41], %87 {strides = array<i32>} : memref<8x32xf32, #tpu.memory_space<vmem>>, vector<1x32xf32>,
    %c2_i32 = arith.constant 2 : i32
    %90 = arith.index_cast %c2_i32 : i32 to index
    %c0_42 = arith.constant 0 : index
    %91 = vector.load %arg17[%90, %c0_42] : memref<8x128xf32, #tpu.memory_space<vmem>>, vector<1x128xf32>
    %c0_43 = arith.constant 0 : index
    %c0_44 = arith.constant 0 : index
    %92 = vector.load %arg5[%c0_43, %c0_44] : memref<32x128xf32, #tpu.memory_space<vmem>>, vector<32x128xf32>
    %cst_45 = arith.constant dense<0.000000e+00> : vector<1x128xf32>
    %93 = tpu.matmul %87, %92, %cst_45 {dimension_numbers = #tpu.dot_dimension_numbers<[1], [0], [0], [1], [0, 0, 1, 1], [], []>} : vector<1x32xf32>, vector<32x128xf32>, vector<1x128xf32> -> vector<1x128xf32>
    %94 = arith.addf %91, %93 : vector<1x128xf32>
    %95 = vector.extract_strided_slice %94 {offsets = [0, 0], sizes = [1, 32], strides = [1, 1]} : vector<1x128xf32> to vector<1x32xf32>
    %cst_46 = arith.constant 0.000000e+00 : f32
    %96 = vector.broadcast %cst_46 : f32 to vector<1x32xf32>
    %97 = arith.subf %96, %95 : vector<1x32xf32>
    %98 = math.exp %97 : vector<1x32xf32>
    %cst_47 = arith.constant 1.000000e+00 : f32
    %99 = vector.broadcast %cst_47 : f32 to vector<1x32xf32>
    %100 = arith.addf %99, %98 : vector<1x32xf32>
    %cst_48 = arith.constant 1.000000e+00 : f32
    %101 = vector.broadcast %cst_48 : f32 to vector<1x32xf32>
    %102 = arith.divf %101, %100 : vector<1x32xf32>
    %103 = vector.extract_strided_slice %94 {offsets = [0, 32], sizes = [1, 32], strides = [1, 1]} : vector<1x128xf32> to vector<1x32xf32>
    %cst_49 = arith.constant 0.000000e+00 : f32
    %104 = vector.broadcast %cst_49 : f32 to vector<1x32xf32>
    %105 = arith.subf %104, %103 : vector<1x32xf32>
    %106 = math.exp %105 : vector<1x32xf32>
    %cst_50 = arith.constant 1.000000e+00 : f32
    %107 = vector.broadcast %cst_50 : f32 to vector<1x32xf32>
    %108 = arith.addf %107, %106 : vector<1x32xf32>
    %cst_51 = arith.constant 1.000000e+00 : f32
    %109 = vector.broadcast %cst_51 : f32 to vector<1x32xf32>
    %110 = arith.divf %109, %108 : vector<1x32xf32>
    %111 = vector.extract_strided_slice %94 {offsets = [0, 64], sizes = [1, 32], strides = [1, 1]} : vector<1x128xf32> to vector<1x32xf32>
    %112 = math.tanh %111 : vector<1x32xf32>
    %113 = vector.extract_strided_slice %94 {offsets = [0, 96], sizes = [1, 32], strides = [1, 1]} : vector<1x128xf32> to vector<1x32xf32>
    %cst_52 = arith.constant 0.000000e+00 : f32
    %114 = vector.broadcast %cst_52 : f32 to vector<1x32xf32>
    %115 = arith.subf %114, %113 : vector<1x32xf32>
    %116 = math.exp %115 : vector<1x32xf32>
    %cst_53 = arith.constant 1.000000e+00 : f32
    %117 = vector.broadcast %cst_53 : f32 to vector<1x32xf32>
    %118 = arith.addf %117, %116 : vector<1x32xf32>
    %cst_54 = arith.constant 1.000000e+00 : f32
    %119 = vector.broadcast %cst_54 : f32 to vector<1x32xf32>
    %120 = arith.divf %119, %118 : vector<1x32xf32>
    %121 = arith.mulf %110, %85 : vector<1x32xf32>
    %122 = arith.mulf %102, %112 : vector<1x32xf32>
    %123 = arith.addf %121, %122 : vector<1x32xf32>
    %124 = math.tanh %123 : vector<1x32xf32>
    %125 = arith.mulf %120, %124 : vector<1x32xf32>
    %126 = arith.index_cast %c2_i32 : i32 to index
    %c0_55 = arith.constant 0 : index
    %127 = vector.load %arg18[%126, %c0_55] : memref<8x32xf32, #tpu.memory_space<vmem>>, vector<1x32xf32>
    tpu.vector_store %arg18[%126, %c0_55], %125 {strides = array<i32>} : memref<8x32xf32, #tpu.memory_space<vmem>>, vector<1x32xf32>,
    %c3_i32 = arith.constant 3 : i32
    %128 = arith.index_cast %c3_i32 : i32 to index
    %c0_56 = arith.constant 0 : index
    %129 = vector.load %arg17[%128, %c0_56] : memref<8x128xf32, #tpu.memory_space<vmem>>, vector<1x128xf32>
    %c0_57 = arith.constant 0 : index
    %c0_58 = arith.constant 0 : index
    %130 = vector.load %arg5[%c0_57, %c0_58] : memref<32x128xf32, #tpu.memory_space<vmem>>, vector<32x128xf32>
    %cst_59 = arith.constant dense<0.000000e+00> : vector<1x128xf32>
    %131 = tpu.matmul %125, %130, %cst_59 {dimension_numbers = #tpu.dot_dimension_numbers<[1], [0], [0], [1], [0, 0, 1, 1], [], []>} : vector<1x32xf32>, vector<32x128xf32>, vector<1x128xf32> -> vector<1x128xf32>
    %132 = arith.addf %129, %131 : vector<1x128xf32>
    %133 = vector.extract_strided_slice %132 {offsets = [0, 0], sizes = [1, 32], strides = [1, 1]} : vector<1x128xf32> to vector<1x32xf32>
    %cst_60 = arith.constant 0.000000e+00 : f32
    %134 = vector.broadcast %cst_60 : f32 to vector<1x32xf32>
    %135 = arith.subf %134, %133 : vector<1x32xf32>
    %136 = math.exp %135 : vector<1x32xf32>
    %cst_61 = arith.constant 1.000000e+00 : f32
    %137 = vector.broadcast %cst_61 : f32 to vector<1x32xf32>
    %138 = arith.addf %137, %136 : vector<1x32xf32>
    %cst_62 = arith.constant 1.000000e+00 : f32
    %139 = vector.broadcast %cst_62 : f32 to vector<1x32xf32>
    %140 = arith.divf %139, %138 : vector<1x32xf32>
    %141 = vector.extract_strided_slice %132 {offsets = [0, 32], sizes = [1, 32], strides = [1, 1]} : vector<1x128xf32> to vector<1x32xf32>
    %cst_63 = arith.constant 0.000000e+00 : f32
    %142 = vector.broadcast %cst_63 : f32 to vector<1x32xf32>
    %143 = arith.subf %142, %141 : vector<1x32xf32>
    %144 = math.exp %143 : vector<1x32xf32>
    %cst_64 = arith.constant 1.000000e+00 : f32
    %145 = vector.broadcast %cst_64 : f32 to vector<1x32xf32>
    %146 = arith.addf %145, %144 : vector<1x32xf32>
    %cst_65 = arith.constant 1.000000e+00 : f32
    %147 = vector.broadcast %cst_65 : f32 to vector<1x32xf32>
    %148 = arith.divf %147, %146 : vector<1x32xf32>
    %149 = vector.extract_strided_slice %132 {offsets = [0, 64], sizes = [1, 32], strides = [1, 1]} : vector<1x128xf32> to vector<1x32xf32>
    %150 = math.tanh %149 : vector<1x32xf32>
    %151 = vector.extract_strided_slice %132 {offsets = [0, 96], sizes = [1, 32], strides = [1, 1]} : vector<1x128xf32> to vector<1x32xf32>
    %cst_66 = arith.constant 0.000000e+00 : f32
    %152 = vector.broadcast %cst_66 : f32 to vector<1x32xf32>
    %153 = arith.subf %152, %151 : vector<1x32xf32>
    %154 = math.exp %153 : vector<1x32xf32>
    %cst_67 = arith.constant 1.000000e+00 : f32
    %155 = vector.broadcast %cst_67 : f32 to vector<1x32xf32>
    %156 = arith.addf %155, %154 : vector<1x32xf32>
    %cst_68 = arith.constant 1.000000e+00 : f32
    %157 = vector.broadcast %cst_68 : f32 to vector<1x32xf32>
    %158 = arith.divf %157, %156 : vector<1x32xf32>
    %159 = arith.mulf %148, %123 : vector<1x32xf32>
    %160 = arith.mulf %140, %150 : vector<1x32xf32>
    %161 = arith.addf %159, %160 : vector<1x32xf32>
    %162 = math.tanh %161 : vector<1x32xf32>
    %163 = arith.mulf %158, %162 : vector<1x32xf32>
    %164 = arith.index_cast %c3_i32 : i32 to index
    %c0_69 = arith.constant 0 : index
    %165 = vector.load %arg18[%164, %c0_69] : memref<8x32xf32, #tpu.memory_space<vmem>>, vector<1x32xf32>
    tpu.vector_store %arg18[%164, %c0_69], %163 {strides = array<i32>} : memref<8x32xf32, #tpu.memory_space<vmem>>, vector<1x32xf32>,
    %c4_i32 = arith.constant 4 : i32
    %166 = arith.index_cast %c4_i32 : i32 to index
    %c0_70 = arith.constant 0 : index
    %167 = vector.load %arg17[%166, %c0_70] : memref<8x128xf32, #tpu.memory_space<vmem>>, vector<1x128xf32>
    %c0_71 = arith.constant 0 : index
    %c0_72 = arith.constant 0 : index
    %168 = vector.load %arg5[%c0_71, %c0_72] : memref<32x128xf32, #tpu.memory_space<vmem>>, vector<32x128xf32>
    %cst_73 = arith.constant dense<0.000000e+00> : vector<1x128xf32>
    %169 = tpu.matmul %163, %168, %cst_73 {dimension_numbers = #tpu.dot_dimension_numbers<[1], [0], [0], [1], [0, 0, 1, 1], [], []>} : vector<1x32xf32>, vector<32x128xf32>, vector<1x128xf32> -> vector<1x128xf32>
    %170 = arith.addf %167, %169 : vector<1x128xf32>
    %171 = vector.extract_strided_slice %170 {offsets = [0, 0], sizes = [1, 32], strides = [1, 1]} : vector<1x128xf32> to vector<1x32xf32>
    %cst_74 = arith.constant 0.000000e+00 : f32
    %172 = vector.broadcast %cst_74 : f32 to vector<1x32xf32>
    %173 = arith.subf %172, %171 : vector<1x32xf32>
    %174 = math.exp %173 : vector<1x32xf32>
    %cst_75 = arith.constant 1.000000e+00 : f32
    %175 = vector.broadcast %cst_75 : f32 to vector<1x32xf32>
    %176 = arith.addf %175, %174 : vector<1x32xf32>
    %cst_76 = arith.constant 1.000000e+00 : f32
    %177 = vector.broadcast %cst_76 : f32 to vector<1x32xf32>
    %178 = arith.divf %177, %176 : vector<1x32xf32>
    %179 = vector.extract_strided_slice %170 {offsets = [0, 32], sizes = [1, 32], strides = [1, 1]} : vector<1x128xf32> to vector<1x32xf32>
    %cst_77 = arith.constant 0.000000e+00 : f32
    %180 = vector.broadcast %cst_77 : f32 to vector<1x32xf32>
    %181 = arith.subf %180, %179 : vector<1x32xf32>
    %182 = math.exp %181 : vector<1x32xf32>
    %cst_78 = arith.constant 1.000000e+00 : f32
    %183 = vector.broadcast %cst_78 : f32 to vector<1x32xf32>
    %184 = arith.addf %183, %182 : vector<1x32xf32>
    %cst_79 = arith.constant 1.000000e+00 : f32
    %185 = vector.broadcast %cst_79 : f32 to vector<1x32xf32>
    %186 = arith.divf %185, %184 : vector<1x32xf32>
    %187 = vector.extract_strided_slice %170 {offsets = [0, 64], sizes = [1, 32], strides = [1, 1]} : vector<1x128xf32> to vector<1x32xf32>
    %188 = math.tanh %187 : vector<1x32xf32>
    %189 = vector.extract_strided_slice %170 {offsets = [0, 96], sizes = [1, 32], strides = [1, 1]} : vector<1x128xf32> to vector<1x32xf32>
    %cst_80 = arith.constant 0.000000e+00 : f32
    %190 = vector.broadcast %cst_80 : f32 to vector<1x32xf32>
    %191 = arith.subf %190, %189 : vector<1x32xf32>
    %192 = math.exp %191 : vector<1x32xf32>
    %cst_81 = arith.constant 1.000000e+00 : f32
    %193 = vector.broadcast %cst_81 : f32 to vector<1x32xf32>
    %194 = arith.addf %193, %192 : vector<1x32xf32>
    %cst_82 = arith.constant 1.000000e+00 : f32
    %195 = vector.broadcast %cst_82 : f32 to vector<1x32xf32>
    %196 = arith.divf %195, %194 : vector<1x32xf32>
    %197 = arith.mulf %186, %161 : vector<1x32xf32>
    %198 = arith.mulf %178, %188 : vector<1x32xf32>
    %199 = arith.addf %197, %198 : vector<1x32xf32>
    %200 = math.tanh %199 : vector<1x32xf32>
    %201 = arith.mulf %196, %200 : vector<1x32xf32>
    %202 = arith.index_cast %c4_i32 : i32 to index
    %c0_83 = arith.constant 0 : index
    %203 = vector.load %arg18[%202, %c0_83] : memref<8x32xf32, #tpu.memory_space<vmem>>, vector<1x32xf32>
    tpu.vector_store %arg18[%202, %c0_83], %201 {strides = array<i32>} : memref<8x32xf32, #tpu.memory_space<vmem>>, vector<1x32xf32>,
    %c5_i32 = arith.constant 5 : i32
    %204 = arith.index_cast %c5_i32 : i32 to index
    %c0_84 = arith.constant 0 : index
    %205 = vector.load %arg17[%204, %c0_84] : memref<8x128xf32, #tpu.memory_space<vmem>>, vector<1x128xf32>
    %c0_85 = arith.constant 0 : index
    %c0_86 = arith.constant 0 : index
    %206 = vector.load %arg5[%c0_85, %c0_86] : memref<32x128xf32, #tpu.memory_space<vmem>>, vector<32x128xf32>
    %cst_87 = arith.constant dense<0.000000e+00> : vector<1x128xf32>
    %207 = tpu.matmul %201, %206, %cst_87 {dimension_numbers = #tpu.dot_dimension_numbers<[1], [0], [0], [1], [0, 0, 1, 1], [], []>} : vector<1x32xf32>, vector<32x128xf32>, vector<1x128xf32> -> vector<1x128xf32>
    %208 = arith.addf %205, %207 : vector<1x128xf32>
    %209 = vector.extract_strided_slice %208 {offsets = [0, 0], sizes = [1, 32], strides = [1, 1]} : vector<1x128xf32> to vector<1x32xf32>
    %cst_88 = arith.constant 0.000000e+00 : f32
    %210 = vector.broadcast %cst_88 : f32 to vector<1x32xf32>
    %211 = arith.subf %210, %209 : vector<1x32xf32>
    %212 = math.exp %211 : vector<1x32xf32>
    %cst_89 = arith.constant 1.000000e+00 : f32
    %213 = vector.broadcast %cst_89 : f32 to vector<1x32xf32>
    %214 = arith.addf %213, %212 : vector<1x32xf32>
    %cst_90 = arith.constant 1.000000e+00 : f32
    %215 = vector.broadcast %cst_90 : f32 to vector<1x32xf32>
    %216 = arith.divf %215, %214 : vector<1x32xf32>
    %217 = vector.extract_strided_slice %208 {offsets = [0, 32], sizes = [1, 32], strides = [1, 1]} : vector<1x128xf32> to vector<1x32xf32>
    %cst_91 = arith.constant 0.000000e+00 : f32
    %218 = vector.broadcast %cst_91 : f32 to vector<1x32xf32>
    %219 = arith.subf %218, %217 : vector<1x32xf32>
    %220 = math.exp %219 : vector<1x32xf32>
    %cst_92 = arith.constant 1.000000e+00 : f32
    %221 = vector.broadcast %cst_92 : f32 to vector<1x32xf32>
    %222 = arith.addf %221, %220 : vector<1x32xf32>
    %cst_93 = arith.constant 1.000000e+00 : f32
    %223 = vector.broadcast %cst_93 : f32 to vector<1x32xf32>
    %224 = arith.divf %223, %222 : vector<1x32xf32>
    %225 = vector.extract_strided_slice %208 {offsets = [0, 64], sizes = [1, 32], strides = [1, 1]} : vector<1x128xf32> to vector<1x32xf32>
    %226 = math.tanh %225 : vector<1x32xf32>
    %227 = vector.extract_strided_slice %208 {offsets = [0, 96], sizes = [1, 32], strides = [1, 1]} : vector<1x128xf32> to vector<1x32xf32>
    %cst_94 = arith.constant 0.000000e+00 : f32
    %228 = vector.broadcast %cst_94 : f32 to vector<1x32xf32>
    %229 = arith.subf %228, %227 : vector<1x32xf32>
    %230 = math.exp %229 : vector<1x32xf32>
    %cst_95 = arith.constant 1.000000e+00 : f32
    %231 = vector.broadcast %cst_95 : f32 to vector<1x32xf32>
    %232 = arith.addf %231, %230 : vector<1x32xf32>
    %cst_96 = arith.constant 1.000000e+00 : f32
    %233 = vector.broadcast %cst_96 : f32 to vector<1x32xf32>
    %234 = arith.divf %233, %232 : vector<1x32xf32>
    %235 = arith.mulf %224, %199 : vector<1x32xf32>
    %236 = arith.mulf %216, %226 : vector<1x32xf32>
    %237 = arith.addf %235, %236 : vector<1x32xf32>
    %238 = math.tanh %237 : vector<1x32xf32>
    %239 = arith.mulf %234, %238 : vector<1x32xf32>
    %240 = arith.index_cast %c5_i32 : i32 to index
    %c0_97 = arith.constant 0 : index
    %241 = vector.load %arg18[%240, %c0_97] : memref<8x32xf32, #tpu.memory_space<vmem>>, vector<1x32xf32>
    tpu.vector_store %arg18[%240, %c0_97], %239 {strides = array<i32>} : memref<8x32xf32, #tpu.memory_space<vmem>>, vector<1x32xf32>,
    %c6_i32 = arith.constant 6 : i32
    %242 = arith.index_cast %c6_i32 : i32 to index
    %c0_98 = arith.constant 0 : index
    %243 = vector.load %arg17[%242, %c0_98] : memref<8x128xf32, #tpu.memory_space<vmem>>, vector<1x128xf32>
    %c0_99 = arith.constant 0 : index
    %c0_100 = arith.constant 0 : index
    %244 = vector.load %arg5[%c0_99, %c0_100] : memref<32x128xf32, #tpu.memory_space<vmem>>, vector<32x128xf32>
    %cst_101 = arith.constant dense<0.000000e+00> : vector<1x128xf32>
    %245 = tpu.matmul %239, %244, %cst_101 {dimension_numbers = #tpu.dot_dimension_numbers<[1], [0], [0], [1], [0, 0, 1, 1], [], []>} : vector<1x32xf32>, vector<32x128xf32>, vector<1x128xf32> -> vector<1x128xf32>
    %246 = arith.addf %243, %245 : vector<1x128xf32>
    %247 = vector.extract_strided_slice %246 {offsets = [0, 0], sizes = [1, 32], strides = [1, 1]} : vector<1x128xf32> to vector<1x32xf32>
    %cst_102 = arith.constant 0.000000e+00 : f32
    %248 = vector.broadcast %cst_102 : f32 to vector<1x32xf32>
    %249 = arith.subf %248, %247 : vector<1x32xf32>
    %250 = math.exp %249 : vector<1x32xf32>
    %cst_103 = arith.constant 1.000000e+00 : f32
    %251 = vector.broadcast %cst_103 : f32 to vector<1x32xf32>
    %252 = arith.addf %251, %250 : vector<1x32xf32>
    %cst_104 = arith.constant 1.000000e+00 : f32
    %253 = vector.broadcast %cst_104 : f32 to vector<1x32xf32>
    %254 = arith.divf %253, %252 : vector<1x32xf32>
    %255 = vector.extract_strided_slice %246 {offsets = [0, 32], sizes = [1, 32], strides = [1, 1]} : vector<1x128xf32> to vector<1x32xf32>
    %cst_105 = arith.constant 0.000000e+00 : f32
    %256 = vector.broadcast %cst_105 : f32 to vector<1x32xf32>
    %257 = arith.subf %256, %255 : vector<1x32xf32>
    %258 = math.exp %257 : vector<1x32xf32>
    %cst_106 = arith.constant 1.000000e+00 : f32
    %259 = vector.broadcast %cst_106 : f32 to vector<1x32xf32>
    %260 = arith.addf %259, %258 : vector<1x32xf32>
    %cst_107 = arith.constant 1.000000e+00 : f32
    %261 = vector.broadcast %cst_107 : f32 to vector<1x32xf32>
    %262 = arith.divf %261, %260 : vector<1x32xf32>
    %263 = vector.extract_strided_slice %246 {offsets = [0, 64], sizes = [1, 32], strides = [1, 1]} : vector<1x128xf32> to vector<1x32xf32>
    %264 = math.tanh %263 : vector<1x32xf32>
    %265 = vector.extract_strided_slice %246 {offsets = [0, 96], sizes = [1, 32], strides = [1, 1]} : vector<1x128xf32> to vector<1x32xf32>
    %cst_108 = arith.constant 0.000000e+00 : f32
    %266 = vector.broadcast %cst_108 : f32 to vector<1x32xf32>
    %267 = arith.subf %266, %265 : vector<1x32xf32>
    %268 = math.exp %267 : vector<1x32xf32>
    %cst_109 = arith.constant 1.000000e+00 : f32
    %269 = vector.broadcast %cst_109 : f32 to vector<1x32xf32>
    %270 = arith.addf %269, %268 : vector<1x32xf32>
    %cst_110 = arith.constant 1.000000e+00 : f32
    %271 = vector.broadcast %cst_110 : f32 to vector<1x32xf32>
    %272 = arith.divf %271, %270 : vector<1x32xf32>
    %273 = arith.mulf %262, %237 : vector<1x32xf32>
    %274 = arith.mulf %254, %264 : vector<1x32xf32>
    %275 = arith.addf %273, %274 : vector<1x32xf32>
    %276 = math.tanh %275 : vector<1x32xf32>
    %277 = arith.mulf %272, %276 : vector<1x32xf32>
    %278 = arith.index_cast %c6_i32 : i32 to index
    %c0_111 = arith.constant 0 : index
    %279 = vector.load %arg18[%278, %c0_111] : memref<8x32xf32, #tpu.memory_space<vmem>>, vector<1x32xf32>
    tpu.vector_store %arg18[%278, %c0_111], %277 {strides = array<i32>} : memref<8x32xf32, #tpu.memory_space<vmem>>, vector<1x32xf32>,
    %c7_i32 = arith.constant 7 : i32
    %280 = arith.index_cast %c7_i32 : i32 to index
    %c0_112 = arith.constant 0 : index
    %281 = vector.load %arg17[%280, %c0_112] : memref<8x128xf32, #tpu.memory_space<vmem>>, vector<1x128xf32>
    %c0_113 = arith.constant 0 : index
    %c0_114 = arith.constant 0 : index
    %282 = vector.load %arg5[%c0_113, %c0_114] : memref<32x128xf32, #tpu.memory_space<vmem>>, vector<32x128xf32>
    %cst_115 = arith.constant dense<0.000000e+00> : vector<1x128xf32>
    %283 = tpu.matmul %277, %282, %cst_115 {dimension_numbers = #tpu.dot_dimension_numbers<[1], [0], [0], [1], [0, 0, 1, 1], [], []>} : vector<1x32xf32>, vector<32x128xf32>, vector<1x128xf32> -> vector<1x128xf32>
    %284 = arith.addf %281, %283 : vector<1x128xf32>
    %285 = vector.extract_strided_slice %284 {offsets = [0, 0], sizes = [1, 32], strides = [1, 1]} : vector<1x128xf32> to vector<1x32xf32>
    %cst_116 = arith.constant 0.000000e+00 : f32
    %286 = vector.broadcast %cst_116 : f32 to vector<1x32xf32>
    %287 = arith.subf %286, %285 : vector<1x32xf32>
    %288 = math.exp %287 : vector<1x32xf32>
    %cst_117 = arith.constant 1.000000e+00 : f32
    %289 = vector.broadcast %cst_117 : f32 to vector<1x32xf32>
    %290 = arith.addf %289, %288 : vector<1x32xf32>
    %cst_118 = arith.constant 1.000000e+00 : f32
    %291 = vector.broadcast %cst_118 : f32 to vector<1x32xf32>
    %292 = arith.divf %291, %290 : vector<1x32xf32>
    %293 = vector.extract_strided_slice %284 {offsets = [0, 32], sizes = [1, 32], strides = [1, 1]} : vector<1x128xf32> to vector<1x32xf32>
    %cst_119 = arith.constant 0.000000e+00 : f32
    %294 = vector.broadcast %cst_119 : f32 to vector<1x32xf32>
    %295 = arith.subf %294, %293 : vector<1x32xf32>
    %296 = math.exp %295 : vector<1x32xf32>
    %cst_120 = arith.constant 1.000000e+00 : f32
    %297 = vector.broadcast %cst_120 : f32 to vector<1x32xf32>
    %298 = arith.addf %297, %296 : vector<1x32xf32>
    %cst_121 = arith.constant 1.000000e+00 : f32
    %299 = vector.broadcast %cst_121 : f32 to vector<1x32xf32>
    %300 = arith.divf %299, %298 : vector<1x32xf32>
    %301 = vector.extract_strided_slice %284 {offsets = [0, 64], sizes = [1, 32], strides = [1, 1]} : vector<1x128xf32> to vector<1x32xf32>
    %302 = math.tanh %301 : vector<1x32xf32>
    %303 = vector.extract_strided_slice %284 {offsets = [0, 96], sizes = [1, 32], strides = [1, 1]} : vector<1x128xf32> to vector<1x32xf32>
    %cst_122 = arith.constant 0.000000e+00 : f32
    %304 = vector.broadcast %cst_122 : f32 to vector<1x32xf32>
    %305 = arith.subf %304, %303 : vector<1x32xf32>
    %306 = math.exp %305 : vector<1x32xf32>
    %cst_123 = arith.constant 1.000000e+00 : f32
    %307 = vector.broadcast %cst_123 : f32 to vector<1x32xf32>
    %308 = arith.addf %307, %306 : vector<1x32xf32>
    %cst_124 = arith.constant 1.000000e+00 : f32
    %309 = vector.broadcast %cst_124 : f32 to vector<1x32xf32>
    %310 = arith.divf %309, %308 : vector<1x32xf32>
    %311 = arith.mulf %300, %275 : vector<1x32xf32>
    %312 = arith.mulf %292, %302 : vector<1x32xf32>
    %313 = arith.addf %311, %312 : vector<1x32xf32>
    %314 = math.tanh %313 : vector<1x32xf32>
    %315 = arith.mulf %310, %314 : vector<1x32xf32>
    %316 = arith.index_cast %c7_i32 : i32 to index
    %c0_125 = arith.constant 0 : index
    %317 = vector.load %arg18[%316, %c0_125] : memref<8x32xf32, #tpu.memory_space<vmem>>, vector<1x32xf32>
    tpu.vector_store %arg18[%316, %c0_125], %315 {strides = array<i32>} : memref<8x32xf32, #tpu.memory_space<vmem>>, vector<1x32xf32>,
    %c8_i32 = arith.constant 8 : i32
    %c0_126 = arith.constant 0 : index
    %c0_127 = arith.constant 0 : index
    %318 = vector.load %arg18[%c0_126, %c0_127] : memref<8x32xf32, #tpu.memory_space<vmem>>, vector<8x32xf32>
    %c0_128 = arith.constant 0 : index
    %c0_129 = arith.constant 0 : index
    %319 = vector.load %arg7[%c0_128, %c0_129] : memref<32x128xf32, #tpu.memory_space<vmem>>, vector<32x128xf32>
    %cst_130 = arith.constant dense<0.000000e+00> : vector<8x128xf32>
    %320 = tpu.matmul %318, %319, %cst_130 {dimension_numbers = #tpu.dot_dimension_numbers<[1], [0], [0], [1], [0, 0, 1, 1], [], []>} : vector<8x32xf32>, vector<32x128xf32>, vector<8x128xf32> -> vector<8x128xf32>
    %c0_131 = arith.constant 0 : index
    %c0_132 = arith.constant 0 : index
    %321 = vector.load %arg9[%c0_131, %c0_132] : memref<1x128xf32, #tpu.memory_space<vmem>>, vector<1x128xf32>
    %322 = vector.broadcast %321 : vector<1x128xf32> to vector<8x128xf32>
    %323 = arith.addf %320, %322 : vector<8x128xf32>
    %c0_133 = arith.constant 0 : index
    %c0_134 = arith.constant 0 : index
    %324 = vector.load %arg17[%c0_133, %c0_134] : memref<8x128xf32, #tpu.memory_space<vmem>>, vector<8x128xf32>
    tpu.vector_store %arg17[%c0_133, %c0_134], %323 {strides = array<i32>} : memref<8x128xf32, #tpu.memory_space<vmem>>, vector<8x128xf32>,
    %325 = vector.extract_strided_slice %1 {offsets = [1, 0], sizes = [1, 32], strides = [1, 1]} : vector<2x32xf32> to vector<1x32xf32>
    %326 = vector.extract_strided_slice %3 {offsets = [1, 0], sizes = [1, 32], strides = [1, 1]} : vector<2x32xf32> to vector<1x32xf32>
    %c0_i32_135 = arith.constant 0 : i32
    %327 = arith.index_cast %c0_i32_135 : i32 to index
    %c0_136 = arith.constant 0 : index
    %328 = vector.load %arg17[%327, %c0_136] : memref<8x128xf32, #tpu.memory_space<vmem>>, vector<1x128xf32>
    %c0_137 = arith.constant 0 : index
    %c0_138 = arith.constant 0 : index
    %329 = vector.load %arg8[%c0_137, %c0_138] : memref<32x128xf32, #tpu.memory_space<vmem>>, vector<32x128xf32>
    %cst_139 = arith.constant dense<0.000000e+00> : vector<1x128xf32>
    %330 = tpu.matmul %325, %329, %cst_139 {dimension_numbers = #tpu.dot_dimension_numbers<[1], [0], [0], [1], [0, 0, 1, 1], [], []>} : vector<1x32xf32>, vector<32x128xf32>, vector<1x128xf32> -> vector<1x128xf32>
    %331 = arith.addf %328, %330 : vector<1x128xf32>
    %332 = vector.extract_strided_slice %331 {offsets = [0, 0], sizes = [1, 32], strides = [1, 1]} : vector<1x128xf32> to vector<1x32xf32>
    %cst_140 = arith.constant 0.000000e+00 : f32
    %333 = vector.broadcast %cst_140 : f32 to vector<1x32xf32>
    %334 = arith.subf %333, %332 : vector<1x32xf32>
    %335 = math.exp %334 : vector<1x32xf32>
    %cst_141 = arith.constant 1.000000e+00 : f32
    %336 = vector.broadcast %cst_141 : f32 to vector<1x32xf32>
    %337 = arith.addf %336, %335 : vector<1x32xf32>
    %cst_142 = arith.constant 1.000000e+00 : f32
    %338 = vector.broadcast %cst_142 : f32 to vector<1x32xf32>
    %339 = arith.divf %338, %337 : vector<1x32xf32>
    %340 = vector.extract_strided_slice %331 {offsets = [0, 32], sizes = [1, 32], strides = [1, 1]} : vector<1x128xf32> to vector<1x32xf32>
    %cst_143 = arith.constant 0.000000e+00 : f32
    %341 = vector.broadcast %cst_143 : f32 to vector<1x32xf32>
    %342 = arith.subf %341, %340 : vector<1x32xf32>
    %343 = math.exp %342 : vector<1x32xf32>
    %cst_144 = arith.constant 1.000000e+00 : f32
    %344 = vector.broadcast %cst_144 : f32 to vector<1x32xf32>
    %345 = arith.addf %344, %343 : vector<1x32xf32>
    %cst_145 = arith.constant 1.000000e+00 : f32
    %346 = vector.broadcast %cst_145 : f32 to vector<1x32xf32>
    %347 = arith.divf %346, %345 : vector<1x32xf32>
    %348 = vector.extract_strided_slice %331 {offsets = [0, 64], sizes = [1, 32], strides = [1, 1]} : vector<1x128xf32> to vector<1x32xf32>
    %349 = math.tanh %348 : vector<1x32xf32>
    %350 = vector.extract_strided_slice %331 {offsets = [0, 96], sizes = [1, 32], strides = [1, 1]} : vector<1x128xf32> to vector<1x32xf32>
    %cst_146 = arith.constant 0.000000e+00 : f32
    %351 = vector.broadcast %cst_146 : f32 to vector<1x32xf32>
    %352 = arith.subf %351, %350 : vector<1x32xf32>
    %353 = math.exp %352 : vector<1x32xf32>
    %cst_147 = arith.constant 1.000000e+00 : f32
    %354 = vector.broadcast %cst_147 : f32 to vector<1x32xf32>
    %355 = arith.addf %354, %353 : vector<1x32xf32>
    %cst_148 = arith.constant 1.000000e+00 : f32
    %356 = vector.broadcast %cst_148 : f32 to vector<1x32xf32>
    %357 = arith.divf %356, %355 : vector<1x32xf32>
    %358 = arith.mulf %347, %326 : vector<1x32xf32>
    %359 = arith.mulf %339, %349 : vector<1x32xf32>
    %360 = arith.addf %358, %359 : vector<1x32xf32>
    %361 = math.tanh %360 : vector<1x32xf32>
    %362 = arith.mulf %357, %361 : vector<1x32xf32>
    %c1_i32_149 = arith.constant 1 : i32
    %363 = arith.index_cast %c1_i32_149 : i32 to index
    %c0_150 = arith.constant 0 : index
    %364 = vector.load %arg17[%363, %c0_150] : memref<8x128xf32, #tpu.memory_space<vmem>>, vector<1x128xf32>
    %c0_151 = arith.constant 0 : index
    %c0_152 = arith.constant 0 : index
    %365 = vector.load %arg8[%c0_151, %c0_152] : memref<32x128xf32, #tpu.memory_space<vmem>>, vector<32x128xf32>
    %cst_153 = arith.constant dense<0.000000e+00> : vector<1x128xf32>
    %366 = tpu.matmul %362, %365, %cst_153 {dimension_numbers = #tpu.dot_dimension_numbers<[1], [0], [0], [1], [0, 0, 1, 1], [], []>} : vector<1x32xf32>, vector<32x128xf32>, vector<1x128xf32> -> vector<1x128xf32>
    %367 = arith.addf %364, %366 : vector<1x128xf32>
    %368 = vector.extract_strided_slice %367 {offsets = [0, 0], sizes = [1, 32], strides = [1, 1]} : vector<1x128xf32> to vector<1x32xf32>
    %cst_154 = arith.constant 0.000000e+00 : f32
    %369 = vector.broadcast %cst_154 : f32 to vector<1x32xf32>
    %370 = arith.subf %369, %368 : vector<1x32xf32>
    %371 = math.exp %370 : vector<1x32xf32>
    %cst_155 = arith.constant 1.000000e+00 : f32
    %372 = vector.broadcast %cst_155 : f32 to vector<1x32xf32>
    %373 = arith.addf %372, %371 : vector<1x32xf32>
    %cst_156 = arith.constant 1.000000e+00 : f32
    %374 = vector.broadcast %cst_156 : f32 to vector<1x32xf32>
    %375 = arith.divf %374, %373 : vector<1x32xf32>
    %376 = vector.extract_strided_slice %367 {offsets = [0, 32], sizes = [1, 32], strides = [1, 1]} : vector<1x128xf32> to vector<1x32xf32>
    %cst_157 = arith.constant 0.000000e+00 : f32
    %377 = vector.broadcast %cst_157 : f32 to vector<1x32xf32>
    %378 = arith.subf %377, %376 : vector<1x32xf32>
    %379 = math.exp %378 : vector<1x32xf32>
    %cst_158 = arith.constant 1.000000e+00 : f32
    %380 = vector.broadcast %cst_158 : f32 to vector<1x32xf32>
    %381 = arith.addf %380, %379 : vector<1x32xf32>
    %cst_159 = arith.constant 1.000000e+00 : f32
    %382 = vector.broadcast %cst_159 : f32 to vector<1x32xf32>
    %383 = arith.divf %382, %381 : vector<1x32xf32>
    %384 = vector.extract_strided_slice %367 {offsets = [0, 64], sizes = [1, 32], strides = [1, 1]} : vector<1x128xf32> to vector<1x32xf32>
    %385 = math.tanh %384 : vector<1x32xf32>
    %386 = vector.extract_strided_slice %367 {offsets = [0, 96], sizes = [1, 32], strides = [1, 1]} : vector<1x128xf32> to vector<1x32xf32>
    %cst_160 = arith.constant 0.000000e+00 : f32
    %387 = vector.broadcast %cst_160 : f32 to vector<1x32xf32>
    %388 = arith.subf %387, %386 : vector<1x32xf32>
    %389 = math.exp %388 : vector<1x32xf32>
    %cst_161 = arith.constant 1.000000e+00 : f32
    %390 = vector.broadcast %cst_161 : f32 to vector<1x32xf32>
    %391 = arith.addf %390, %389 : vector<1x32xf32>
    %cst_162 = arith.constant 1.000000e+00 : f32
    %392 = vector.broadcast %cst_162 : f32 to vector<1x32xf32>
    %393 = arith.divf %392, %391 : vector<1x32xf32>
    %394 = arith.mulf %383, %360 : vector<1x32xf32>
    %395 = arith.mulf %375, %385 : vector<1x32xf32>
    %396 = arith.addf %394, %395 : vector<1x32xf32>
    %397 = math.tanh %396 : vector<1x32xf32>
    %398 = arith.mulf %393, %397 : vector<1x32xf32>
    %c2_i32_163 = arith.constant 2 : i32
    %399 = arith.index_cast %c2_i32_163 : i32 to index
    %c0_164 = arith.constant 0 : index
    %400 = vector.load %arg17[%399, %c0_164] : memref<8x128xf32, #tpu.memory_space<vmem>>, vector<1x128xf32>
    %c0_165 = arith.constant 0 : index
    %c0_166 = arith.constant 0 : index
    %401 = vector.load %arg8[%c0_165, %c0_166] : memref<32x128xf32, #tpu.memory_space<vmem>>, vector<32x128xf32>
    %cst_167 = arith.constant dense<0.000000e+00> : vector<1x128xf32>
    %402 = tpu.matmul %398, %401, %cst_167 {dimension_numbers = #tpu.dot_dimension_numbers<[1], [0], [0], [1], [0, 0, 1, 1], [], []>} : vector<1x32xf32>, vector<32x128xf32>, vector<1x128xf32> -> vector<1x128xf32>
    %403 = arith.addf %400, %402 : vector<1x128xf32>
    %404 = vector.extract_strided_slice %403 {offsets = [0, 0], sizes = [1, 32], strides = [1, 1]} : vector<1x128xf32> to vector<1x32xf32>
    %cst_168 = arith.constant 0.000000e+00 : f32
    %405 = vector.broadcast %cst_168 : f32 to vector<1x32xf32>
    %406 = arith.subf %405, %404 : vector<1x32xf32>
    %407 = math.exp %406 : vector<1x32xf32>
    %cst_169 = arith.constant 1.000000e+00 : f32
    %408 = vector.broadcast %cst_169 : f32 to vector<1x32xf32>
    %409 = arith.addf %408, %407 : vector<1x32xf32>
    %cst_170 = arith.constant 1.000000e+00 : f32
    %410 = vector.broadcast %cst_170 : f32 to vector<1x32xf32>
    %411 = arith.divf %410, %409 : vector<1x32xf32>
    %412 = vector.extract_strided_slice %403 {offsets = [0, 32], sizes = [1, 32], strides = [1, 1]} : vector<1x128xf32> to vector<1x32xf32>
    %cst_171 = arith.constant 0.000000e+00 : f32
    %413 = vector.broadcast %cst_171 : f32 to vector<1x32xf32>
    %414 = arith.subf %413, %412 : vector<1x32xf32>
    %415 = math.exp %414 : vector<1x32xf32>
    %cst_172 = arith.constant 1.000000e+00 : f32
    %416 = vector.broadcast %cst_172 : f32 to vector<1x32xf32>
    %417 = arith.addf %416, %415 : vector<1x32xf32>
    %cst_173 = arith.constant 1.000000e+00 : f32
    %418 = vector.broadcast %cst_173 : f32 to vector<1x32xf32>
    %419 = arith.divf %418, %417 : vector<1x32xf32>
    %420 = vector.extract_strided_slice %403 {offsets = [0, 64], sizes = [1, 32], strides = [1, 1]} : vector<1x128xf32> to vector<1x32xf32>
    %421 = math.tanh %420 : vector<1x32xf32>
    %422 = vector.extract_strided_slice %403 {offsets = [0, 96], sizes = [1, 32], strides = [1, 1]} : vector<1x128xf32> to vector<1x32xf32>
    %cst_174 = arith.constant 0.000000e+00 : f32
    %423 = vector.broadcast %cst_174 : f32 to vector<1x32xf32>
    %424 = arith.subf %423, %422 : vector<1x32xf32>
    %425 = math.exp %424 : vector<1x32xf32>
    %cst_175 = arith.constant 1.000000e+00 : f32
    %426 = vector.broadcast %cst_175 : f32 to vector<1x32xf32>
    %427 = arith.addf %426, %425 : vector<1x32xf32>
    %cst_176 = arith.constant 1.000000e+00 : f32
    %428 = vector.broadcast %cst_176 : f32 to vector<1x32xf32>
    %429 = arith.divf %428, %427 : vector<1x32xf32>
    %430 = arith.mulf %419, %396 : vector<1x32xf32>
    %431 = arith.mulf %411, %421 : vector<1x32xf32>
    %432 = arith.addf %430, %431 : vector<1x32xf32>
    %433 = math.tanh %432 : vector<1x32xf32>
    %434 = arith.mulf %429, %433 : vector<1x32xf32>
    %c3_i32_177 = arith.constant 3 : i32
    %435 = arith.index_cast %c3_i32_177 : i32 to index
    %c0_178 = arith.constant 0 : index
    %436 = vector.load %arg17[%435, %c0_178] : memref<8x128xf32, #tpu.memory_space<vmem>>, vector<1x128xf32>
    %c0_179 = arith.constant 0 : index
    %c0_180 = arith.constant 0 : index
    %437 = vector.load %arg8[%c0_179, %c0_180] : memref<32x128xf32, #tpu.memory_space<vmem>>, vector<32x128xf32>
    %cst_181 = arith.constant dense<0.000000e+00> : vector<1x128xf32>
    %438 = tpu.matmul %434, %437, %cst_181 {dimension_numbers = #tpu.dot_dimension_numbers<[1], [0], [0], [1], [0, 0, 1, 1], [], []>} : vector<1x32xf32>, vector<32x128xf32>, vector<1x128xf32> -> vector<1x128xf32>
    %439 = arith.addf %436, %438 : vector<1x128xf32>
    %440 = vector.extract_strided_slice %439 {offsets = [0, 0], sizes = [1, 32], strides = [1, 1]} : vector<1x128xf32> to vector<1x32xf32>
    %cst_182 = arith.constant 0.000000e+00 : f32
    %441 = vector.broadcast %cst_182 : f32 to vector<1x32xf32>
    %442 = arith.subf %441, %440 : vector<1x32xf32>
    %443 = math.exp %442 : vector<1x32xf32>
    %cst_183 = arith.constant 1.000000e+00 : f32
    %444 = vector.broadcast %cst_183 : f32 to vector<1x32xf32>
    %445 = arith.addf %444, %443 : vector<1x32xf32>
    %cst_184 = arith.constant 1.000000e+00 : f32
    %446 = vector.broadcast %cst_184 : f32 to vector<1x32xf32>
    %447 = arith.divf %446, %445 : vector<1x32xf32>
    %448 = vector.extract_strided_slice %439 {offsets = [0, 32], sizes = [1, 32], strides = [1, 1]} : vector<1x128xf32> to vector<1x32xf32>
    %cst_185 = arith.constant 0.000000e+00 : f32
    %449 = vector.broadcast %cst_185 : f32 to vector<1x32xf32>
    %450 = arith.subf %449, %448 : vector<1x32xf32>
    %451 = math.exp %450 : vector<1x32xf32>
    %cst_186 = arith.constant 1.000000e+00 : f32
    %452 = vector.broadcast %cst_186 : f32 to vector<1x32xf32>
    %453 = arith.addf %452, %451 : vector<1x32xf32>
    %cst_187 = arith.constant 1.000000e+00 : f32
    %454 = vector.broadcast %cst_187 : f32 to vector<1x32xf32>
    %455 = arith.divf %454, %453 : vector<1x32xf32>
    %456 = vector.extract_strided_slice %439 {offsets = [0, 64], sizes = [1, 32], strides = [1, 1]} : vector<1x128xf32> to vector<1x32xf32>
    %457 = math.tanh %456 : vector<1x32xf32>
    %458 = vector.extract_strided_slice %439 {offsets = [0, 96], sizes = [1, 32], strides = [1, 1]} : vector<1x128xf32> to vector<1x32xf32>
    %cst_188 = arith.constant 0.000000e+00 : f32
    %459 = vector.broadcast %cst_188 : f32 to vector<1x32xf32>
    %460 = arith.subf %459, %458 : vector<1x32xf32>
    %461 = math.exp %460 : vector<1x32xf32>
    %cst_189 = arith.constant 1.000000e+00 : f32
    %462 = vector.broadcast %cst_189 : f32 to vector<1x32xf32>
    %463 = arith.addf %462, %461 : vector<1x32xf32>
    %cst_190 = arith.constant 1.000000e+00 : f32
    %464 = vector.broadcast %cst_190 : f32 to vector<1x32xf32>
    %465 = arith.divf %464, %463 : vector<1x32xf32>
    %466 = arith.mulf %455, %432 : vector<1x32xf32>
    %467 = arith.mulf %447, %457 : vector<1x32xf32>
    %468 = arith.addf %466, %467 : vector<1x32xf32>
    %469 = math.tanh %468 : vector<1x32xf32>
    %470 = arith.mulf %465, %469 : vector<1x32xf32>
    %c4_i32_191 = arith.constant 4 : i32
    %471 = arith.index_cast %c4_i32_191 : i32 to index
    %c0_192 = arith.constant 0 : index
    %472 = vector.load %arg17[%471, %c0_192] : memref<8x128xf32, #tpu.memory_space<vmem>>, vector<1x128xf32>
    %c0_193 = arith.constant 0 : index
    %c0_194 = arith.constant 0 : index
    %473 = vector.load %arg8[%c0_193, %c0_194] : memref<32x128xf32, #tpu.memory_space<vmem>>, vector<32x128xf32>
    %cst_195 = arith.constant dense<0.000000e+00> : vector<1x128xf32>
    %474 = tpu.matmul %470, %473, %cst_195 {dimension_numbers = #tpu.dot_dimension_numbers<[1], [0], [0], [1], [0, 0, 1, 1], [], []>} : vector<1x32xf32>, vector<32x128xf32>, vector<1x128xf32> -> vector<1x128xf32>
    %475 = arith.addf %472, %474 : vector<1x128xf32>
    %476 = vector.extract_strided_slice %475 {offsets = [0, 0], sizes = [1, 32], strides = [1, 1]} : vector<1x128xf32> to vector<1x32xf32>
    %cst_196 = arith.constant 0.000000e+00 : f32
    %477 = vector.broadcast %cst_196 : f32 to vector<1x32xf32>
    %478 = arith.subf %477, %476 : vector<1x32xf32>
    %479 = math.exp %478 : vector<1x32xf32>
    %cst_197 = arith.constant 1.000000e+00 : f32
    %480 = vector.broadcast %cst_197 : f32 to vector<1x32xf32>
    %481 = arith.addf %480, %479 : vector<1x32xf32>
    %cst_198 = arith.constant 1.000000e+00 : f32
    %482 = vector.broadcast %cst_198 : f32 to vector<1x32xf32>
    %483 = arith.divf %482, %481 : vector<1x32xf32>
    %484 = vector.extract_strided_slice %475 {offsets = [0, 32], sizes = [1, 32], strides = [1, 1]} : vector<1x128xf32> to vector<1x32xf32>
    %cst_199 = arith.constant 0.000000e+00 : f32
    %485 = vector.broadcast %cst_199 : f32 to vector<1x32xf32>
    %486 = arith.subf %485, %484 : vector<1x32xf32>
    %487 = math.exp %486 : vector<1x32xf32>
    %cst_200 = arith.constant 1.000000e+00 : f32
    %488 = vector.broadcast %cst_200 : f32 to vector<1x32xf32>
    %489 = arith.addf %488, %487 : vector<1x32xf32>
    %cst_201 = arith.constant 1.000000e+00 : f32
    %490 = vector.broadcast %cst_201 : f32 to vector<1x32xf32>
    %491 = arith.divf %490, %489 : vector<1x32xf32>
    %492 = vector.extract_strided_slice %475 {offsets = [0, 64], sizes = [1, 32], strides = [1, 1]} : vector<1x128xf32> to vector<1x32xf32>
    %493 = math.tanh %492 : vector<1x32xf32>
    %494 = vector.extract_strided_slice %475 {offsets = [0, 96], sizes = [1, 32], strides = [1, 1]} : vector<1x128xf32> to vector<1x32xf32>
    %cst_202 = arith.constant 0.000000e+00 : f32
    %495 = vector.broadcast %cst_202 : f32 to vector<1x32xf32>
    %496 = arith.subf %495, %494 : vector<1x32xf32>
    %497 = math.exp %496 : vector<1x32xf32>
    %cst_203 = arith.constant 1.000000e+00 : f32
    %498 = vector.broadcast %cst_203 : f32 to vector<1x32xf32>
    %499 = arith.addf %498, %497 : vector<1x32xf32>
    %cst_204 = arith.constant 1.000000e+00 : f32
    %500 = vector.broadcast %cst_204 : f32 to vector<1x32xf32>
    %501 = arith.divf %500, %499 : vector<1x32xf32>
    %502 = arith.mulf %491, %468 : vector<1x32xf32>
    %503 = arith.mulf %483, %493 : vector<1x32xf32>
    %504 = arith.addf %502, %503 : vector<1x32xf32>
    %505 = math.tanh %504 : vector<1x32xf32>
    %506 = arith.mulf %501, %505 : vector<1x32xf32>
    %c5_i32_205 = arith.constant 5 : i32
    %507 = arith.index_cast %c5_i32_205 : i32 to index
    %c0_206 = arith.constant 0 : index
    %508 = vector.load %arg17[%507, %c0_206] : memref<8x128xf32, #tpu.memory_space<vmem>>, vector<1x128xf32>
    %c0_207 = arith.constant 0 : index
    %c0_208 = arith.constant 0 : index
    %509 = vector.load %arg8[%c0_207, %c0_208] : memref<32x128xf32, #tpu.memory_space<vmem>>, vector<32x128xf32>
    %cst_209 = arith.constant dense<0.000000e+00> : vector<1x128xf32>
    %510 = tpu.matmul %506, %509, %cst_209 {dimension_numbers = #tpu.dot_dimension_numbers<[1], [0], [0], [1], [0, 0, 1, 1], [], []>} : vector<1x32xf32>, vector<32x128xf32>, vector<1x128xf32> -> vector<1x128xf32>
    %511 = arith.addf %508, %510 : vector<1x128xf32>
    %512 = vector.extract_strided_slice %511 {offsets = [0, 0], sizes = [1, 32], strides = [1, 1]} : vector<1x128xf32> to vector<1x32xf32>
    %cst_210 = arith.constant 0.000000e+00 : f32
    %513 = vector.broadcast %cst_210 : f32 to vector<1x32xf32>
    %514 = arith.subf %513, %512 : vector<1x32xf32>
    %515 = math.exp %514 : vector<1x32xf32>
    %cst_211 = arith.constant 1.000000e+00 : f32
    %516 = vector.broadcast %cst_211 : f32 to vector<1x32xf32>
    %517 = arith.addf %516, %515 : vector<1x32xf32>
    %cst_212 = arith.constant 1.000000e+00 : f32
    %518 = vector.broadcast %cst_212 : f32 to vector<1x32xf32>
    %519 = arith.divf %518, %517 : vector<1x32xf32>
    %520 = vector.extract_strided_slice %511 {offsets = [0, 32], sizes = [1, 32], strides = [1, 1]} : vector<1x128xf32> to vector<1x32xf32>
    %cst_213 = arith.constant 0.000000e+00 : f32
    %521 = vector.broadcast %cst_213 : f32 to vector<1x32xf32>
    %522 = arith.subf %521, %520 : vector<1x32xf32>
    %523 = math.exp %522 : vector<1x32xf32>
    %cst_214 = arith.constant 1.000000e+00 : f32
    %524 = vector.broadcast %cst_214 : f32 to vector<1x32xf32>
    %525 = arith.addf %524, %523 : vector<1x32xf32>
    %cst_215 = arith.constant 1.000000e+00 : f32
    %526 = vector.broadcast %cst_215 : f32 to vector<1x32xf32>
    %527 = arith.divf %526, %525 : vector<1x32xf32>
    %528 = vector.extract_strided_slice %511 {offsets = [0, 64], sizes = [1, 32], strides = [1, 1]} : vector<1x128xf32> to vector<1x32xf32>
    %529 = math.tanh %528 : vector<1x32xf32>
    %530 = vector.extract_strided_slice %511 {offsets = [0, 96], sizes = [1, 32], strides = [1, 1]} : vector<1x128xf32> to vector<1x32xf32>
    %cst_216 = arith.constant 0.000000e+00 : f32
    %531 = vector.broadcast %cst_216 : f32 to vector<1x32xf32>
    %532 = arith.subf %531, %530 : vector<1x32xf32>
    %533 = math.exp %532 : vector<1x32xf32>
    %cst_217 = arith.constant 1.000000e+00 : f32
    %534 = vector.broadcast %cst_217 : f32 to vector<1x32xf32>
    %535 = arith.addf %534, %533 : vector<1x32xf32>
    %cst_218 = arith.constant 1.000000e+00 : f32
    %536 = vector.broadcast %cst_218 : f32 to vector<1x32xf32>
    %537 = arith.divf %536, %535 : vector<1x32xf32>
    %538 = arith.mulf %527, %504 : vector<1x32xf32>
    %539 = arith.mulf %519, %529 : vector<1x32xf32>
    %540 = arith.addf %538, %539 : vector<1x32xf32>
    %541 = math.tanh %540 : vector<1x32xf32>
    %542 = arith.mulf %537, %541 : vector<1x32xf32>
    %c6_i32_219 = arith.constant 6 : i32
    %543 = arith.index_cast %c6_i32_219 : i32 to index
    %c0_220 = arith.constant 0 : index
    %544 = vector.load %arg17[%543, %c0_220] : memref<8x128xf32, #tpu.memory_space<vmem>>, vector<1x128xf32>
    %c0_221 = arith.constant 0 : index
    %c0_222 = arith.constant 0 : index
    %545 = vector.load %arg8[%c0_221, %c0_222] : memref<32x128xf32, #tpu.memory_space<vmem>>, vector<32x128xf32>
    %cst_223 = arith.constant dense<0.000000e+00> : vector<1x128xf32>
    %546 = tpu.matmul %542, %545, %cst_223 {dimension_numbers = #tpu.dot_dimension_numbers<[1], [0], [0], [1], [0, 0, 1, 1], [], []>} : vector<1x32xf32>, vector<32x128xf32>, vector<1x128xf32> -> vector<1x128xf32>
    %547 = arith.addf %544, %546 : vector<1x128xf32>
    %548 = vector.extract_strided_slice %547 {offsets = [0, 0], sizes = [1, 32], strides = [1, 1]} : vector<1x128xf32> to vector<1x32xf32>
    %cst_224 = arith.constant 0.000000e+00 : f32
    %549 = vector.broadcast %cst_224 : f32 to vector<1x32xf32>
    %550 = arith.subf %549, %548 : vector<1x32xf32>
    %551 = math.exp %550 : vector<1x32xf32>
    %cst_225 = arith.constant 1.000000e+00 : f32
    %552 = vector.broadcast %cst_225 : f32 to vector<1x32xf32>
    %553 = arith.addf %552, %551 : vector<1x32xf32>
    %cst_226 = arith.constant 1.000000e+00 : f32
    %554 = vector.broadcast %cst_226 : f32 to vector<1x32xf32>
    %555 = arith.divf %554, %553 : vector<1x32xf32>
    %556 = vector.extract_strided_slice %547 {offsets = [0, 32], sizes = [1, 32], strides = [1, 1]} : vector<1x128xf32> to vector<1x32xf32>
    %cst_227 = arith.constant 0.000000e+00 : f32
    %557 = vector.broadcast %cst_227 : f32 to vector<1x32xf32>
    %558 = arith.subf %557, %556 : vector<1x32xf32>
    %559 = math.exp %558 : vector<1x32xf32>
    %cst_228 = arith.constant 1.000000e+00 : f32
    %560 = vector.broadcast %cst_228 : f32 to vector<1x32xf32>
    %561 = arith.addf %560, %559 : vector<1x32xf32>
    %cst_229 = arith.constant 1.000000e+00 : f32
    %562 = vector.broadcast %cst_229 : f32 to vector<1x32xf32>
    %563 = arith.divf %562, %561 : vector<1x32xf32>
    %564 = vector.extract_strided_slice %547 {offsets = [0, 64], sizes = [1, 32], strides = [1, 1]} : vector<1x128xf32> to vector<1x32xf32>
    %565 = math.tanh %564 : vector<1x32xf32>
    %566 = vector.extract_strided_slice %547 {offsets = [0, 96], sizes = [1, 32], strides = [1, 1]} : vector<1x128xf32> to vector<1x32xf32>
    %cst_230 = arith.constant 0.000000e+00 : f32
    %567 = vector.broadcast %cst_230 : f32 to vector<1x32xf32>
    %568 = arith.subf %567, %566 : vector<1x32xf32>
    %569 = math.exp %568 : vector<1x32xf32>
    %cst_231 = arith.constant 1.000000e+00 : f32
    %570 = vector.broadcast %cst_231 : f32 to vector<1x32xf32>
    %571 = arith.addf %570, %569 : vector<1x32xf32>
    %cst_232 = arith.constant 1.000000e+00 : f32
    %572 = vector.broadcast %cst_232 : f32 to vector<1x32xf32>
    %573 = arith.divf %572, %571 : vector<1x32xf32>
    %574 = arith.mulf %563, %540 : vector<1x32xf32>
    %575 = arith.mulf %555, %565 : vector<1x32xf32>
    %576 = arith.addf %574, %575 : vector<1x32xf32>
    %577 = math.tanh %576 : vector<1x32xf32>
    %578 = arith.mulf %573, %577 : vector<1x32xf32>
    %c7_i32_233 = arith.constant 7 : i32
    %579 = arith.index_cast %c7_i32_233 : i32 to index
    %c0_234 = arith.constant 0 : index
    %580 = vector.load %arg17[%579, %c0_234] : memref<8x128xf32, #tpu.memory_space<vmem>>, vector<1x128xf32>
    %c0_235 = arith.constant 0 : index
    %c0_236 = arith.constant 0 : index
    %581 = vector.load %arg8[%c0_235, %c0_236] : memref<32x128xf32, #tpu.memory_space<vmem>>, vector<32x128xf32>
    %cst_237 = arith.constant dense<0.000000e+00> : vector<1x128xf32>
    %582 = tpu.matmul %578, %581, %cst_237 {dimension_numbers = #tpu.dot_dimension_numbers<[1], [0], [0], [1], [0, 0, 1, 1], [], []>} : vector<1x32xf32>, vector<32x128xf32>, vector<1x128xf32> -> vector<1x128xf32>
    %583 = arith.addf %580, %582 : vector<1x128xf32>
    %584 = vector.extract_strided_slice %583 {offsets = [0, 0], sizes = [1, 32], strides = [1, 1]} : vector<1x128xf32> to vector<1x32xf32>
    %cst_238 = arith.constant 0.000000e+00 : f32
    %585 = vector.broadcast %cst_238 : f32 to vector<1x32xf32>
    %586 = arith.subf %585, %584 : vector<1x32xf32>
    %587 = math.exp %586 : vector<1x32xf32>
    %cst_239 = arith.constant 1.000000e+00 : f32
    %588 = vector.broadcast %cst_239 : f32 to vector<1x32xf32>
    %589 = arith.addf %588, %587 : vector<1x32xf32>
    %cst_240 = arith.constant 1.000000e+00 : f32
    %590 = vector.broadcast %cst_240 : f32 to vector<1x32xf32>
    %591 = arith.divf %590, %589 : vector<1x32xf32>
    %592 = vector.extract_strided_slice %583 {offsets = [0, 32], sizes = [1, 32], strides = [1, 1]} : vector<1x128xf32> to vector<1x32xf32>
    %cst_241 = arith.constant 0.000000e+00 : f32
    %593 = vector.broadcast %cst_241 : f32 to vector<1x32xf32>
    %594 = arith.subf %593, %592 : vector<1x32xf32>
    %595 = math.exp %594 : vector<1x32xf32>
    %cst_242 = arith.constant 1.000000e+00 : f32
    %596 = vector.broadcast %cst_242 : f32 to vector<1x32xf32>
    %597 = arith.addf %596, %595 : vector<1x32xf32>
    %cst_243 = arith.constant 1.000000e+00 : f32
    %598 = vector.broadcast %cst_243 : f32 to vector<1x32xf32>
    %599 = arith.divf %598, %597 : vector<1x32xf32>
    %600 = vector.extract_strided_slice %583 {offsets = [0, 64], sizes = [1, 32], strides = [1, 1]} : vector<1x128xf32> to vector<1x32xf32>
    %601 = math.tanh %600 : vector<1x32xf32>
    %602 = vector.extract_strided_slice %583 {offsets = [0, 96], sizes = [1, 32], strides = [1, 1]} : vector<1x128xf32> to vector<1x32xf32>
    %cst_244 = arith.constant 0.000000e+00 : f32
    %603 = vector.broadcast %cst_244 : f32 to vector<1x32xf32>
    %604 = arith.subf %603, %602 : vector<1x32xf32>
    %605 = math.exp %604 : vector<1x32xf32>
    %cst_245 = arith.constant 1.000000e+00 : f32
    %606 = vector.broadcast %cst_245 : f32 to vector<1x32xf32>
    %607 = arith.addf %606, %605 : vector<1x32xf32>
    %cst_246 = arith.constant 1.000000e+00 : f32
    %608 = vector.broadcast %cst_246 : f32 to vector<1x32xf32>
    %609 = arith.divf %608, %607 : vector<1x32xf32>
    %610 = arith.mulf %599, %576 : vector<1x32xf32>
    %611 = arith.mulf %591, %601 : vector<1x32xf32>
    %612 = arith.addf %610, %611 : vector<1x32xf32>
    %613 = math.tanh %612 : vector<1x32xf32>
    %614 = arith.mulf %609, %613 : vector<1x32xf32>
    %c8_i32_247 = arith.constant 8 : i32
    %615 = tpu.concatenate %315, %614 in 0 : vector<1x32xf32>, vector<1x32xf32> -> vector<2x32xf32>
    %c0_248 = arith.constant 0 : index
    %c0_249 = arith.constant 0 : index
    %c0_250 = arith.constant 0 : index
    %616 = vector.load %arg15[%c0_248, %c0_249, %c0_250] : memref<1x2x32xf32, #tpu.memory_space<vmem>>, vector<1x2x32xf32>
    %617 = vector.shape_cast %616 : vector<1x2x32xf32> to vector<2x32xf32>
    %618 = vector.shape_cast %615 : vector<2x32xf32> to vector<1x2x32xf32>
    tpu.vector_store %arg15[%c0_248, %c0_249, %c0_250], %618 {strides = array<i32>} : memref<1x2x32xf32, #tpu.memory_space<vmem>>, vector<1x2x32xf32>,
    %619 = tpu.concatenate %313, %612 in 0 : vector<1x32xf32>, vector<1x32xf32> -> vector<2x32xf32>
    %c0_251 = arith.constant 0 : index
    %c0_252 = arith.constant 0 : index
    %c0_253 = arith.constant 0 : index
    %620 = vector.load %arg16[%c0_251, %c0_252, %c0_253] : memref<1x2x32xf32, #tpu.memory_space<vmem>>, vector<1x2x32xf32>
    %621 = vector.shape_cast %620 : vector<1x2x32xf32> to vector<2x32xf32>
    %622 = vector.shape_cast %619 : vector<2x32xf32> to vector<1x2x32xf32>
    tpu.vector_store %arg16[%c0_251, %c0_252, %c0_253], %622 {strides = array<i32>} : memref<1x2x32xf32, #tpu.memory_space<vmem>>, vector<1x2x32xf32>,
    %c0_254 = arith.constant 0 : index
    %c0_255 = arith.constant 0 : index
    %623 = vector.load %arg10[%c0_254, %c0_255] : memref<32x16xf32, #tpu.memory_space<vmem>>, vector<32x16xf32>
    %cst_256 = arith.constant dense<0.000000e+00> : vector<1x16xf32>
    %624 = tpu.matmul %614, %623, %cst_256 {dimension_numbers = #tpu.dot_dimension_numbers<[1], [0], [0], [1], [0, 0, 1, 1], [], []>} : vector<1x32xf32>, vector<32x16xf32>, vector<1x16xf32> -> vector<1x16xf32>
    %c0_257 = arith.constant 0 : index
    %c0_258 = arith.constant 0 : index
    %625 = vector.load %arg11[%c0_257, %c0_258] : memref<1x16xf32, #tpu.memory_space<vmem>>, vector<1x16xf32>
    %626 = arith.addf %624, %625 : vector<1x16xf32>
    %c0_259 = arith.constant 0 : index
    %c0_260 = arith.constant 0 : index
    %627 = vector.load %arg12[%c0_259, %c0_260] : memref<16x128xf32, #tpu.memory_space<vmem>>, vector<16x128xf32>
    %cst_261 = arith.constant dense<0.000000e+00> : vector<1x128xf32>
    %628 = tpu.matmul %626, %627, %cst_261 {dimension_numbers = #tpu.dot_dimension_numbers<[1], [0], [0], [1], [0, 0, 1, 1], [], []>} : vector<1x16xf32>, vector<16x128xf32>, vector<1x128xf32> -> vector<1x128xf32>
    %c0_262 = arith.constant 0 : index
    %c0_263 = arith.constant 0 : index
    %629 = vector.load %arg13[%c0_262, %c0_263] : memref<1x128xf32, #tpu.memory_space<vmem>>, vector<1x128xf32>
    %630 = arith.addf %628, %629 : vector<1x128xf32>
    %c0_264 = arith.constant 0 : index
    %c0_265 = arith.constant 0 : index
    %c0_266 = arith.constant 0 : index
    %631 = vector.load %arg14[%c0_264, %c0_265, %c0_266] : memref<1x1x128xf32, #tpu.memory_space<vmem>>, vector<1x1x128xf32>
    %632 = vector.shape_cast %631 : vector<1x1x128xf32> to vector<1x128xf32>
    %633 = vector.shape_cast %630 : vector<1x128xf32> to vector<1x1x128xf32>
    tpu.vector_store %arg14[%c0_264, %c0_265, %c0_266], %633 {strides = array<i32>} : memref<1x1x128xf32, #tpu.memory_space<vmem>>, vector<1x1x128xf32>,
    return
  }
  func.func @transform_0(%arg0: i32) -> (i32, i32, i32) {
    %c0_i32 = arith.constant 0 : i32
    %c0_i32_0 = arith.constant 0 : i32
    %c0_i32_1 = arith.constant 0 : i32
    return %arg0, %c0_i32, %c0_i32_0 : i32, i32, i32
  }
  func.func @transform_1(%arg0: i32) -> (i32, i32, i32) {
    %c0_i32 = arith.constant 0 : i32
    %c0_i32_0 = arith.constant 0 : i32
    %c0_i32_1 = arith.constant 0 : i32
    return %arg0, %c0_i32, %c0_i32_0 : i32, i32, i32
  }
  func.func @transform_2(%arg0: i32) -> (i32, i32, i32) {
    %c0_i32 = arith.constant 0 : i32
    %c0_i32_0 = arith.constant 0 : i32
    %c0_i32_1 = arith.constant 0 : i32
    return %arg0, %c0_i32, %c0_i32_0 : i32, i32, i32
  }
  func.func @transform_3(%arg0: i32) -> (i32, i32) {
    %c0_i32 = arith.constant 0 : i32
    %c0_i32_0 = arith.constant 0 : i32
    %c0_i32_1 = arith.constant 0 : i32
    return %c0_i32, %c0_i32_0 : i32, i32
  }
  func.func @transform_4(%arg0: i32) -> (i32, i32) {
    %c0_i32 = arith.constant 0 : i32
    %c0_i32_0 = arith.constant 0 : i32
    %c0_i32_1 = arith.constant 0 : i32
    return %c0_i32, %c0_i32_0 : i32, i32
  }
  func.func @transform_5(%arg0: i32) -> (i32, i32) {
    %c0_i32 = arith.constant 0 : i32
    %c0_i32_0 = arith.constant 0 : i32
    %c0_i32_1 = arith.constant 0 : i32
    return %c0_i32, %c0_i32_0 : i32, i32
  }
  func.func @transform_6(%arg0: i32) -> (i32, i32) {
    %c0_i32 = arith.constant 0 : i32
    %c0_i32_0 = arith.constant 0 : i32
    %c0_i32_1 = arith.constant 0 : i32
    return %c0_i32, %c0_i32_0 : i32, i32
  }
  func.func @transform_7(%arg0: i32) -> (i32, i32) {
    %c0_i32 = arith.constant 0 : i32
    %c0_i32_0 = arith.constant 0 : i32
    %c0_i32_1 = arith.constant 0 : i32
    return %c0_i32, %c0_i32_0 : i32, i32
  }
  func.func @transform_8(%arg0: i32) -> (i32, i32) {
    %c0_i32 = arith.constant 0 : i32
    %c0_i32_0 = arith.constant 0 : i32
    %c0_i32_1 = arith.constant 0 : i32
    return %c0_i32, %c0_i32_0 : i32, i32
  }
  func.func @transform_9(%arg0: i32) -> (i32, i32) {
    %c0_i32 = arith.constant 0 : i32
    %c0_i32_0 = arith.constant 0 : i32
    %c0_i32_1 = arith.constant 0 : i32
    return %c0_i32, %c0_i32_0 : i32, i32
  }
  func.func @transform_10(%arg0: i32) -> (i32, i32) {
    %c0_i32 = arith.constant 0 : i32
    %c0_i32_0 = arith.constant 0 : i32
    %c0_i32_1 = arith.constant 0 : i32
    return %c0_i32, %c0_i32_0 : i32, i32
  }
  func.func @transform_11(%arg0: i32) -> (i32, i32) {
    %c0_i32 = arith.constant 0 : i32
    %c0_i32_0 = arith.constant 0 : i32
    %c0_i32_1 = arith.constant 0 : i32
    return %c0_i32, %c0_i32_0 : i32, i32
  }
  func.func @transform_12(%arg0: i32) -> (i32, i32) {
    %c0_i32 = arith.constant 0 : i32
    %c0_i32_0 = arith.constant 0 : i32
    %c0_i32_1 = arith.constant 0 : i32
    return %c0_i32, %c0_i32_0 : i32, i32
  }
  func.func @transform_13(%arg0: i32) -> (i32, i32, i32) {
    %c0_i32 = arith.constant 0 : i32
    %c0_i32_0 = arith.constant 0 : i32
    %c0_i32_1 = arith.constant 0 : i32
    return %arg0, %c0_i32, %c0_i32_0 : i32, i32, i32
  }
  func.func @transform_14(%arg0: i32) -> (i32, i32, i32) {
    %c0_i32 = arith.constant 0 : i32
    %c0_i32_0 = arith.constant 0 : i32
    %c0_i32_1 = arith.constant 0 : i32
    return %arg0, %c0_i32, %c0_i32_0 : i32, i32, i32
  }
  func.func @transform_15(%arg0: i32) -> (i32, i32, i32) {
    %c0_i32 = arith.constant 0 : i32
    %c0_i32_0 = arith.constant 0 : i32
    %c0_i32_1 = arith.constant 0 : i32
    return %arg0, %c0_i32, %c0_i32_0 : i32, i32, i32
  }
}

</mosaic_0001>

<llo_original>
// kernel: tpu_custom_call.1
$region0: #{tpu_custom_call.1}
  #allocation0 [shape = 'u32[]', space=smem, size = 0x4, offset = 0x4, fixed_abs, tag = 'smem constant byte address 0x4 - core index']
  #allocation1 [shape = 'u32[72,128]{1,0:T(1,128)}', space=vmem, size = 0x9000, scoped, tag = 'internal scratch']
  #allocation2 [shape = 'f32[8,128]{1,0:T(8,128)}', space=vmem, size = 0x1000, scoped, tag = 'scratch operand']
  #allocation3 [shape = 'f32[8,32]{1,0:T(8,128)}', space=vmem, size = 0x1000, scoped, tag = 'scratch operand']
  %s0 = inlined_call_operand.vmem [shape: f32[2,8,5], index: 0, kind: input, shape index: {}]
  %s1 = inlined_call_operand.vmem [shape: f32[2,2,32], index: 1, kind: input, shape index: {}]
  %s2 = inlined_call_operand.hbm [shape: f32[2,2,32], index: 2, kind: input, shape index: {}]
  %s3 = inlined_call_operand.vmem [shape: f32[5,128], index: 3, kind: input, shape index: {}]
  %s4 = inlined_call_operand.vmem [shape: f32[32,128], index: 4, kind: input, shape index: {}]
  %s5 = inlined_call_operand.vmem [shape: f32[1,128], index: 5, kind: input, shape index: {}]
  %s6 = inlined_call_operand.hbm [shape: f32[32,128], index: 6, kind: input, shape index: {}]
  %s7 = inlined_call_operand.hbm [shape: f32[32,128], index: 7, kind: input, shape index: {}]
  %s8 = inlined_call_operand.vmem [shape: f32[1,128], index: 8, kind: input, shape index: {}]
  %s9 = inlined_call_operand.vmem [shape: f32[32,16], index: 9, kind: input, shape index: {}]
  %s10 = inlined_call_operand.vmem [shape: f32[1,16], index: 10, kind: input, shape index: {}]
  %s11 = inlined_call_operand.vmem [shape: f32[16,128], index: 11, kind: input, shape index: {}]
  %s12 = inlined_call_operand.vmem [shape: f32[1,128], index: 12, kind: input, shape index: {}]
  %s13 = inlined_call_operand.hbm [shape: f32[2,1,128], index: 13, kind: output, shape index: {0}]
  %s14 = inlined_call_operand.hbm [shape: f32[2,2,32], index: 14, kind: output, shape index: {1}]
  %s15 = inlined_call_operand.hbm [shape: f32[2,2,32], index: 15, kind: output, shape index: {2}]
  %16 = xla_tuple %s13, %s14, %s15
  %s17 = sld [smem:[#allocation0]]
  $region113: #{tpu_custom_call.1} parent=0
    _
  %s19 = ssub.s32 1, %s17
  %s20 = scalar_select 0, %s19, %s17
  $region1: #{tpu_custom_call.1} parent=0
    #allocation4 [shape = 'u8[2048]{0}', space=vmem, size = 0x800, scoped, tag = 'input window, operand 2']
    #allocation5 [shape = 's32[2]{0}', space=sflag, size = 0x8, scoped, tag = 'scoped memory for tpu_custom_call.1']
    #allocation6 [shape = 's32[2]{0}', space=sflag, size = 0x8, scoped, tag = 'scoped memory for tpu_custom_call.1']
    #allocation7 [shape = 'u8[16384]{0}', space=vmem, size = 0x4000, scoped, tag = 'input window, operand 6, single buffered']
    #allocation8 [shape = 's32[1]{0}', space=sflag, size = 0x4, scoped, tag = 'scoped memory for tpu_custom_call.1']
    #allocation9 [shape = 'u8[16384]{0}', space=vmem, size = 0x4000, scoped, tag = 'input window, operand 7, single buffered']
    #allocation10 [shape = 'u8[1024]{0}', space=vmem, size = 0x400, scoped, tag = 'output window, operand 0']
    #allocation11 [shape = 'u8[2048]{0}', space=vmem, size = 0x800, scoped, tag = 'output window, operand 1']
    #allocation12 [shape = 's32[2]{0}', space=sflag, size = 0x8, scoped, tag = 'scoped memory for tpu_custom_call.1']
    #allocation13 [shape = 'u8[2048]{0}', space=vmem, size = 0x800, scoped, tag = 'output window, operand 2']
    %21 = vsyncpa [#allocation5], 0
    %s22 = scalar_lea.sflag [#allocation5], 1
    %23 = vsyncpa %s22, 0
    %24 = vsyncpa [#allocation8], 0
    %25 = vsyncpa [#allocation6], 0
    %s26 = scalar_lea.sflag [#allocation6], 1
    %27 = vsyncpa %s26, 0
    %28 = vsyncpa [#allocation12], 0
    %s29 = scalar_lea.sflag [#allocation12], 1
    %30 = vsyncpa %s29, 0
    loop: start=0, step=1, limit=4
    $region2: #{tpu_custom_call.1} parent=1 // loop_pre_header
      _
    $region3: #{tpu_custom_call.1} parent=1 // loop_header
      %s32 = sphi 0, %s36
      %p33 = scmp.ge.s32.totalorder %s32, 4
      %s42 = sphi 0, %s44
      %s45 = sphi 0, %s42
      %s46 = sphi 0, %s45
      %s62 = sphi 0, %s46
      %s68 = sphi 0, %s70
      %s71 = sphi 0, %s68
      %s72 = sphi 0, %s71
      %s88 = sphi 0, %s72
      %s94 = sphi 0, %s96
      %s97 = sphi 0, %s94
      %s98 = sphi 0, %s97
      %s114 = sphi 0, %s98
      %s118 = sphi 0, %s118
      %s120 = sphi 0, %s118
      %s121 = sphi 0, %s120
      %s135 = sphi 0, %s121
      %s139 = sphi 0, %s139
      %s141 = sphi 0, %s139
      %s142 = sphi 0, %s141
      %s156 = sphi 0, %s142
      %s160 = sphi 0, %s160
      %s162 = sphi 0, %s160
      %s163 = sphi 0, %s162
      %s177 = sphi 0, %s163
      %s181 = sphi 0, %s181
      %s183 = sphi 0, %s181
      %s184 = sphi 0, %s183
      %s198 = sphi 0, %s184
      %s202 = sphi 0, %s202
      %s204 = sphi 0, %s202
      %s205 = sphi 0, %s204
      %s219 = sphi 0, %s205
      %s223 = sphi 0, %s223
      %s225 = sphi 0, %s223
      %s226 = sphi 0, %s225
      %s240 = sphi 0, %s226
      %s244 = sphi 0, %s244
      %s246 = sphi 0, %s244
      %s247 = sphi 0, %s246
      %s261 = sphi 0, %s247
      %s265 = sphi 0, %s265
      %s267 = sphi 0, %s265
      %s268 = sphi 0, %s267
      %s282 = sphi 0, %s268
      %s286 = sphi 0, %s286
      %s288 = sphi 0, %s286
      %s289 = sphi 0, %s288
      %s303 = sphi 0, %s289
      %s307 = sphi 0, %s307
      %s309 = sphi 0, %s307
      %s310 = sphi 0, %s309
      %s324 = sphi 0, %s310
      %s330 = sphi 0, %s332
      %s333 = sphi 0, %s330
      %s334 = sphi 0, %s333
      %s350 = sphi 0, %s334
      %s356 = sphi 0, %s358
      %s359 = sphi 0, %s356
      %s360 = sphi 0, %s359
      %s376 = sphi 0, %s360
      %s382 = sphi 0, %s384
      %s385 = sphi 0, %s382
      %s386 = sphi 0, %s385
      %s402 = sphi 0, %s386
    $region4: #{tpu_custom_call.1} parent=1 // loop_header_branch
      %35 = sbr.rel (%p33) target = $region8
    $region5: #{tpu_custom_call.1} parent=1 // loop_body
      %s37 = ssub.s32 %s32, 1
      %s38 = ssub.s32 %s32, 2
      %s39 = sadd.s32 %s32, 1
      %s40 = ssub.s32 %s32, %s39
      %p41 = scmp.eq.s32.totalorder %s40, 0
      %s43 = sadd.s32 %s42, 1
      %s44 = scalar_select %p41, %s42, %s43
      %p47 = pneg %p41
      %p48 = scmp.eq.s32.totalorder %s32, 1
      %p49 = por %p47, %p48
      %p50 = scmp.ne.s32.totalorder %s42, %s45
      %p51 = scmp.eq.s32.totalorder %s32, 0
      %p52 = por %p50, %p51
      %p53 = scmp.ne.s32.totalorder %s42, %s45
      %p54 = scmp.eq.s32.totalorder %s37, 1
      %p55 = por %p53, %p54
      %p56 = scmp.ne.s32.totalorder %s45, %s46
      %p57 = scmp.eq.s32.totalorder %s37, 0
      %p58 = por %p56, %p57
      %p59 = scmp.ne.s32.totalorder %s45, %s46
      %p60 = scmp.eq.s32.totalorder %s38, 1
      %p61 = por %p59, %p60
      %p63 = scmp.ne.s32.totalorder %s46, %s62
      %p64 = scmp.eq.s32.totalorder %s38, 0
      %p65 = por %p63, %p64
      %s66 = ssub.s32 %s32, %s39
      %p67 = scmp.eq.s32.totalorder %s66, 0
      %s69 = sadd.s32 %s68, 1
      %s70 = scalar_select %p67, %s68, %s69
      %p73 = pneg %p67
      %p74 = scmp.eq.s32.totalorder %s32, 1
      %p75 = por %p73, %p74
      %p76 = scmp.ne.s32.totalorder %s68, %s71
      %p77 = scmp.eq.s32.totalorder %s32, 0
      %p78 = por %p76, %p77
      %p79 = scmp.ne.s32.totalorder %s68, %s71
      %p80 = scmp.eq.s32.totalorder %s37, 1
      %p81 = por %p79, %p80
      %p82 = scmp.ne.s32.totalorder %s71, %s72
      %p83 = scmp.eq.s32.totalorder %s37, 0
      %p84 = por %p82, %p83
      %p85 = scmp.ne.s32.totalorder %s71, %s72
      %p86 = scmp.eq.s32.totalorder %s38, 1
      %p87 = por %p85, %p86
      %p89 = scmp.ne.s32.totalorder %s72, %s88
      %p90 = scmp.eq.s32.totalorder %s38, 0
      %p91 = por %p89, %p90
      %s92 = ssub.s32 %s32, %s39
      %p93 = scmp.eq.s32.totalorder %s92, 0
      %s95 = sadd.s32 %s94, 1
      %s96 = scalar_select %p93, %s94, %s95
      %p99 = pneg %p93
      %p100 = scmp.eq.s32.totalorder %s32, 1
      %p101 = por %p99, %p100
      %p102 = scmp.ne.s32.totalorder %s94, %s97
      %p103 = scmp.eq.s32.totalorder %s32, 0
      %p104 = por %p102, %p103
      %p105 = scmp.ne.s32.totalorder %s94, %s97
      %p106 = scmp.eq.s32.totalorder %s37, 1
      %p107 = por %p105, %p106
      %p108 = scmp.ne.s32.totalorder %s97, %s98
      %p109 = scmp.eq.s32.totalorder %s37, 0
      %p110 = por %p108, %p109
      %p111 = scmp.ne.s32.totalorder %s97, %s98
      %p112 = scmp.eq.s32.totalorder %s38, 1
      %p113 = por %p111, %p112
      %p115 = scmp.ne.s32.totalorder %s98, %s114
      %p116 = scmp.eq.s32.totalorder %s38, 0
      %p117 = por %p115, %p116
      %s119 = sadd.s32 %s118, 1
      %p122 = scmp.eq.s32.totalorder %s32, 1
      %p123 = scmp.ne.s32.totalorder %s118, %s120
      %p124 = scmp.eq.s32.totalorder %s32, 0
      %p125 = por %p123, %p124
      %p126 = scmp.ne.s32.totalorder %s118, %s120
      %p127 = scmp.eq.s32.totalorder %s37, 1
      %p128 = por %p126, %p127
      %p129 = scmp.ne.s32.totalorder %s120, %s121
      %p130 = scmp.eq.s32.totalorder %s37, 0
      %p131 = por %p129, %p130
      %p132 = scmp.ne.s32.totalorder %s120, %s121
      %p133 = scmp.eq.s32.totalorder %s38, 1
      %p134 = por %p132, %p133
      %p136 = scmp.ne.s32.totalorder %s121, %s135
      %p137 = scmp.eq.s32.totalorder %s38, 0
      %p138 = por %p136, %p137
      %s140 = sadd.s32 %s139, 1
      %p143 = scmp.eq.s32.totalorder %s32, 1
      %p144 = scmp.ne.s32.totalorder %s139, %s141
      %p145 = scmp.eq.s32.totalorder %s32, 0
      %p146 = por %p144, %p145
      %p147 = scmp.ne.s32.totalorder %s139, %s141
      %p148 = scmp.eq.s32.totalorder %s37, 1
      %p149 = por %p147, %p148
      %p150 = scmp.ne.s32.totalorder %s141, %s142
      %p151 = scmp.eq.s32.totalorder %s37, 0
      %p152 = por %p150, %p151
      %p153 = scmp.ne.s32.totalorder %s141, %s142
      %p154 = scmp.eq.s32.totalorder %s38, 1
      %p155 = por %p153, %p154
      %p157 = scmp.ne.s32.totalorder %s142, %s156
      %p158 = scmp.eq.s32.totalorder %s38, 0
      %p159 = por %p157, %p158
      %s161 = sadd.s32 %s160, 1
      %p164 = scmp.eq.s32.totalorder %s32, 1
      %p165 = scmp.ne.s32.totalorder %s160, %s162
      %p166 = scmp.eq.s32.totalorder %s32, 0
      %p167 = por %p165, %p166
      %p168 = scmp.ne.s32.totalorder %s160, %s162
      %p169 = scmp.eq.s32.totalorder %s37, 1
      %p170 = por %p168, %p169
      %p171 = scmp.ne.s32.totalorder %s162, %s163
      %p172 = scmp.eq.s32.totalorder %s37, 0
      %p173 = por %p171, %p172
      %p174 = scmp.ne.s32.totalorder %s162, %s163
      %p175 = scmp.eq.s32.totalorder %s38, 1
      %p176 = por %p174, %p175
      %p178 = scmp.ne.s32.totalorder %s163, %s177
      %p179 = scmp.eq.s32.totalorder %s38, 0
      %p180 = por %p178, %p179
      %s182 = sadd.s32 %s181, 1
      %p185 = scmp.eq.s32.totalorder %s32, 1
      %p186 = scmp.ne.s32.totalorder %s181, %s183
      %p187 = scmp.eq.s32.totalorder %s32, 0
      %p188 = por %p186, %p187
      %p189 = scmp.ne.s32.totalorder %s181, %s183
      %p190 = scmp.eq.s32.totalorder %s37, 1
      %p191 = por %p189, %p190
      %p192 = scmp.ne.s32.totalorder %s183, %s184
      %p193 = scmp.eq.s32.totalorder %s37, 0
      %p194 = por %p192, %p193
      %p195 = scmp.ne.s32.totalorder %s183, %s184
      %p196 = scmp.eq.s32.totalorder %s38, 1
      %p197 = por %p195, %p196
      %p199 = scmp.ne.s32.totalorder %s184, %s198
      %p200 = scmp.eq.s32.totalorder %s38, 0
      %p201 = por %p199, %p200
      %s203 = sadd.s32 %s202, 1
      %p206 = scmp.eq.s32.totalorder %s32, 1
      %p207 = scmp.ne.s32.totalorder %s202, %s204
      %p208 = scmp.eq.s32.totalorder %s32, 0
      %p209 = por %p207, %p208
      %p210 = scmp.ne.s32.totalorder %s202, %s204
      %p211 = scmp.eq.s32.totalorder %s37, 1
      %p212 = por %p210, %p211
      %p213 = scmp.ne.s32.totalorder %s204, %s205
      %p214 = scmp.eq.s32.totalorder %s37, 0
      %p215 = por %p213, %p214
      %p216 = scmp.ne.s32.totalorder %s204, %s205
      %p217 = scmp.eq.s32.totalorder %s38, 1
      %p218 = por %p216, %p217
      %p220 = scmp.ne.s32.totalorder %s205, %s219
      %p221 = scmp.eq.s32.totalorder %s38, 0
      %p222 = por %p220, %p221
      %s224 = sadd.s32 %s223, 1
      %p227 = scmp.eq.s32.totalorder %s32, 1
      %p228 = scmp.ne.s32.totalorder %s223, %s225
      %p229 = scmp.eq.s32.totalorder %s32, 0
      %p230 = por %p228, %p229
      %p231 = scmp.ne.s32.totalorder %s223, %s225
      %p232 = scmp.eq.s32.totalorder %s37, 1
      %p233 = por %p231, %p232
      %p234 = scmp.ne.s32.totalorder %s225, %s226
      %p235 = scmp.eq.s32.totalorder %s37, 0
      %p236 = por %p234, %p235
      %p237 = scmp.ne.s32.totalorder %s225, %s226
      %p238 = scmp.eq.s32.totalorder %s38, 1
      %p239 = por %p237, %p238
      %p241 = scmp.ne.s32.totalorder %s226, %s240
      %p242 = scmp.eq.s32.totalorder %s38, 0
      %p243 = por %p241, %p242
      %s245 = sadd.s32 %s244, 1
      %p248 = scmp.eq.s32.totalorder %s32, 1
      %p249 = scmp.ne.s32.totalorder %s244, %s246
      %p250 = scmp.eq.s32.totalorder %s32, 0
      %p251 = por %p249, %p250
      %p252 = scmp.ne.s32.totalorder %s244, %s246
      %p253 = scmp.eq.s32.totalorder %s37, 1
      %p254 = por %p252, %p253
      %p255 = scmp.ne.s32.totalorder %s246, %s247
      %p256 = scmp.eq.s32.totalorder %s37, 0
      %p257 = por %p255, %p256
      %p258 = scmp.ne.s32.totalorder %s246, %s247
      %p259 = scmp.eq.s32.totalorder %s38, 1
      %p260 = por %p258, %p259
      %p262 = scmp.ne.s32.totalorder %s247, %s261
      %p263 = scmp.eq.s32.totalorder %s38, 0
      %p264 = por %p262, %p263
      %s266 = sadd.s32 %s265, 1
      %p269 = scmp.eq.s32.totalorder %s32, 1
      %p270 = scmp.ne.s32.totalorder %s265, %s267
      %p271 = scmp.eq.s32.totalorder %s32, 0
      %p272 = por %p270, %p271
      %p273 = scmp.ne.s32.totalorder %s265, %s267
      %p274 = scmp.eq.s32.totalorder %s37, 1
      %p275 = por %p273, %p274
      %p276 = scmp.ne.s32.totalorder %s267, %s268
      %p277 = scmp.eq.s32.totalorder %s37, 0
      %p278 = por %p276, %p277
      %p279 = scmp.ne.s32.totalorder %s267, %s268
      %p280 = scmp.eq.s32.totalorder %s38, 1
      %p281 = por %p279, %p280
      %p283 = scmp.ne.s32.totalorder %s268, %s282
      %p284 = scmp.eq.s32.totalorder %s38, 0
      %p285 = por %p283, %p284
      %s287 = sadd.s32 %s286, 1
      %p290 = scmp.eq.s32.totalorder %s32, 1
      %p291 = scmp.ne.s32.totalorder %s286, %s288
      %p292 = scmp.eq.s32.totalorder %s32, 0
      %p293 = por %p291, %p292
      %p294 = scmp.ne.s32.totalorder %s286, %s288
      %p295 = scmp.eq.s32.totalorder %s37, 1
      %p296 = por %p294, %p295
      %p297 = scmp.ne.s32.totalorder %s288, %s289
      %p298 = scmp.eq.s32.totalorder %s37, 0
      %p299 = por %p297, %p298
      %p300 = scmp.ne.s32.totalorder %s288, %s289
      %p301 = scmp.eq.s32.totalorder %s38, 1
      %p302 = por %p300, %p301
      %p304 = scmp.ne.s32.totalorder %s289, %s303
      %p305 = scmp.eq.s32.totalorder %s38, 0
      %p306 = por %p304, %p305
      %s308 = sadd.s32 %s307, 1
      %p311 = scmp.eq.s32.totalorder %s32, 1
      %p312 = scmp.ne.s32.totalorder %s307, %s309
      %p313 = scmp.eq.s32.totalorder %s32, 0
      %p314 = por %p312, %p313
      %p315 = scmp.ne.s32.totalorder %s307, %s309
      %p316 = scmp.eq.s32.totalorder %s37, 1
      %p317 = por %p315, %p316
      %p318 = scmp.ne.s32.totalorder %s309, %s310
      %p319 = scmp.eq.s32.totalorder %s37, 0
      %p320 = por %p318, %p319
      %p321 = scmp.ne.s32.totalorder %s309, %s310
      %p322 = scmp.eq.s32.totalorder %s38, 1
      %p323 = por %p321, %p322
      %p325 = scmp.ne.s32.totalorder %s310, %s324
      %p326 = scmp.eq.s32.totalorder %s38, 0
      %p327 = por %p325, %p326
      %s328 = ssub.s32 %s32, %s39
      %p329 = scmp.eq.s32.totalorder %s328, 0
      %s331 = sadd.s32 %s330, 1
      %s332 = scalar_select %p329, %s330, %s331
      %p335 = pneg %p329
      %p336 = scmp.eq.s32.totalorder %s32, 1
      %p337 = por %p335, %p336
      %p338 = scmp.ne.s32.totalorder %s330, %s333
      %p339 = scmp.eq.s32.totalorder %s32, 0
      %p340 = por %p338, %p339
      %p341 = scmp.ne.s32.totalorder %s330, %s333
      %p342 = scmp.eq.s32.totalorder %s37, 1
      %p343 = por %p341, %p342
      %p344 = scmp.ne.s32.totalorder %s333, %s334
      %p345 = scmp.eq.s32.totalorder %s37, 0
      %p346 = por %p344, %p345
      %p347 = scmp.ne.s32.totalorder %s333, %s334
      %p348 = scmp.eq.s32.totalorder %s38, 1
      %p349 = por %p347, %p348
      %p351 = scmp.ne.s32.totalorder %s334, %s350
      %p352 = scmp.eq.s32.totalorder %s38, 0
      %p353 = por %p351, %p352
      %s354 = ssub.s32 %s32, %s39
      %p355 = scmp.eq.s32.totalorder %s354, 0
      %s357 = sadd.s32 %s356, 1
      %s358 = scalar_select %p355, %s356, %s357
      %p361 = pneg %p355
      %p362 = scmp.eq.s32.totalorder %s32, 1
      %p363 = por %p361, %p362
      %p364 = scmp.ne.s32.totalorder %s356, %s359
      %p365 = scmp.eq.s32.totalorder %s32, 0
      %p366 = por %p364, %p365
      %p367 = scmp.ne.s32.totalorder %s356, %s359
      %p368 = scmp.eq.s32.totalorder %s37, 1
      %p369 = por %p367, %p368
      %p370 = scmp.ne.s32.totalorder %s359, %s360
      %p371 = scmp.eq.s32.totalorder %s37, 0
      %p372 = por %p370, %p371
      %p373 = scmp.ne.s32.totalorder %s359, %s360
      %p374 = scmp.eq.s32.totalorder %s38, 1
      %p375 = por %p373, %p374
      %p377 = scmp.ne.s32.totalorder %s360, %s376
      %p378 = scmp.eq.s32.totalorder %s38, 0
      %p379 = por %p377, %p378
      %s380 = ssub.s32 %s32, %s39
      %p381 = scmp.eq.s32.totalorder %s380, 0
      %s383 = sadd.s32 %s382, 1
      %s384 = scalar_select %p381, %s382, %s383
      %p387 = pneg %p381
      %p388 = scmp.eq.s32.totalorder %s32, 1
      %p389 = por %p387, %p388
      %p390 = scmp.ne.s32.totalorder %s382, %s385
      %p391 = scmp.eq.s32.totalorder %s32, 0
      %p392 = por %p390, %p391
      %p393 = scmp.ne.s32.totalorder %s382, %s385
      %p394 = scmp.eq.s32.totalorder %s37, 1
      %p395 = por %p393, %p394
      %p396 = scmp.ne.s32.totalorder %s385, %s386
      %p397 = scmp.eq.s32.totalorder %s37, 0
      %p398 = por %p396, %p397
      %p399 = scmp.ne.s32.totalorder %s385, %s386
      %p400 = scmp.eq.s32.totalorder %s38, 1
      %p401 = por %p399, %p400
      %p403 = scmp.ne.s32.totalorder %s386, %s402
      %p404 = scmp.eq.s32.totalorder %s38, 0
      %p405 = por %p403, %p404
      %p406 = scmp.le.s32.totalorder 1, %s32
      %p407 = scmp.lt.s32.totalorder %s32, 3
      %p408 = pnand %p406, %p407
      %p409 = pneg %p408
      // Predicated region
      $region9: #{tpu_custom_call.1} parent=5 // pred_check
        _
      $region10: #{tpu_custom_call.1} parent=5 // pred_check_branch
        %411 = sbr.rel (%p408) target = $region12
      $region11: #{tpu_custom_call.1} parent=5 // pred_region
        %s412 = ssub.s32 %s32, 1
        // Predicated region
        $region13: #{tpu_custom_call.1} parent=11 // pred_check
          %p413 = pneg %p131
        $region14: #{tpu_custom_call.1} parent=11 // pred_check_branch
          %415 = sbr.rel (%p413) target = $region16
        $region15: #{tpu_custom_call.1} parent=11 // pred_region
          _
        $region16: #{tpu_custom_call.1} parent=11 // pred_fallthru
          _
        // Predicated region
        $region17: #{tpu_custom_call.1} parent=11 // pred_check
          %p416 = pneg %p152
        $region18: #{tpu_custom_call.1} parent=11 // pred_check_branch
          %418 = sbr.rel (%p416) target = $region20
        $region19: #{tpu_custom_call.1} parent=11 // pred_region
          _
        $region20: #{tpu_custom_call.1} parent=11 // pred_fallthru
          _
        // Predicated region
        $region21: #{tpu_custom_call.1} parent=11 // pred_check
          %p419 = pneg %p173
        $region22: #{tpu_custom_call.1} parent=11 // pred_check_branch
          %421 = sbr.rel (%p419) target = $region24
        $region23: #{tpu_custom_call.1} parent=11 // pred_region
          _
        $region24: #{tpu_custom_call.1} parent=11 // pred_fallthru
          _
        // Predicated region
        $region25: #{tpu_custom_call.1} parent=11 // pred_check
          %p422 = pneg %p194
        $region26: #{tpu_custom_call.1} parent=11 // pred_check_branch
          %424 = sbr.rel (%p422) target = $region28
        $region27: #{tpu_custom_call.1} parent=11 // pred_region
          %426 = vsyncadd [#allocation8], 0
          %s427 = sshll.u32 %s6, 4
          %s428 = int_to_ptr.hbm [resolvable:$true] %s427
          %s429 = sshll.u32 [#allocation7], 4
          %s430 = int_to_ptr.vmem [resolvable:$true] %s429
          %435 = dma.hbm_to_vmem [thread:$0]  %s428, 512, %s430, [#allocation8], 128, 128, 8
        $region28: #{tpu_custom_call.1} parent=11 // pred_fallthru
          _
        // Predicated region
        $region29: #{tpu_custom_call.1} parent=11 // pred_check
          %p436 = pneg %p215
        $region30: #{tpu_custom_call.1} parent=11 // pred_check_branch
          %438 = sbr.rel (%p436) target = $region32
        $region31: #{tpu_custom_call.1} parent=11 // pred_region
          %440 = vsyncadd [#allocation8], 0
          %s441 = sshll.u32 %s7, 4
          %s442 = int_to_ptr.hbm [resolvable:$true] %s441
          %s443 = sshll.u32 [#allocation9], 4
          %s444 = int_to_ptr.vmem [resolvable:$true] %s443
          %449 = dma.hbm_to_vmem [thread:$0]  %s442, 512, %s444, [#allocation8], 128, 128, 8
        $region32: #{tpu_custom_call.1} parent=11 // pred_fallthru
          _
        // Predicated region
        $region33: #{tpu_custom_call.1} parent=11 // pred_check
          %p450 = pneg %p236
        $region34: #{tpu_custom_call.1} parent=11 // pred_check_branch
          %452 = sbr.rel (%p450) target = $region36
        $region35: #{tpu_custom_call.1} parent=11 // pred_region
          _
        $region36: #{tpu_custom_call.1} parent=11 // pred_fallthru
          _
        // Predicated region
        $region37: #{tpu_custom_call.1} parent=11 // pred_check
          %p453 = pneg %p257
        $region38: #{tpu_custom_call.1} parent=11 // pred_check_branch
          %455 = sbr.rel (%p453) target = $region40
        $region39: #{tpu_custom_call.1} parent=11 // pred_region
          _
        $region40: #{tpu_custom_call.1} parent=11 // pred_fallthru
          _
        // Predicated region
        $region41: #{tpu_custom_call.1} parent=11 // pred_check
          %p456 = pneg %p278
        $region42: #{tpu_custom_call.1} parent=11 // pred_check_branch
          %458 = sbr.rel (%p456) target = $region44
        $region43: #{tpu_custom_call.1} parent=11 // pred_region
          _
        $region44: #{tpu_custom_call.1} parent=11 // pred_fallthru
          _
        // Predicated region
        $region45: #{tpu_custom_call.1} parent=11 // pred_check
          %p459 = pneg %p299
        $region46: #{tpu_custom_call.1} parent=11 // pred_check_branch
          %461 = sbr.rel (%p459) target = $region48
        $region47: #{tpu_custom_call.1} parent=11 // pred_region
          _
        $region48: #{tpu_custom_call.1} parent=11 // pred_fallthru
          _
        // Predicated region
        $region49: #{tpu_custom_call.1} parent=11 // pred_check
          %p462 = pneg %p320
        $region50: #{tpu_custom_call.1} parent=11 // pred_check_branch
          %464 = sbr.rel (%p462) target = $region52
        $region51: #{tpu_custom_call.1} parent=11 // pred_region
          _
        $region52: #{tpu_custom_call.1} parent=11 // pred_fallthru
          _
      $region12: #{tpu_custom_call.1} parent=5 // pred_fallthru
        _
      %p465 = scmp.lt.s32.totalorder %s32, 2
      // Predicated region
      $region53: #{tpu_custom_call.1} parent=5 // pred_check
        %p466 = pneg %p465
      $region54: #{tpu_custom_call.1} parent=5 // pred_check_branch
        %468 = sbr.rel (%p466) target = $region56
      $region55: #{tpu_custom_call.1} parent=5 // pred_region
        // Predicated region
        $region57: #{tpu_custom_call.1} parent=55 // pred_check
          %p469 = pneg %p52
        $region58: #{tpu_custom_call.1} parent=55 // pred_check_branch
          %471 = sbr.rel (%p469) target = $region60
        $region59: #{tpu_custom_call.1} parent=55 // pred_region
          %p472 = scmp.lt.s32.totalorder %s32, 1
          %s473 = scalar_select %p472, %s32, 1
          %s474 = smul.addr %s473, 8
          %s475 = scalar_lea.vmem %s0, %s474
        $region60: #{tpu_custom_call.1} parent=55 // pred_fallthru
          _
        // Predicated region
        $region61: #{tpu_custom_call.1} parent=55 // pred_check
          %p476 = pneg %p78
        $region62: #{tpu_custom_call.1} parent=55 // pred_check_branch
          %478 = sbr.rel (%p476) target = $region64
        $region63: #{tpu_custom_call.1} parent=55 // pred_region
          %p479 = scmp.lt.s32.totalorder %s32, 1
          %s480 = scalar_select %p479, %s32, 1
          %s481 = smul.addr %s480, 2
          %s482 = scalar_lea.vmem %s1, %s481
        $region64: #{tpu_custom_call.1} parent=55 // pred_fallthru
          _
        // Predicated region
        $region65: #{tpu_custom_call.1} parent=55 // pred_check
          %p483 = pneg %p104
        $region66: #{tpu_custom_call.1} parent=55 // pred_check_branch
          %485 = sbr.rel (%p483) target = $region68
        $region67: #{tpu_custom_call.1} parent=55 // pred_region
          %s486 = sand.u32 %s94, 1
          %s487 = scalar_lea.sflag [#allocation5], %s486
          %s488 = sand.u32 %s94, 1
          %s489 = smul.addr %s488, 2
          %s490 = scalar_lea.vmem [#allocation4], %s489
          %492 = vsyncadd %s487, 0
          %s493 = smul.addr %s32, 2
          %s494 = scalar_lea.hbm %s2, %s493
          %s496 = sshll.u32 %s494, 4
          %s497 = int_to_ptr.hbm [resolvable:$true] %s496
          %s498 = sshll.u32 %s490, 4
          %s499 = int_to_ptr.vmem [resolvable:$true] %s498
          %501 = dma.hbm_to_vmem [thread:$0]  %s497, 32, %s499, %s487
        $region68: #{tpu_custom_call.1} parent=55 // pred_fallthru
          _
      $region56: #{tpu_custom_call.1} parent=5 // pred_fallthru
        _
      %p502 = scmp.le.s32.totalorder 1, %s32
      %p503 = scmp.lt.s32.totalorder %s32, 3
      %p504 = pnand %p502, %p503
      %p505 = pneg %p504
      // Predicated region
      $region69: #{tpu_custom_call.1} parent=5 // pred_check
        _
      $region70: #{tpu_custom_call.1} parent=5 // pred_check_branch
        %507 = sbr.rel (%p504) target = $region72
      $region71: #{tpu_custom_call.1} parent=5 // pred_region
        %s508 = ssub.s32 %s32, 1
        %s509 = sand.u32 %s97, 1
        %s510 = scalar_lea.sflag [#allocation5], %s509
        %s511 = sand.u32 %s97, 1
        %s512 = smul.addr %s511, 2
        %s513 = scalar_lea.vmem [#allocation4], %s512
        // Predicated region
        $region73: #{tpu_custom_call.1} parent=71 // pred_check
          %p514 = pneg %p110
        $region74: #{tpu_custom_call.1} parent=71 // pred_check_branch
          %516 = sbr.rel (%p514) target = $region76
        $region75: #{tpu_custom_call.1} parent=71 // pred_region
          %518 = dma.done %s510, 32
        $region76: #{tpu_custom_call.1} parent=71 // pred_fallthru
          _
        // Predicated region
        $region77: #{tpu_custom_call.1} parent=71 // pred_check
          %p519 = pneg %p194
        $region78: #{tpu_custom_call.1} parent=71 // pred_check_branch
          %521 = sbr.rel (%p519) target = $region80
        $region79: #{tpu_custom_call.1} parent=71 // pred_region
          %523 = dma.done [#allocation8], 512
        $region80: #{tpu_custom_call.1} parent=71 // pred_fallthru
          _
        // Predicated region
        $region81: #{tpu_custom_call.1} parent=71 // pred_check
          %p524 = pneg %p215
        $region82: #{tpu_custom_call.1} parent=71 // pred_check_branch
          %526 = sbr.rel (%p524) target = $region84
        $region83: #{tpu_custom_call.1} parent=71 // pred_region
          %528 = dma.done [#allocation8], 512
        $region84: #{tpu_custom_call.1} parent=71 // pred_fallthru
          _
        %p529 = scmp.lt.s32.totalorder %s37, 1
        %s530 = scalar_select %p529, %s37, 1
        %s531 = smul.addr %s530, 8
        %s532 = scalar_lea.vmem %s0, %s531
        %p533 = pneg %p58
        %p534 = pneg %p55
        %p535 = scmp.lt.s32.totalorder %s37, 1
        %s536 = scalar_select %p535, %s37, 1
        %s537 = smul.addr %s536, 2
        %s538 = scalar_lea.vmem %s1, %s537
        %p539 = pneg %p84
        %p540 = pneg %p81
        %s541 = sand.u32 %s97, 1
        %s542 = scalar_lea.sflag [#allocation5], %s541
        %s543 = sand.u32 %s97, 1
        %s544 = smul.addr %s543, 2
        %s545 = scalar_lea.vmem [#allocation4], %s544
        %p546 = pneg %p110
        %p547 = pneg %p107
        %p548 = pneg %p131
        %p549 = pneg %p128
        %p550 = pneg %p152
        %p551 = pneg %p149
        %p552 = pneg %p173
        %p553 = pneg %p170
        %p554 = pneg %p194
        %p555 = pneg %p191
        %p556 = pneg %p215
        %p557 = pneg %p212
        %p558 = pneg %p236
        %p559 = pneg %p233
        %p560 = pneg %p257
        %p561 = pneg %p254
        %p562 = pneg %p278
        %p563 = pneg %p275
        %p564 = pneg %p299
        %p565 = pneg %p296
        %p566 = pneg %p320
        %p567 = pneg %p317
        %p568 = pneg %p346
        %p569 = pneg %p343
        %s570 = sand.u32 %s333, 1
        %s571 = scalar_lea.sflag [#allocation6], %s570
        %s572 = sand.u32 %s333, 1
        %s573 = scalar_lea.vmem [#allocation10], %s572
        %p574 = pneg %p372
        %p575 = pneg %p369
        %s576 = sand.u32 %s37, 1
        %s577 = scalar_lea.sflag [#allocation12], %s576
        %s578 = sand.u32 %s359, 1
        %s579 = smul.addr %s578, 2
        %s580 = scalar_lea.vmem [#allocation11], %s579
        %p581 = pneg %p398
        %p582 = pneg %p395
        %s583 = sand.u32 %s37, 1
        %s584 = scalar_lea.sflag [#allocation12], %s583
        %s585 = sand.u32 %s385, 1
        %s586 = smul.addr %s585, 2
        %s587 = scalar_lea.vmem [#allocation13], %s586
        %p588 = scmp.lt.s32.totalorder %s37, 1
        %s589 = scalar_select %p588, %s37, 1
        %s590 = smul.addr %s589, 8
        %s591 = scalar_lea.vmem %s0, %s590
        %p592 = scmp.lt.s32.totalorder %s37, 1
        %s593 = scalar_select %p592, %s37, 1
        %s594 = smul.addr %s593, 2
        %s595 = scalar_lea.vmem %s1, %s594
        %v596 = vld [vmem:[%s595] sm:$0x3]
        %v597 = vld [vmem:[%s513] sm:$0x3]
        %v598 = vld [vmem:[%s591] sm:$0xff]
        %v599 = vld [vmem:[%s3] sm:$0x1f]
        %v600 = vld [vmem:[%s5] sm:$0x1]
        %v602 = vperm.slane %v600, 0
        %vm604 = vcmask 39936
        %v606 = vsel %vm604, %v598, 0
        %vm608 = vcmask 1044480
        %v610 = vsel %vm608, %v599, 0
        %612 = vmatpush.msra.mxu0 0.0
        %613 = vmatpush.msra.mxu0 0.0
        %614 = vmatpush.msra.mxu0 0.0
        %615 = vmatpush.msra.mxu0 0.0
        %616 = vmatpush.msra.mxu0 0.0
        %617 = vmatpush.msra.mxu0 0.0
        %618 = vmatpush.msra.mxu0 0.0
        %619 = vmatpush.msra.mxu0 0.0
        %620 = vmatpush.msra.mxu0 0.0
        %621 = vmatpush.msra.mxu0 0.0
        %622 = vmatpush.msra.mxu0 0.0
        %623 = vmatpush.msra.mxu0 0.0
        %624 = vmatpush.msra.mxu0 0.0
        %625 = vmatpush.msra.mxu0 0.0
        %626 = vmatpush.msra.mxu0 0.0
        %627 = vmatpush.msra.mxu0 %v610
        %628 = vmatmul.f32.gmra.mxu0 %v606
        %v629 = vpop.f32.mrf.mxu0
        %v630 = vadd.f32 %v602, %v629
        %631 = vdwg.mxu0
        %632 = vst [vmem:[#allocation2] sm:$0xff] %v630
        %v633 = vld [vmem:[#allocation2] sm:$0x1]
        %v634 = vld [vmem:[%s4] sm:$0xff]
        %v635 = vld [vmem:[%s4 + $0x8] sm:$0xff]
        %v636 = vld [vmem:[%s4 + $0x10] sm:$0xff]
        %v637 = vld [vmem:[%s4 + $0x18] sm:$0xff]
        %vm638 = vcmask 261120
        %v640 = vsel %vm638, %v596, 0
        %642 = vmatpush.msra.mxu0 0.0
        %643 = vmatpush.msra.mxu0 0.0
        %644 = vmatpush.msra.mxu0 0.0
        %645 = vmatpush.msra.mxu0 0.0
        %646 = vmatpush.msra.mxu0 0.0
        %647 = vmatpush.msra.mxu0 0.0
        %648 = vmatpush.msra.mxu0 0.0
        %649 = vmatpush.msra.mxu0 0.0
        %650 = vmatpush.msra.mxu0 0.0
        %651 = vmatpush.msra.mxu0 0.0
        %652 = vmatpush.msra.mxu0 0.0
        %653 = vmatpush.msra.mxu0 0.0
        %654 = vmatpush.msra.mxu0 %v637
        %655 = vmatpush.msra.mxu0 %v636
        %656 = vmatpush.msra.mxu0 %v635
        %657 = vmatpush.msra.mxu0 %v634
        %658 = vmatmul.f32.gmra.mxu0 %v640
        %v659 = vpop.f32.mrf.mxu0
        %v660 = vadd.f32 0.0, %v659
        %661 = vdwg.mxu0
        %v662 = vadd.f32 %v633, %v660
        %v663 = vsub.f32 0.0, %v662
        %v664 = vmul.f32 %v663, 1.442695
        %v665 = vpow.pop %v664
        %v666 = vadd.f32 %v665, 1.0
        %v667 = vrcp.pop %v666
        %v668 = vmul.f32 %v666, %v667
        %v669 = vsub.f32 1.0, %v668
        %v670 = vmul.f32 %v667, %v669
        %v671 = vadd.f32 %v667, %v670
        %vm672 = vweird.f32 %v666
        %vm673 = vweird.f32 %v667
        %vm674 = vmor %vm672, %vm673
        %v675 = vsel %vm674, %v667, %v671
        %v676 = vand.u32 2147483647, %v666
        %vm677 = vcmp.eq.f32.partialorder %v676, 8.507059e+37
        %v678 = vand.u32 %v666, 2147483648
        %v679 = vor.u32 1.1754944e-38, %v678
        %v680 = vsel %vm677, %v679, %v675
        %v681 = vmul.f32 1.0, %v680
        %v682 = vtanh.pop %v662
        %684 = vrot.lane.b32.xlu0 %v597, 32
        %v685 = vpop.permute.xlu0 %684
        %v687 = vmul.f32 %v681, %v685
        %689 = vrot.lane.b32.xlu0 %v682, 64
        %v690 = vpop.permute.xlu0 %689
        %v692 = vmul.f32 %v681, %v690
        %694 = vrot.lane.b32.xlu0 %v692, 32
        %v695 = vpop.permute.xlu0 %694
        %v697 = vadd.f32 %v687, %v695
        %v698 = vtanh.pop %v697
        %700 = vrot.lane.b32.xlu0 %v698, 64
        %v701 = vpop.permute.xlu0 %700
        %v703 = vmul.f32 %v681, %v701
        %705 = vrot.lane.b32.xlu0 %v703, 32
        %v706 = vpop.permute.xlu0 %705
        %vm708 = vcmask 253952
        %709 = vst.msk [vmem:[#allocation3] sm:$0x1] %vm708, %v706
        %v710 = vld [vmem:[#allocation2 + $0x1] sm:$0x1]
        %v711 = vld [vmem:[%s4] sm:$0xff]
        %v712 = vld [vmem:[%s4 + $0x8] sm:$0xff]
        %v713 = vld [vmem:[%s4 + $0x10] sm:$0xff]
        %v714 = vld [vmem:[%s4 + $0x18] sm:$0xff]
        %v715 = vsel %vm638, %v706, 0
        %717 = vmatpush.msra.mxu0 0.0
        %718 = vmatpush.msra.mxu0 0.0
        %719 = vmatpush.msra.mxu0 0.0
        %720 = vmatpush.msra.mxu0 0.0
        %721 = vmatpush.msra.mxu0 0.0
        %722 = vmatpush.msra.mxu0 0.0
        %723 = vmatpush.msra.mxu0 0.0
        %724 = vmatpush.msra.mxu0 0.0
        %725 = vmatpush.msra.mxu0 0.0
        %726 = vmatpush.msra.mxu0 0.0
        %727 = vmatpush.msra.mxu0 0.0
        %728 = vmatpush.msra.mxu0 0.0
        %729 = vmatpush.msra.mxu0 %v714
        %730 = vmatpush.msra.mxu0 %v713
        %731 = vmatpush.msra.mxu0 %v712
        %732 = vmatpush.msra.mxu0 %v711
        %733 = vmatmul.f32.gmra.mxu0 %v715
        %v734 = vpop.f32.mrf.mxu0
        %v735 = vadd.f32 0.0, %v734
        %736 = vdwg.mxu0
        %v737 = vadd.f32 %v710, %v735
        %v738 = vsub.f32 0.0, %v737
        %v739 = vmul.f32 %v738, 1.442695
        %v740 = vpow.pop %v739
        %v741 = vadd.f32 %v740, 1.0
        %v742 = vrcp.pop %v741
        %v743 = vmul.f32 %v741, %v742
        %v744 = vsub.f32 1.0, %v743
        %v745 = vmul.f32 %v742, %v744
        %v746 = vadd.f32 %v742, %v745
        %vm747 = vweird.f32 %v741
        %vm748 = vweird.f32 %v742
        %vm749 = vmor %vm747, %vm748
        %v750 = vsel %vm749, %v742, %v746
        %v751 = vand.u32 2147483647, %v741
        %vm752 = vcmp.eq.f32.partialorder %v751, 8.507059e+37
        %v753 = vand.u32 %v741, 2147483648
        %v754 = vor.u32 1.1754944e-38, %v753
        %v755 = vsel %vm752, %v754, %v750
        %v756 = vmul.f32 1.0, %v755
        %v757 = vtanh.pop %v737
        %v758 = vmul.f32 %v756, %v697
        %760 = vrot.lane.b32.xlu0 %v757, 64
        %v761 = vpop.permute.xlu0 %760
        %v763 = vmul.f32 %v756, %v761
        %765 = vrot.lane.b32.xlu0 %v763, 32
        %v766 = vpop.permute.xlu0 %765
        %v768 = vadd.f32 %v758, %v766
        %v769 = vtanh.pop %v768
        %771 = vrot.lane.b32.xlu0 %v769, 64
        %v772 = vpop.permute.xlu0 %771
        %v774 = vmul.f32 %v756, %v772
        %776 = vrot.lane.b32.xlu0 %v774, 32
        %v777 = vpop.permute.xlu0 %776
        %779 = vst.msk [vmem:[#allocation3 + $0x1] sm:$0x1] %vm708, %v777
        %v780 = vld [vmem:[#allocation2 + $0x2] sm:$0x1]
        %v781 = vld [vmem:[%s4] sm:$0xff]
        %v782 = vld [vmem:[%s4 + $0x8] sm:$0xff]
        %v783 = vld [vmem:[%s4 + $0x10] sm:$0xff]
        %v784 = vld [vmem:[%s4 + $0x18] sm:$0xff]
        %v785 = vsel %vm638, %v777, 0
        %787 = vmatpush.msra.mxu0 0.0
        %788 = vmatpush.msra.mxu0 0.0
        %789 = vmatpush.msra.mxu0 0.0
        %790 = vmatpush.msra.mxu0 0.0
        %791 = vmatpush.msra.mxu0 0.0
        %792 = vmatpush.msra.mxu0 0.0
        %793 = vmatpush.msra.mxu0 0.0
        %794 = vmatpush.msra.mxu0 0.0
        %795 = vmatpush.msra.mxu0 0.0
        %796 = vmatpush.msra.mxu0 0.0
        %797 = vmatpush.msra.mxu0 0.0
        %798 = vmatpush.msra.mxu0 0.0
        %799 = vmatpush.msra.mxu0 %v784
        %800 = vmatpush.msra.mxu0 %v783
        %801 = vmatpush.msra.mxu0 %v782
        %802 = vmatpush.msra.mxu0 %v781
        %803 = vmatmul.f32.gmra.mxu0 %v785
        %v804 = vpop.f32.mrf.mxu0
        %v805 = vadd.f32 0.0, %v804
        %806 = vdwg.mxu0
        %v807 = vadd.f32 %v780, %v805
        %v808 = vsub.f32 0.0, %v807
        %v809 = vmul.f32 %v808, 1.442695
        %v810 = vpow.pop %v809
        %v811 = vadd.f32 %v810, 1.0
        %v812 = vrcp.pop %v811
        %v813 = vmul.f32 %v811, %v812
        %v814 = vsub.f32 1.0, %v813
        %v815 = vmul.f32 %v812, %v814
        %v816 = vadd.f32 %v812, %v815
        %vm817 = vweird.f32 %v811
        %vm818 = vweird.f32 %v812
        %vm819 = vmor %vm817, %vm818
        %v820 = vsel %vm819, %v812, %v816
        %v821 = vand.u32 2147483647, %v811
        %vm822 = vcmp.eq.f32.partialorder %v821, 8.507059e+37
        %v823 = vand.u32 %v811, 2147483648
        %v824 = vor.u32 1.1754944e-38, %v823
        %v825 = vsel %vm822, %v824, %v820
        %v826 = vmul.f32 1.0, %v825
        %v827 = vtanh.pop %v807
        %v828 = vmul.f32 %v826, %v768
        %830 = vrot.lane.b32.xlu0 %v827, 64
        %v831 = vpop.permute.xlu0 %830
        %v833 = vmul.f32 %v826, %v831
        %835 = vrot.lane.b32.xlu0 %v833, 32
        %v836 = vpop.permute.xlu0 %835
        %v838 = vadd.f32 %v828, %v836
        %v839 = vtanh.pop %v838
        %841 = vrot.lane.b32.xlu0 %v839, 64
        %v842 = vpop.permute.xlu0 %841
        %v844 = vmul.f32 %v826, %v842
        %846 = vrot.lane.b32.xlu0 %v844, 32
        %v847 = vpop.permute.xlu0 %846
        %849 = vst.msk [vmem:[#allocation3 + $0x2] sm:$0x1] %vm708, %v847
        %v850 = vld [vmem:[#allocation2 + $0x3] sm:$0x1]
        %v851 = vld [vmem:[%s4] sm:$0xff]
        %v852 = vld [vmem:[%s4 + $0x8] sm:$0xff]
        %v853 = vld [vmem:[%s4 + $0x10] sm:$0xff]
        %v854 = vld [vmem:[%s4 + $0x18] sm:$0xff]
        %v855 = vsel %vm638, %v847, 0
        %857 = vmatpush.msra.mxu0 0.0
        %858 = vmatpush.msra.mxu0 0.0
        %859 = vmatpush.msra.mxu0 0.0
        %860 = vmatpush.msra.mxu0 0.0
        %861 = vmatpush.msra.mxu0 0.0
        %862 = vmatpush.msra.mxu0 0.0
        %863 = vmatpush.msra.mxu0 0.0
        %864 = vmatpush.msra.mxu0 0.0
        %865 = vmatpush.msra.mxu0 0.0
        %866 = vmatpush.msra.mxu0 0.0
        %867 = vmatpush.msra.mxu0 0.0
        %868 = vmatpush.msra.mxu0 0.0
        %869 = vmatpush.msra.mxu0 %v854
        %870 = vmatpush.msra.mxu0 %v853
        %871 = vmatpush.msra.mxu0 %v852
        %872 = vmatpush.msra.mxu0 %v851
        %873 = vmatmul.f32.gmra.mxu0 %v855
        %v874 = vpop.f32.mrf.mxu0
        %v875 = vadd.f32 0.0, %v874
        %876 = vdwg.mxu0
        %v877 = vadd.f32 %v850, %v875
        %v878 = vsub.f32 0.0, %v877
        %v879 = vmul.f32 %v878, 1.442695
        %v880 = vpow.pop %v879
        %v881 = vadd.f32 %v880, 1.0
        %v882 = vrcp.pop %v881
        %v883 = vmul.f32 %v881, %v882
        %v884 = vsub.f32 1.0, %v883
        %v885 = vmul.f32 %v882, %v884
        %v886 = vadd.f32 %v882, %v885
        %vm887 = vweird.f32 %v881
        %vm888 = vweird.f32 %v882
        %vm889 = vmor %vm887, %vm888
        %v890 = vsel %vm889, %v882, %v886
        %v891 = vand.u32 2147483647, %v881
        %vm892 = vcmp.eq.f32.partialorder %v891, 8.507059e+37
        %v893 = vand.u32 %v881, 2147483648
        %v894 = vor.u32 1.1754944e-38, %v893
        %v895 = vsel %vm892, %v894, %v890
        %v896 = vmul.f32 1.0, %v895
        %v897 = vtanh.pop %v877
        %v898 = vmul.f32 %v896, %v838
        %900 = vrot.lane.b32.xlu0 %v897, 64
        %v901 = vpop.permute.xlu0 %900
        %v903 = vmul.f32 %v896, %v901
        %905 = vrot.lane.b32.xlu0 %v903, 32
        %v906 = vpop.permute.xlu0 %905
        %v908 = vadd.f32 %v898, %v906
        %v909 = vtanh.pop %v908
        %911 = vrot.lane.b32.xlu0 %v909, 64
        %v912 = vpop.permute.xlu0 %911
        %v914 = vmul.f32 %v896, %v912
        %916 = vrot.lane.b32.xlu0 %v914, 32
        %v917 = vpop.permute.xlu0 %916
        %919 = vst.msk [vmem:[#allocation3 + $0x3] sm:$0x1] %vm708, %v917
        %v920 = vld [vmem:[#allocation2 + $0x4] sm:$0x1]
        %v921 = vld [vmem:[%s4] sm:$0xff]
        %v922 = vld [vmem:[%s4 + $0x8] sm:$0xff]
        %v923 = vld [vmem:[%s4 + $0x10] sm:$0xff]
        %v924 = vld [vmem:[%s4 + $0x18] sm:$0xff]
        %v925 = vsel %vm638, %v917, 0
        %927 = vmatpush.msra.mxu0 0.0
        %928 = vmatpush.msra.mxu0 0.0
        %929 = vmatpush.msra.mxu0 0.0
        %930 = vmatpush.msra.mxu0 0.0
        %931 = vmatpush.msra.mxu0 0.0
        %932 = vmatpush.msra.mxu0 0.0
        %933 = vmatpush.msra.mxu0 0.0
        %934 = vmatpush.msra.mxu0 0.0
        %935 = vmatpush.msra.mxu0 0.0
        %936 = vmatpush.msra.mxu0 0.0
        %937 = vmatpush.msra.mxu0 0.0
        %938 = vmatpush.msra.mxu0 0.0
        %939 = vmatpush.msra.mxu0 %v924
        %940 = vmatpush.msra.mxu0 %v923
        %941 = vmatpush.msra.mxu0 %v922
        %942 = vmatpush.msra.mxu0 %v921
        %943 = vmatmul.f32.gmra.mxu0 %v925
        %v944 = vpop.f32.mrf.mxu0
        %v945 = vadd.f32 0.0, %v944
        %946 = vdwg.mxu0
        %v947 = vadd.f32 %v920, %v945
        %v948 = vsub.f32 0.0, %v947
        %v949 = vmul.f32 %v948, 1.442695
        %v950 = vpow.pop %v949
        %v951 = vadd.f32 %v950, 1.0
        %v952 = vrcp.pop %v951
        %v953 = vmul.f32 %v951, %v952
        %v954 = vsub.f32 1.0, %v953
        %v955 = vmul.f32 %v952, %v954
        %v956 = vadd.f32 %v952, %v955
        %vm957 = vweird.f32 %v951
        %vm958 = vweird.f32 %v952
        %vm959 = vmor %vm957, %vm958
        %v960 = vsel %vm959, %v952, %v956
        %v961 = vand.u32 2147483647, %v951
        %vm962 = vcmp.eq.f32.partialorder %v961, 8.507059e+37
        %v963 = vand.u32 %v951, 2147483648
        %v964 = vor.u32 1.1754944e-38, %v963
        %v965 = vsel %vm962, %v964, %v960
        %v966 = vmul.f32 1.0, %v965
        %v967 = vtanh.pop %v947
        %v968 = vmul.f32 %v966, %v908
        %970 = vrot.lane.b32.xlu0 %v967, 64
        %v971 = vpop.permute.xlu0 %970
        %v973 = vmul.f32 %v966, %v971
        %975 = vrot.lane.b32.xlu0 %v973, 32
        %v976 = vpop.permute.xlu0 %975
        %v978 = vadd.f32 %v968, %v976
        %v979 = vtanh.pop %v978
        %981 = vrot.lane.b32.xlu0 %v979, 64
        %v982 = vpop.permute.xlu0 %981
        %v984 = vmul.f32 %v966, %v982
        %986 = vrot.lane.b32.xlu0 %v984, 32
        %v987 = vpop.permute.xlu0 %986
        %989 = vst.msk [vmem:[#allocation3 + $0x4] sm:$0x1] %vm708, %v987
        %v990 = vld [vmem:[#allocation2 + $0x5] sm:$0x1]
        %v991 = vld [vmem:[%s4] sm:$0xff]
        %v992 = vld [vmem:[%s4 + $0x8] sm:$0xff]
        %v993 = vld [vmem:[%s4 + $0x10] sm:$0xff]
        %v994 = vld [vmem:[%s4 + $0x18] sm:$0xff]
        %v995 = vsel %vm638, %v987, 0
        %997 = vmatpush.msra.mxu0 0.0
        %998 = vmatpush.msra.mxu0 0.0
        %999 = vmatpush.msra.mxu0 0.0
        %1000 = vmatpush.msra.mxu0 0.0
        %1001 = vmatpush.msra.mxu0 0.0
        %1002 = vmatpush.msra.mxu0 0.0
        %1003 = vmatpush.msra.mxu0 0.0
        %1004 = vmatpush.msra.mxu0 0.0
        %1005 = vmatpush.msra.mxu0 0.0
        %1006 = vmatpush.msra.mxu0 0.0
        %1007 = vmatpush.msra.mxu0 0.0
        %1008 = vmatpush.msra.mxu0 0.0
        %1009 = vmatpush.msra.mxu0 %v994
        %1010 = vmatpush.msra.mxu0 %v993
        %1011 = vmatpush.msra.mxu0 %v992
        %1012 = vmatpush.msra.mxu0 %v991
        %1013 = vmatmul.f32.gmra.mxu0 %v995
        %v1014 = vpop.f32.mrf.mxu0
        %v1015 = vadd.f32 0.0, %v1014
        %1016 = vdwg.mxu0
        %v1017 = vadd.f32 %v990, %v1015
        %v1018 = vsub.f32 0.0, %v1017
        %v1019 = vmul.f32 %v1018, 1.442695
        %v1020 = vpow.pop %v1019
        %v1021 = vadd.f32 %v1020, 1.0
        %v1022 = vrcp.pop %v1021
        %v1023 = vmul.f32 %v1021, %v1022
        %v1024 = vsub.f32 1.0, %v1023
        %v1025 = vmul.f32 %v1022, %v1024
        %v1026 = vadd.f32 %v1022, %v1025
        %vm1027 = vweird.f32 %v1021
        %vm1028 = vweird.f32 %v1022
        %vm1029 = vmor %vm1027, %vm1028
        %v1030 = vsel %vm1029, %v1022, %v1026
        %v1031 = vand.u32 2147483647, %v1021
        %vm1032 = vcmp.eq.f32.partialorder %v1031, 8.507059e+37
        %v1033 = vand.u32 %v1021, 2147483648
        %v1034 = vor.u32 1.1754944e-38, %v1033
        %v1035 = vsel %vm1032, %v1034, %v1030
        %v1036 = vmul.f32 1.0, %v1035
        %v1037 = vtanh.pop %v1017
        %v1038 = vmul.f32 %v1036, %v978
        %1040 = vrot.lane.b32.xlu0 %v1037, 64
        %v1041 = vpop.permute.xlu0 %1040
        %v1043 = vmul.f32 %v1036, %v1041
        %1045 = vrot.lane.b32.xlu0 %v1043, 32
        %v1046 = vpop.permute.xlu0 %1045
        %v1048 = vadd.f32 %v1038, %v1046
        %v1049 = vtanh.pop %v1048
        %1051 = vrot.lane.b32.xlu0 %v1049, 64
        %v1052 = vpop.permute.xlu0 %1051
        %v1054 = vmul.f32 %v1036, %v1052
        %1056 = vrot.lane.b32.xlu0 %v1054, 32
        %v1057 = vpop.permute.xlu0 %1056
        %1059 = vst.msk [vmem:[#allocation3 + $0x5] sm:$0x1] %vm708, %v1057
        %v1060 = vld [vmem:[#allocation2 + $0x6] sm:$0x1]
        %v1061 = vld [vmem:[%s4] sm:$0xff]
        %v1062 = vld [vmem:[%s4 + $0x8] sm:$0xff]
        %v1063 = vld [vmem:[%s4 + $0x10] sm:$0xff]
        %v1064 = vld [vmem:[%s4 + $0x18] sm:$0xff]
        %v1065 = vsel %vm638, %v1057, 0
        %1067 = vmatpush.msra.mxu0 0.0
        %1068 = vmatpush.msra.mxu0 0.0
        %1069 = vmatpush.msra.mxu0 0.0
        %1070 = vmatpush.msra.mxu0 0.0
        %1071 = vmatpush.msra.mxu0 0.0
        %1072 = vmatpush.msra.mxu0 0.0
        %1073 = vmatpush.msra.mxu0 0.0
        %1074 = vmatpush.msra.mxu0 0.0
        %1075 = vmatpush.msra.mxu0 0.0
        %1076 = vmatpush.msra.mxu0 0.0
        %1077 = vmatpush.msra.mxu0 0.0
        %1078 = vmatpush.msra.mxu0 0.0
        %1079 = vmatpush.msra.mxu0 %v1064
        %1080 = vmatpush.msra.mxu0 %v1063
        %1081 = vmatpush.msra.mxu0 %v1062
        %1082 = vmatpush.msra.mxu0 %v1061
        %1083 = vmatmul.f32.gmra.mxu0 %v1065
        %v1084 = vpop.f32.mrf.mxu0
        %v1085 = vadd.f32 0.0, %v1084
        %1086 = vdwg.mxu0
        %v1087 = vadd.f32 %v1060, %v1085
        %v1088 = vsub.f32 0.0, %v1087
        %v1089 = vmul.f32 %v1088, 1.442695
        %v1090 = vpow.pop %v1089
        %v1091 = vadd.f32 %v1090, 1.0
        %v1092 = vrcp.pop %v1091
        %v1093 = vmul.f32 %v1091, %v1092
        %v1094 = vsub.f32 1.0, %v1093
        %v1095 = vmul.f32 %v1092, %v1094
        %v1096 = vadd.f32 %v1092, %v1095
        %vm1097 = vweird.f32 %v1091
        %vm1098 = vweird.f32 %v1092
        %vm1099 = vmor %vm1097, %vm1098
        %v1100 = vsel %vm1099, %v1092, %v1096
        %v1101 = vand.u32 2147483647, %v1091
        %vm1102 = vcmp.eq.f32.partialorder %v1101, 8.507059e+37
        %v1103 = vand.u32 %v1091, 2147483648
        %v1104 = vor.u32 1.1754944e-38, %v1103
        %v1105 = vsel %vm1102, %v1104, %v1100
        %v1106 = vmul.f32 1.0, %v1105
        %v1107 = vtanh.pop %v1087
        %v1108 = vmul.f32 %v1106, %v1048
        %1110 = vrot.lane.b32.xlu0 %v1107, 64
        %v1111 = vpop.permute.xlu0 %1110
        %v1113 = vmul.f32 %v1106, %v1111
        %1115 = vrot.lane.b32.xlu0 %v1113, 32
        %v1116 = vpop.permute.xlu0 %1115
        %v1118 = vadd.f32 %v1108, %v1116
        %v1119 = vtanh.pop %v1118
        %1121 = vrot.lane.b32.xlu0 %v1119, 64
        %v1122 = vpop.permute.xlu0 %1121
        %v1124 = vmul.f32 %v1106, %v1122
        %1126 = vrot.lane.b32.xlu0 %v1124, 32
        %v1127 = vpop.permute.xlu0 %1126
        %1129 = vst.msk [vmem:[#allocation3 + $0x6] sm:$0x1] %vm708, %v1127
        %v1130 = vld [vmem:[#allocation2 + $0x7] sm:$0x1]
        %v1131 = vld [vmem:[%s4] sm:$0xff]
        %v1132 = vld [vmem:[%s4 + $0x8] sm:$0xff]
        %v1133 = vld [vmem:[%s4 + $0x10] sm:$0xff]
        %v1134 = vld [vmem:[%s4 + $0x18] sm:$0xff]
        %v1135 = vsel %vm638, %v1127, 0
        %1137 = vmatpush.msra.mxu0 0.0
        %1138 = vmatpush.msra.mxu0 0.0
        %1139 = vmatpush.msra.mxu0 0.0
        %1140 = vmatpush.msra.mxu0 0.0
        %1141 = vmatpush.msra.mxu0 0.0
        %1142 = vmatpush.msra.mxu0 0.0
        %1143 = vmatpush.msra.mxu0 0.0
        %1144 = vmatpush.msra.mxu0 0.0
        %1145 = vmatpush.msra.mxu0 0.0
        %1146 = vmatpush.msra.mxu0 0.0
        %1147 = vmatpush.msra.mxu0 0.0
        %1148 = vmatpush.msra.mxu0 0.0
        %1149 = vmatpush.msra.mxu0 %v1134
        %1150 = vmatpush.msra.mxu0 %v1133
        %1151 = vmatpush.msra.mxu0 %v1132
        %1152 = vmatpush.msra.mxu0 %v1131
        %1153 = vmatmul.f32.gmra.mxu0 %v1135
        %v1154 = vpop.f32.mrf.mxu0
        %v1155 = vadd.f32 0.0, %v1154
        %1156 = vdwg.mxu0
        %v1157 = vadd.f32 %v1130, %v1155
        %v1158 = vsub.f32 0.0, %v1157
        %v1159 = vmul.f32 %v1158, 1.442695
        %v1160 = vpow.pop %v1159
        %v1161 = vadd.f32 %v1160, 1.0
        %v1162 = vrcp.pop %v1161
        %v1163 = vmul.f32 %v1161, %v1162
        %v1164 = vsub.f32 1.0, %v1163
        %v1165 = vmul.f32 %v1162, %v1164
        %v1166 = vadd.f32 %v1162, %v1165
        %vm1167 = vweird.f32 %v1161
        %vm1168 = vweird.f32 %v1162
        %vm1169 = vmor %vm1167, %vm1168
        %v1170 = vsel %vm1169, %v1162, %v1166
        %v1171 = vand.u32 2147483647, %v1161
        %vm1172 = vcmp.eq.f32.partialorder %v1171, 8.507059e+37
        %v1173 = vand.u32 %v1161, 2147483648
        %v1174 = vor.u32 1.1754944e-38, %v1173
        %v1175 = vsel %vm1172, %v1174, %v1170
        %v1176 = vmul.f32 1.0, %v1175
        %v1177 = vtanh.pop %v1157
        %v1178 = vmul.f32 %v1176, %v1118
        %1180 = vrot.lane.b32.xlu0 %v1177, 64
        %v1181 = vpop.permute.xlu0 %1180
        %v1183 = vmul.f32 %v1176, %v1181
        %1185 = vrot.lane.b32.xlu0 %v1183, 32
        %v1186 = vpop.permute.xlu0 %1185
        %v1188 = vadd.f32 %v1178, %v1186
        %v1189 = vtanh.pop %v1188
        %1191 = vrot.lane.b32.xlu0 %v1189, 64
        %v1192 = vpop.permute.xlu0 %1191
        %v1194 = vmul.f32 %v1176, %v1192
        %1196 = vrot.lane.b32.xlu0 %v1194, 32
        %v1197 = vpop.permute.xlu0 %1196
        %1199 = vst.msk [vmem:[#allocation3 + $0x7] sm:$0x1] %vm708, %v1197
        %v1200 = vld [vmem:[#allocation3] sm:$0xff]
        %v1201 = vld [vmem:[#allocation7] sm:$0xff]
        %v1202 = vld [vmem:[#allocation7 + $0x8] sm:$0xff]
        %v1203 = vld [vmem:[#allocation7 + $0x10] sm:$0xff]
        %v1204 = vld [vmem:[#allocation7 + $0x18] sm:$0xff]
        %v1205 = vld [vmem:[%s8] sm:$0x1]
        %v1207 = vperm.slane %v1205, 0
        %v1210 = vsel %vm638, %v1200, 0
        %1212 = vmatpush.msra.mxu0 0.0
        %1213 = vmatpush.msra.mxu0 0.0
        %1214 = vmatpush.msra.mxu0 0.0
        %1215 = vmatpush.msra.mxu0 0.0
        %1216 = vmatpush.msra.mxu0 0.0
        %1217 = vmatpush.msra.mxu0 0.0
        %1218 = vmatpush.msra.mxu0 0.0
        %1219 = vmatpush.msra.mxu0 0.0
        %1220 = vmatpush.msra.mxu0 0.0
        %1221 = vmatpush.msra.mxu0 0.0
        %1222 = vmatpush.msra.mxu0 0.0
        %1223 = vmatpush.msra.mxu0 0.0
        %1224 = vmatpush.msra.mxu0 %v1204
        %1225 = vmatpush.msra.mxu0 %v1203
        %1226 = vmatpush.msra.mxu0 %v1202
        %1227 = vmatpush.msra.mxu0 %v1201
        %1228 = vmatmul.f32.gmra.mxu0 %v1210
        %v1229 = vpop.f32.mrf.mxu0
        %v1230 = vadd.f32 %v1207, %v1229
        %1231 = vdwg.mxu0
        %1232 = vst [vmem:[#allocation2] sm:$0xff] %v1230
        %v1233 = vld [vmem:[#allocation2] sm:$0x1]
        %v1234 = vld [vmem:[#allocation9] sm:$0xff]
        %v1235 = vld [vmem:[#allocation9 + $0x8] sm:$0xff]
        %v1236 = vld [vmem:[#allocation9 + $0x10] sm:$0xff]
        %v1237 = vld [vmem:[#allocation9 + $0x18] sm:$0xff]
        %v1238 = vrot.slane %v596, 1
        %v1239 = vsel %vm638, %v1238, 0
        %1241 = vmatpush.msra.mxu0 0.0
        %1242 = vmatpush.msra.mxu0 0.0
        %1243 = vmatpush.msra.mxu0 0.0
        %1244 = vmatpush.msra.mxu0 0.0
        %1245 = vmatpush.msra.mxu0 0.0
        %1246 = vmatpush.msra.mxu0 0.0
        %1247 = vmatpush.msra.mxu0 0.0
        %1248 = vmatpush.msra.mxu0 0.0
        %1249 = vmatpush.msra.mxu0 0.0
        %1250 = vmatpush.msra.mxu0 0.0
        %1251 = vmatpush.msra.mxu0 0.0
        %1252 = vmatpush.msra.mxu0 0.0
        %1253 = vmatpush.msra.mxu0 %v1237
        %1254 = vmatpush.msra.mxu0 %v1236
        %1255 = vmatpush.msra.mxu0 %v1235
        %1256 = vmatpush.msra.mxu0 %v1234
        %1257 = vmatmul.f32.gmra.mxu0 %v1239
        %v1258 = vpop.f32.mrf.mxu0
        %v1259 = vadd.f32 0.0, %v1258
        %1260 = vdwg.mxu0
        %v1261 = vadd.f32 %v1233, %v1259
        %v1262 = vsub.f32 0.0, %v1261
        %v1263 = vmul.f32 %v1262, 1.442695
        %v1264 = vpow.pop %v1263
        %v1265 = vadd.f32 %v1264, 1.0
        %v1266 = vrcp.pop %v1265
        %v1267 = vmul.f32 %v1265, %v1266
        %v1268 = vsub.f32 1.0, %v1267
        %v1269 = vmul.f32 %v1266, %v1268
        %v1270 = vadd.f32 %v1266, %v1269
        %vm1271 = vweird.f32 %v1265
        %vm1272 = vweird.f32 %v1266
        %vm1273 = vmor %vm1271, %vm1272
        %v1274 = vsel %vm1273, %v1266, %v1270
        %v1275 = vand.u32 2147483647, %v1265
        %vm1276 = vcmp.eq.f32.partialorder %v1275, 8.507059e+37
        %v1277 = vand.u32 %v1265, 2147483648
        %v1278 = vor.u32 1.1754944e-38, %v1277
        %v1279 = vsel %vm1276, %v1278, %v1274
        %v1280 = vmul.f32 1.0, %v1279
        %v1281 = vtanh.pop %v1261
        %v1282 = vrot.slane %v597, 1
        %1283 = vrot.lane.b32.xlu0 %v1282, 32
        %v1284 = vpop.permute.xlu0 %1283
        %v1286 = vmul.f32 %v1280, %v1284
        %1288 = vrot.lane.b32.xlu0 %v1281, 64
        %v1289 = vpop.permute.xlu0 %1288
        %v1291 = vmul.f32 %v1280, %v1289
        %1293 = vrot.lane.b32.xlu0 %v1291, 32
        %v1294 = vpop.permute.xlu0 %1293
        %v1296 = vadd.f32 %v1286, %v1294
        %v1297 = vtanh.pop %v1296
        %1299 = vrot.lane.b32.xlu0 %v1297, 64
        %v1300 = vpop.permute.xlu0 %1299
        %v1302 = vmul.f32 %v1280, %v1300
        %v1303 = vld [vmem:[#allocation2 + $0x1] sm:$0x1]
        %1305 = vrot.lane.b32.xlu0 %v1302, 32
        %v1306 = vpop.permute.xlu0 %1305
        %v1307 = vsel %vm638, %v1306, 0
        %1309 = vmatpush.msra.mxu0 0.0
        %1310 = vmatpush.msra.mxu0 0.0
        %1311 = vmatpush.msra.mxu0 0.0
        %1312 = vmatpush.msra.mxu0 0.0
        %1313 = vmatpush.msra.mxu0 0.0
        %1314 = vmatpush.msra.mxu0 0.0
        %1315 = vmatpush.msra.mxu0 0.0
        %1316 = vmatpush.msra.mxu0 0.0
        %1317 = vmatpush.msra.mxu0 0.0
        %1318 = vmatpush.msra.mxu0 0.0
        %1319 = vmatpush.msra.mxu0 0.0
        %1320 = vmatpush.msra.mxu0 0.0
        %1321 = vmatpush.msra.mxu0 %v1237
        %1322 = vmatpush.msra.mxu0 %v1236
        %1323 = vmatpush.msra.mxu0 %v1235
        %1324 = vmatpush.msra.mxu0 %v1234
        %1325 = vmatmul.f32.gmra.mxu0 %v1307
        %v1326 = vpop.f32.mrf.mxu0
        %v1327 = vadd.f32 0.0, %v1326
        %1328 = vdwg.mxu0
        %v1329 = vadd.f32 %v1303, %v1327
        %v1330 = vsub.f32 0.0, %v1329
        %v1331 = vmul.f32 %v1330, 1.442695
        %v1332 = vpow.pop %v1331
        %v1333 = vadd.f32 %v1332, 1.0
        %v1334 = vrcp.pop %v1333
        %v1335 = vmul.f32 %v1333, %v1334
        %v1336 = vsub.f32 1.0, %v1335
        %v1337 = vmul.f32 %v1334, %v1336
        %v1338 = vadd.f32 %v1334, %v1337
        %vm1339 = vweird.f32 %v1333
        %vm1340 = vweird.f32 %v1334
        %vm1341 = vmor %vm1339, %vm1340
        %v1342 = vsel %vm1341, %v1334, %v1338
        %v1343 = vand.u32 2147483647, %v1333
        %vm1344 = vcmp.eq.f32.partialorder %v1343, 8.507059e+37
        %v1345 = vand.u32 %v1333, 2147483648
        %v1346 = vor.u32 1.1754944e-38, %v1345
        %v1347 = vsel %vm1344, %v1346, %v1342
        %v1348 = vmul.f32 1.0, %v1347
        %v1349 = vtanh.pop %v1329
        %v1350 = vmul.f32 %v1348, %v1296
        %1352 = vrot.lane.b32.xlu0 %v1349, 64
        %v1353 = vpop.permute.xlu0 %1352
        %v1355 = vmul.f32 %v1348, %v1353
        %1357 = vrot.lane.b32.xlu0 %v1355, 32
        %v1358 = vpop.permute.xlu0 %1357
        %v1360 = vadd.f32 %v1350, %v1358
        %v1361 = vtanh.pop %v1360
        %1363 = vrot.lane.b32.xlu0 %v1361, 64
        %v1364 = vpop.permute.xlu0 %1363
        %v1366 = vmul.f32 %v1348, %v1364
        %v1367 = vld [vmem:[#allocation2 + $0x2] sm:$0x1]
        %1369 = vrot.lane.b32.xlu0 %v1366, 32
        %v1370 = vpop.permute.xlu0 %1369
        %v1371 = vsel %vm638, %v1370, 0
        %1373 = vmatpush.msra.mxu0 0.0
        %1374 = vmatpush.msra.mxu0 0.0
        %1375 = vmatpush.msra.mxu0 0.0
        %1376 = vmatpush.msra.mxu0 0.0
        %1377 = vmatpush.msra.mxu0 0.0
        %1378 = vmatpush.msra.mxu0 0.0
        %1379 = vmatpush.msra.mxu0 0.0
        %1380 = vmatpush.msra.mxu0 0.0
        %1381 = vmatpush.msra.mxu0 0.0
        %1382 = vmatpush.msra.mxu0 0.0
        %1383 = vmatpush.msra.mxu0 0.0
        %1384 = vmatpush.msra.mxu0 0.0
        %1385 = vmatpush.msra.mxu0 %v1237
        %1386 = vmatpush.msra.mxu0 %v1236
        %1387 = vmatpush.msra.mxu0 %v1235
        %1388 = vmatpush.msra.mxu0 %v1234
        %1389 = vmatmul.f32.gmra.mxu0 %v1371
        %v1390 = vpop.f32.mrf.mxu0
        %v1391 = vadd.f32 0.0, %v1390
        %1392 = vdwg.mxu0
        %v1393 = vadd.f32 %v1367, %v1391
        %v1394 = vsub.f32 0.0, %v1393
        %v1395 = vmul.f32 %v1394, 1.442695
        %v1396 = vpow.pop %v1395
        %v1397 = vadd.f32 %v1396, 1.0
        %v1398 = vrcp.pop %v1397
        %v1399 = vmul.f32 %v1397, %v1398
        %v1400 = vsub.f32 1.0, %v1399
        %v1401 = vmul.f32 %v1398, %v1400
        %v1402 = vadd.f32 %v1398, %v1401
        %vm1403 = vweird.f32 %v1397
        %vm1404 = vweird.f32 %v1398
        %vm1405 = vmor %vm1403, %vm1404
        %v1406 = vsel %vm1405, %v1398, %v1402
        %v1407 = vand.u32 2147483647, %v1397
        %vm1408 = vcmp.eq.f32.partialorder %v1407, 8.507059e+37
        %v1409 = vand.u32 %v1397, 2147483648
        %v1410 = vor.u32 1.1754944e-38, %v1409
        %v1411 = vsel %vm1408, %v1410, %v1406
        %v1412 = vmul.f32 1.0, %v1411
        %v1413 = vtanh.pop %v1393
        %v1414 = vmul.f32 %v1412, %v1360
        %1416 = vrot.lane.b32.xlu0 %v1413, 64
        %v1417 = vpop.permute.xlu0 %1416
        %v1419 = vmul.f32 %v1412, %v1417
        %1421 = vrot.lane.b32.xlu0 %v1419, 32
        %v1422 = vpop.permute.xlu0 %1421
        %v1424 = vadd.f32 %v1414, %v1422
        %v1425 = vtanh.pop %v1424
        %1427 = vrot.lane.b32.xlu0 %v1425, 64
        %v1428 = vpop.permute.xlu0 %1427
        %v1430 = vmul.f32 %v1412, %v1428
        %v1431 = vld [vmem:[#allocation2 + $0x3] sm:$0x1]
        %1433 = vrot.lane.b32.xlu0 %v1430, 32
        %v1434 = vpop.permute.xlu0 %1433
        %v1435 = vsel %vm638, %v1434, 0
        %1437 = vmatpush.msra.mxu0 0.0
        %1438 = vmatpush.msra.mxu0 0.0
        %1439 = vmatpush.msra.mxu0 0.0
        %1440 = vmatpush.msra.mxu0 0.0
        %1441 = vmatpush.msra.mxu0 0.0
        %1442 = vmatpush.msra.mxu0 0.0
        %1443 = vmatpush.msra.mxu0 0.0
        %1444 = vmatpush.msra.mxu0 0.0
        %1445 = vmatpush.msra.mxu0 0.0
        %1446 = vmatpush.msra.mxu0 0.0
        %1447 = vmatpush.msra.mxu0 0.0
        %1448 = vmatpush.msra.mxu0 0.0
        %1449 = vmatpush.msra.mxu0 %v1237
        %1450 = vmatpush.msra.mxu0 %v1236
        %1451 = vmatpush.msra.mxu0 %v1235
        %1452 = vmatpush.msra.mxu0 %v1234
        %1453 = vmatmul.f32.gmra.mxu0 %v1435
        %v1454 = vpop.f32.mrf.mxu0
        %v1455 = vadd.f32 0.0, %v1454
        %1456 = vdwg.mxu0
        %v1457 = vadd.f32 %v1431, %v1455
        %v1458 = vsub.f32 0.0, %v1457
        %v1459 = vmul.f32 %v1458, 1.442695
        %v1460 = vpow.pop %v1459
        %v1461 = vadd.f32 %v1460, 1.0
        %v1462 = vrcp.pop %v1461
        %v1463 = vmul.f32 %v1461, %v1462
        %v1464 = vsub.f32 1.0, %v1463
        %v1465 = vmul.f32 %v1462, %v1464
        %v1466 = vadd.f32 %v1462, %v1465
        %vm1467 = vweird.f32 %v1461
        %vm1468 = vweird.f32 %v1462
        %vm1469 = vmor %vm1467, %vm1468
        %v1470 = vsel %vm1469, %v1462, %v1466
        %v1471 = vand.u32 2147483647, %v1461
        %vm1472 = vcmp.eq.f32.partialorder %v1471, 8.507059e+37
        %v1473 = vand.u32 %v1461, 2147483648
        %v1474 = vor.u32 1.1754944e-38, %v1473
        %v1475 = vsel %vm1472, %v1474, %v1470
        %v1476 = vmul.f32 1.0, %v1475
        %v1477 = vtanh.pop %v1457
        %v1478 = vmul.f32 %v1476, %v1424
        %1480 = vrot.lane.b32.xlu0 %v1477, 64
        %v1481 = vpop.permute.xlu0 %1480
        %v1483 = vmul.f32 %v1476, %v1481
        %1485 = vrot.lane.b32.xlu0 %v1483, 32
        %v1486 = vpop.permute.xlu0 %1485
        %v1488 = vadd.f32 %v1478, %v1486
        %v1489 = vtanh.pop %v1488
        %1491 = vrot.lane.b32.xlu0 %v1489, 64
        %v1492 = vpop.permute.xlu0 %1491
        %v1494 = vmul.f32 %v1476, %v1492
        %v1495 = vld [vmem:[#allocation2 + $0x4] sm:$0x1]
        %1497 = vrot.lane.b32.xlu0 %v1494, 32
        %v1498 = vpop.permute.xlu0 %1497
        %v1499 = vsel %vm638, %v1498, 0
        %1501 = vmatpush.msra.mxu0 0.0
        %1502 = vmatpush.msra.mxu0 0.0
        %1503 = vmatpush.msra.mxu0 0.0
        %1504 = vmatpush.msra.mxu0 0.0
        %1505 = vmatpush.msra.mxu0 0.0
        %1506 = vmatpush.msra.mxu0 0.0
        %1507 = vmatpush.msra.mxu0 0.0
        %1508 = vmatpush.msra.mxu0 0.0
        %1509 = vmatpush.msra.mxu0 0.0
        %1510 = vmatpush.msra.mxu0 0.0
        %1511 = vmatpush.msra.mxu0 0.0
        %1512 = vmatpush.msra.mxu0 0.0
        %1513 = vmatpush.msra.mxu0 %v1237
        %1514 = vmatpush.msra.mxu0 %v1236
        %1515 = vmatpush.msra.mxu0 %v1235
        %1516 = vmatpush.msra.mxu0 %v1234
        %1517 = vmatmul.f32.gmra.mxu0 %v1499
        %v1518 = vpop.f32.mrf.mxu0
        %v1519 = vadd.f32 0.0, %v1518
        %1520 = vdwg.mxu0
        %v1521 = vadd.f32 %v1495, %v1519
        %v1522 = vsub.f32 0.0, %v1521
        %v1523 = vmul.f32 %v1522, 1.442695
        %v1524 = vpow.pop %v1523
        %v1525 = vadd.f32 %v1524, 1.0
        %v1526 = vrcp.pop %v1525
        %v1527 = vmul.f32 %v1525, %v1526
        %v1528 = vsub.f32 1.0, %v1527
        %v1529 = vmul.f32 %v1526, %v1528
        %v1530 = vadd.f32 %v1526, %v1529
        %vm1531 = vweird.f32 %v1525
        %vm1532 = vweird.f32 %v1526
        %vm1533 = vmor %vm1531, %vm1532
        %v1534 = vsel %vm1533, %v1526, %v1530
        %v1535 = vand.u32 2147483647, %v1525
        %vm1536 = vcmp.eq.f32.partialorder %v1535, 8.507059e+37
        %v1537 = vand.u32 %v1525, 2147483648
        %v1538 = vor.u32 1.1754944e-38, %v1537
        %v1539 = vsel %vm1536, %v1538, %v1534
        %v1540 = vmul.f32 1.0, %v1539
        %v1541 = vtanh.pop %v1521
        %v1542 = vmul.f32 %v1540, %v1488
        %1544 = vrot.lane.b32.xlu0 %v1541, 64
        %v1545 = vpop.permute.xlu0 %1544
        %v1547 = vmul.f32 %v1540, %v1545
        %1549 = vrot.lane.b32.xlu0 %v1547, 32
        %v1550 = vpop.permute.xlu0 %1549
        %v1552 = vadd.f32 %v1542, %v1550
        %v1553 = vtanh.pop %v1552
        %1555 = vrot.lane.b32.xlu0 %v1553, 64
        %v1556 = vpop.permute.xlu0 %1555
        %v1558 = vmul.f32 %v1540, %v1556
        %v1559 = vld [vmem:[#allocation2 + $0x5] sm:$0x1]
        %1561 = vrot.lane.b32.xlu0 %v1558, 32
        %v1562 = vpop.permute.xlu0 %1561
        %v1563 = vsel %vm638, %v1562, 0
        %1565 = vmatpush.msra.mxu0 0.0
        %1566 = vmatpush.msra.mxu0 0.0
        %1567 = vmatpush.msra.mxu0 0.0
        %1568 = vmatpush.msra.mxu0 0.0
        %1569 = vmatpush.msra.mxu0 0.0
        %1570 = vmatpush.msra.mxu0 0.0
        %1571 = vmatpush.msra.mxu0 0.0
        %1572 = vmatpush.msra.mxu0 0.0
        %1573 = vmatpush.msra.mxu0 0.0
        %1574 = vmatpush.msra.mxu0 0.0
        %1575 = vmatpush.msra.mxu0 0.0
        %1576 = vmatpush.msra.mxu0 0.0
        %1577 = vmatpush.msra.mxu0 %v1237
        %1578 = vmatpush.msra.mxu0 %v1236
        %1579 = vmatpush.msra.mxu0 %v1235
        %1580 = vmatpush.msra.mxu0 %v1234
        %1581 = vmatmul.f32.gmra.mxu0 %v1563
        %v1582 = vpop.f32.mrf.mxu0
        %v1583 = vadd.f32 0.0, %v1582
        %1584 = vdwg.mxu0
        %v1585 = vadd.f32 %v1559, %v1583
        %v1586 = vsub.f32 0.0, %v1585
        %v1587 = vmul.f32 %v1586, 1.442695
        %v1588 = vpow.pop %v1587
        %v1589 = vadd.f32 %v1588, 1.0
        %v1590 = vrcp.pop %v1589
        %v1591 = vmul.f32 %v1589, %v1590
        %v1592 = vsub.f32 1.0, %v1591
        %v1593 = vmul.f32 %v1590, %v1592
        %v1594 = vadd.f32 %v1590, %v1593
        %vm1595 = vweird.f32 %v1589
        %vm1596 = vweird.f32 %v1590
        %vm1597 = vmor %vm1595, %vm1596
        %v1598 = vsel %vm1597, %v1590, %v1594
        %v1599 = vand.u32 2147483647, %v1589
        %vm1600 = vcmp.eq.f32.partialorder %v1599, 8.507059e+37
        %v1601 = vand.u32 %v1589, 2147483648
        %v1602 = vor.u32 1.1754944e-38, %v1601
        %v1603 = vsel %vm1600, %v1602, %v1598
        %v1604 = vmul.f32 1.0, %v1603
        %v1605 = vtanh.pop %v1585
        %v1606 = vmul.f32 %v1604, %v1552
        %1608 = vrot.lane.b32.xlu0 %v1605, 64
        %v1609 = vpop.permute.xlu0 %1608
        %v1611 = vmul.f32 %v1604, %v1609
        %1613 = vrot.lane.b32.xlu0 %v1611, 32
        %v1614 = vpop.permute.xlu0 %1613
        %v1616 = vadd.f32 %v1606, %v1614
        %v1617 = vtanh.pop %v1616
        %1619 = vrot.lane.b32.xlu0 %v1617, 64
        %v1620 = vpop.permute.xlu0 %1619
        %v1622 = vmul.f32 %v1604, %v1620
        %v1623 = vld [vmem:[#allocation2 + $0x6] sm:$0x1]
        %1625 = vrot.lane.b32.xlu0 %v1622, 32
        %v1626 = vpop.permute.xlu0 %1625
        %v1627 = vsel %vm638, %v1626, 0
        %1629 = vmatpush.msra.mxu0 0.0
        %1630 = vmatpush.msra.mxu0 0.0
        %1631 = vmatpush.msra.mxu0 0.0
        %1632 = vmatpush.msra.mxu0 0.0
        %1633 = vmatpush.msra.mxu0 0.0
        %1634 = vmatpush.msra.mxu0 0.0
        %1635 = vmatpush.msra.mxu0 0.0
        %1636 = vmatpush.msra.mxu0 0.0
        %1637 = vmatpush.msra.mxu0 0.0
        %1638 = vmatpush.msra.mxu0 0.0
        %1639 = vmatpush.msra.mxu0 0.0
        %1640 = vmatpush.msra.mxu0 0.0
        %1641 = vmatpush.msra.mxu0 %v1237
        %1642 = vmatpush.msra.mxu0 %v1236
        %1643 = vmatpush.msra.mxu0 %v1235
        %1644 = vmatpush.msra.mxu0 %v1234
        %1645 = vmatmul.f32.gmra.mxu0 %v1627
        %v1646 = vpop.f32.mrf.mxu0
        %v1647 = vadd.f32 0.0, %v1646
        %1648 = vdwg.mxu0
        %v1649 = vadd.f32 %v1623, %v1647
        %v1650 = vsub.f32 0.0, %v1649
        %v1651 = vmul.f32 %v1650, 1.442695
        %v1652 = vpow.pop %v1651
        %v1653 = vadd.f32 %v1652, 1.0
        %v1654 = vrcp.pop %v1653
        %v1655 = vmul.f32 %v1653, %v1654
        %v1656 = vsub.f32 1.0, %v1655
        %v1657 = vmul.f32 %v1654, %v1656
        %v1658 = vadd.f32 %v1654, %v1657
        %vm1659 = vweird.f32 %v1653
        %vm1660 = vweird.f32 %v1654
        %vm1661 = vmor %vm1659, %vm1660
        %v1662 = vsel %vm1661, %v1654, %v1658
        %v1663 = vand.u32 2147483647, %v1653
        %vm1664 = vcmp.eq.f32.partialorder %v1663, 8.507059e+37
        %v1665 = vand.u32 %v1653, 2147483648
        %v1666 = vor.u32 1.1754944e-38, %v1665
        %v1667 = vsel %vm1664, %v1666, %v1662
        %v1668 = vmul.f32 1.0, %v1667
        %v1669 = vtanh.pop %v1649
        %v1670 = vmul.f32 %v1668, %v1616
        %1672 = vrot.lane.b32.xlu0 %v1669, 64
        %v1673 = vpop.permute.xlu0 %1672
        %v1675 = vmul.f32 %v1668, %v1673
        %1677 = vrot.lane.b32.xlu0 %v1675, 32
        %v1678 = vpop.permute.xlu0 %1677
        %v1680 = vadd.f32 %v1670, %v1678
        %v1681 = vtanh.pop %v1680
        %1683 = vrot.lane.b32.xlu0 %v1681, 64
        %v1684 = vpop.permute.xlu0 %1683
        %v1686 = vmul.f32 %v1668, %v1684
        %v1687 = vld [vmem:[#allocation2 + $0x7] sm:$0x1]
        %1689 = vrot.lane.b32.xlu0 %v1686, 32
        %v1690 = vpop.permute.xlu0 %1689
        %v1691 = vsel %vm638, %v1690, 0
        %1693 = vmatpush.msra.mxu0 0.0
        %1694 = vmatpush.msra.mxu0 0.0
        %1695 = vmatpush.msra.mxu0 0.0
        %1696 = vmatpush.msra.mxu0 0.0
        %1697 = vmatpush.msra.mxu0 0.0
        %1698 = vmatpush.msra.mxu0 0.0
        %1699 = vmatpush.msra.mxu0 0.0
        %1700 = vmatpush.msra.mxu0 0.0
        %1701 = vmatpush.msra.mxu0 0.0
        %1702 = vmatpush.msra.mxu0 0.0
        %1703 = vmatpush.msra.mxu0 0.0
        %1704 = vmatpush.msra.mxu0 0.0
        %1705 = vmatpush.msra.mxu0 %v1237
        %1706 = vmatpush.msra.mxu0 %v1236
        %1707 = vmatpush.msra.mxu0 %v1235
        %1708 = vmatpush.msra.mxu0 %v1234
        %1709 = vmatmul.f32.gmra.mxu0 %v1691
        %v1710 = vpop.f32.mrf.mxu0
        %v1711 = vadd.f32 0.0, %v1710
        %1712 = vdwg.mxu0
        %v1713 = vadd.f32 %v1687, %v1711
        %v1714 = vsub.f32 0.0, %v1713
        %v1715 = vmul.f32 %v1714, 1.442695
        %v1716 = vpow.pop %v1715
        %v1717 = vadd.f32 %v1716, 1.0
        %v1718 = vrcp.pop %v1717
        %v1719 = vmul.f32 %v1717, %v1718
        %v1720 = vsub.f32 1.0, %v1719
        %v1721 = vmul.f32 %v1718, %v1720
        %v1722 = vadd.f32 %v1718, %v1721
        %vm1723 = vweird.f32 %v1717
        %vm1724 = vweird.f32 %v1718
        %vm1725 = vmor %vm1723, %vm1724
        %v1726 = vsel %vm1725, %v1718, %v1722
        %v1727 = vand.u32 2147483647, %v1717
        %vm1728 = vcmp.eq.f32.partialorder %v1727, 8.507059e+37
        %v1729 = vand.u32 %v1717, 2147483648
        %v1730 = vor.u32 1.1754944e-38, %v1729
        %v1731 = vsel %vm1728, %v1730, %v1726
        %v1732 = vmul.f32 1.0, %v1731
        %v1733 = vtanh.pop %v1713
        %v1734 = vmul.f32 %v1732, %v1680
        %1736 = vrot.lane.b32.xlu0 %v1733, 64
        %v1737 = vpop.permute.xlu0 %1736
        %v1739 = vmul.f32 %v1732, %v1737
        %1741 = vrot.lane.b32.xlu0 %v1739, 32
        %v1742 = vpop.permute.xlu0 %1741
        %v1744 = vadd.f32 %v1734, %v1742
        %v1745 = vtanh.pop %v1744
        %1747 = vrot.lane.b32.xlu0 %v1745, 64
        %v1748 = vpop.permute.xlu0 %1747
        %v1750 = vmul.f32 %v1732, %v1748
        %v1752 = vrot.slane %v1750, 7
        %vm1754 = vcmask 1040384
        %v1755 = vsel %vm1754, %v1194, %v1752
        %1757 = vrot.lane.b32.xlu0 %v1755, 32
        %v1758 = vpop.permute.xlu0 %1757
        %vm1760 = vcmask 254976
        %1761 = vst.msk [vmem:[%s580] sm:$0x3] %vm1760, %v1758
        %v1763 = vrot.slane %v1744, 7
        %v1765 = vsel %vm1754, %v1188, %v1763
        %1767 = vrot.lane.b32.xlu0 %v1765, 96
        %v1768 = vpop.permute.xlu0 %1767
        %1770 = vst.msk [vmem:[%s587] sm:$0x3] %vm1760, %v1768
        %v1771 = vld [vmem:[%s9] sm:$0xff]
        %v1772 = vld [vmem:[%s9 + $0x8] sm:$0xff]
        %v1773 = vld [vmem:[%s9 + $0x10] sm:$0xff]
        %v1774 = vld [vmem:[%s9 + $0x18] sm:$0xff]
        %v1775 = vld [vmem:[%s10] sm:$0x1]
        %1776 = vrot.lane.b32.xlu0 %v1750, 32
        %v1777 = vpop.permute.xlu0 %1776
        %v1778 = vsel %vm638, %v1777, 0
        %1780 = vmatpush.msra.mxu0 0.0
        %1781 = vmatpush.msra.mxu0 0.0
        %1782 = vmatpush.msra.mxu0 0.0
        %1783 = vmatpush.msra.mxu0 0.0
        %1784 = vmatpush.msra.mxu0 0.0
        %1785 = vmatpush.msra.mxu0 0.0
        %1786 = vmatpush.msra.mxu0 0.0
        %1787 = vmatpush.msra.mxu0 0.0
        %1788 = vmatpush.msra.mxu0 0.0
        %1789 = vmatpush.msra.mxu0 0.0
        %1790 = vmatpush.msra.mxu0 0.0
        %1791 = vmatpush.msra.mxu0 0.0
        %1792 = vmatpush.msra.mxu0 %v1774
        %1793 = vmatpush.msra.mxu0 %v1773
        %1794 = vmatpush.msra.mxu0 %v1772
        %1795 = vmatpush.msra.mxu0 %v1771
        %1796 = vmatmul.f32.gmra.mxu0 %v1778
        %v1797 = vpop.f32.mrf.mxu0
        %v1798 = vadd.f32 %v1775, %v1797
        %1799 = vdwg.mxu0
        %v1800 = vld [vmem:[%s11] sm:$0xff]
        %v1801 = vld [vmem:[%s11 + $0x8] sm:$0xff]
        %v1802 = vld [vmem:[%s12] sm:$0x1]
        %vm1803 = vcmask 130048
        %v1805 = vsel %vm1803, %v1798, 0
        %1807 = vmatpush.msra.mxu0 0.0
        %1808 = vmatpush.msra.mxu0 0.0
        %1809 = vmatpush.msra.mxu0 0.0
        %1810 = vmatpush.msra.mxu0 0.0
        %1811 = vmatpush.msra.mxu0 0.0
        %1812 = vmatpush.msra.mxu0 0.0
        %1813 = vmatpush.msra.mxu0 0.0
        %1814 = vmatpush.msra.mxu0 0.0
        %1815 = vmatpush.msra.mxu0 0.0
        %1816 = vmatpush.msra.mxu0 0.0
        %1817 = vmatpush.msra.mxu0 0.0
        %1818 = vmatpush.msra.mxu0 0.0
        %1819 = vmatpush.msra.mxu0 0.0
        %1820 = vmatpush.msra.mxu0 0.0
        %1821 = vmatpush.msra.mxu0 %v1801
        %1822 = vmatpush.msra.mxu0 %v1800
        %1823 = vmatmul.f32.gmra.mxu0 %v1805
        %v1824 = vpop.f32.mrf.mxu0
        %v1825 = vadd.f32 %v1802, %v1824
        %1826 = vdwg.mxu0
        %1827 = vst [vmem:[%s573] sm:$0x1] %v1825
        %s1828 = sand.u32 %s333, 1
        %s1829 = scalar_lea.sflag [#allocation6], %s1828
        %s1830 = sand.u32 %s333, 1
        %s1831 = scalar_lea.vmem [#allocation10], %s1830
        %s1832 = sand.u32 %s37, 1
        %s1833 = scalar_lea.sflag [#allocation12], %s1832
        %s1834 = sand.u32 %s359, 1
        %s1835 = smul.addr %s1834, 2
        %s1836 = scalar_lea.vmem [#allocation11], %s1835
        %s1837 = sand.u32 %s37, 1
        %s1838 = scalar_lea.sflag [#allocation12], %s1837
        %s1839 = sand.u32 %s385, 1
        %s1840 = smul.addr %s1839, 2
        %s1841 = scalar_lea.vmem [#allocation13], %s1840
        // Predicated region
        $region85: #{tpu_custom_call.1} parent=71 // pred_check
          %p1842 = pneg %p343
        $region86: #{tpu_custom_call.1} parent=71 // pred_check_branch
          %1844 = sbr.rel (%p1842) target = $region88
        $region87: #{tpu_custom_call.1} parent=71 // pred_region
          %1846 = vsyncadd %s1829, 0
          %s1847 = scalar_lea.hbm %s13, %s37
          %s1849 = sshll.u32 %s1831, 4
          %s1850 = int_to_ptr.vmem [resolvable:$true] %s1849
          %s1851 = sshll.u32 %s1847, 4
          %s1852 = int_to_ptr.hbm [resolvable:$true] %s1851
          %1854 = dma.vmem_to_hbm [thread:$0]  %s1850, 16, %s1852, %s1829
        $region88: #{tpu_custom_call.1} parent=71 // pred_fallthru
          _
        // Predicated region
        $region89: #{tpu_custom_call.1} parent=71 // pred_check
          %p1855 = pneg %p369
        $region90: #{tpu_custom_call.1} parent=71 // pred_check_branch
          %1857 = sbr.rel (%p1855) target = $region92
        $region91: #{tpu_custom_call.1} parent=71 // pred_region
          %1859 = vsyncadd %s1833, 0
          %s1860 = smul.addr %s37, 2
          %s1861 = scalar_lea.hbm %s14, %s1860
          %s1863 = sshll.u32 %s1836, 4
          %s1864 = int_to_ptr.vmem [resolvable:$true] %s1863
          %s1865 = sshll.u32 %s1861, 4
          %s1866 = int_to_ptr.hbm [resolvable:$true] %s1865
          %1868 = dma.vmem_to_hbm [thread:$0]  %s1864, 32, %s1866, %s1833
        $region92: #{tpu_custom_call.1} parent=71 // pred_fallthru
          _
        // Predicated region
        $region93: #{tpu_custom_call.1} parent=71 // pred_check
          %p1869 = pneg %p395
        $region94: #{tpu_custom_call.1} parent=71 // pred_check_branch
          %1871 = sbr.rel (%p1869) target = $region96
        $region95: #{tpu_custom_call.1} parent=71 // pred_region
          %1873 = vsyncadd %s1838, 0
          %s1874 = smul.addr %s37, 2
          %s1875 = scalar_lea.hbm %s15, %s1874
          %s1877 = sshll.u32 %s1841, 4
          %s1878 = int_to_ptr.vmem [resolvable:$true] %s1877
          %s1879 = sshll.u32 %s1875, 4
          %s1880 = int_to_ptr.hbm [resolvable:$true] %s1879
          %1882 = dma.vmem_to_hbm [thread:$0]  %s1878, 32, %s1880, %s1838
        $region96: #{tpu_custom_call.1} parent=71 // pred_fallthru
          _
      $region72: #{tpu_custom_call.1} parent=5 // pred_fallthru
        _
      %p1883 = scmp.le.s32.totalorder 2, %s32
      // Predicated region
      $region97: #{tpu_custom_call.1} parent=5 // pred_check
        %p1884 = pneg %p1883
      $region98: #{tpu_custom_call.1} parent=5 // pred_check_branch
        %1886 = sbr.rel (%p1884) target = $region100
      $region99: #{tpu_custom_call.1} parent=5 // pred_region
        %s1887 = ssub.s32 %s32, 2
        // Predicated region
        $region101: #{tpu_custom_call.1} parent=99 // pred_check
          %p1888 = pneg %p349
        $region102: #{tpu_custom_call.1} parent=99 // pred_check_branch
          %1890 = sbr.rel (%p1888) target = $region104
        $region103: #{tpu_custom_call.1} parent=99 // pred_region
          %s1891 = sand.u32 %s334, 1
          %s1892 = scalar_lea.sflag [#allocation6], %s1891
          %s1893 = sand.u32 %s334, 1
          %s1894 = scalar_lea.vmem [#allocation10], %s1893
          %1896 = dma.done %s1892, 16
        $region104: #{tpu_custom_call.1} parent=99 // pred_fallthru
          _
        // Predicated region
        $region105: #{tpu_custom_call.1} parent=99 // pred_check
          %p1897 = pneg %p375
        $region106: #{tpu_custom_call.1} parent=99 // pred_check_branch
          %1899 = sbr.rel (%p1897) target = $region108
        $region107: #{tpu_custom_call.1} parent=99 // pred_region
          %s1900 = sand.u32 %s38, 1
          %s1901 = scalar_lea.sflag [#allocation12], %s1900
          %s1902 = sand.u32 %s360, 1
          %s1903 = smul.addr %s1902, 2
          %s1904 = scalar_lea.vmem [#allocation11], %s1903
          %1906 = dma.done %s1901, 32
        $region108: #{tpu_custom_call.1} parent=99 // pred_fallthru
          _
        // Predicated region
        $region109: #{tpu_custom_call.1} parent=99 // pred_check
          %p1907 = pneg %p401
        $region110: #{tpu_custom_call.1} parent=99 // pred_check_branch
          %1909 = sbr.rel (%p1907) target = $region112
        $region111: #{tpu_custom_call.1} parent=99 // pred_region
          %s1910 = sand.u32 %s38, 1
          %s1911 = scalar_lea.sflag [#allocation12], %s1910
          %s1912 = sand.u32 %s386, 1
          %s1913 = smul.addr %s1912, 2
          %s1914 = scalar_lea.vmem [#allocation13], %s1913
          %1916 = dma.done %s1911, 32
        $region112: #{tpu_custom_call.1} parent=99 // pred_fallthru
          _
      $region100: #{tpu_custom_call.1} parent=5 // pred_fallthru
        _
    $region6: #{tpu_custom_call.1} parent=1 // loop_footer
      %s36 = sadd.s32 1, %s32
    $region7: #{tpu_custom_call.1} parent=1 // loop_footer_branch
      %31 = sbr.rel target = $region3
    $region8: #{tpu_custom_call.1} parent=1 // loop_exit
      _
    %1917 = vsyncpa [#allocation5], 1
    %s1918 = scalar_lea.sflag [#allocation5], 1
    %1919 = vsyncpa %s1918, 1
    %1920 = vsyncpa [#allocation8], 1
    %1921 = vsyncpa [#allocation6], 1
    %s1922 = scalar_lea.sflag [#allocation6], 1
    %1923 = vsyncpa %s1922, 1
    %1924 = vsyncpa [#allocation12], 1
    %s1925 = scalar_lea.sflag [#allocation12], 1
    %1926 = vsyncpa %s1925, 1

</llo_original>
